<compile_context>
chip_gen: v7x
topology: tpu7x:2x2x1
jax: 0.10.0
libtpu: 0.0.40
codegen_flags: <defaults>
</compile_context>

<pallas_src>
import numpy as np

import jax
import jax.numpy as jnp
from jax.experimental import pallas as pl
from jax.experimental.pallas import tpu as pltpu


_ROWS = 32        # image rows per sample (input must be 32x32 for Linear(576))
_CIN0_PAD = 4     # first layer input channels padded 3 -> 4 (row width 32*4=128)

# per conv layer: channel padding / spatial widths for the "row matmul" layout
_LAYER_SPECS = (
    dict(cin_pad=4,  w_out=15, cout_pad=16, in_width=128, out_width=256),
    dict(cin_pad=16, w_out=7,  cout_pad=32, in_width=256, out_width=256),
    dict(cin_pad=32, w_out=3,  cout_pad=64, in_width=256, out_width=256),
)


# ----------------------------- Pallas kernel ------------------------------ #
def _fused_forward_kernel(x_ref, w1_ref, b1_ref, w2_ref, b2_ref,
                          w3_ref, b3_ref, wc_ref, bc_ref, o_ref):
    f32 = jnp.float32
    n_rows = x_ref.shape[1]          # 32 image rows per sample

    def shift_down(shift):
        # S with S[r, c] = 1 iff c == r + shift, so (S @ v)[r] == v[r + shift]
        # (rows past the end become zero).  Built from 2-D iota -> no unaligned
        # or strided VMEM accesses anywhere in the kernel.
        row = jax.lax.broadcasted_iota(jnp.int32, (n_rows, n_rows), 0)
        col = jax.lax.broadcasted_iota(jnp.int32, (n_rows, n_rows), 1)
        return (col == row + shift).astype(f32)

    def conv_bn_relu(feat, w_ref, b_ref, row_step):
        # feat: (32, K) -- one image row per sublane row, channel-minor columns.
        # out[r] = relu( sum_kh feat[r + row_step*kh] @ W_kh + bias )
        acc = jnp.dot(feat, w_ref[0], preferred_element_type=f32)
        for kh in (1, 2):
            t = jnp.dot(feat, w_ref[kh], preferred_element_type=f32)
            acc = acc + jnp.dot(shift_down(row_step * kh), t,
                                preferred_element_type=f32)
        return jnp.maximum(acc + b_ref[...], 0.0)

    # Layer 1/2/3: valid output rows live at pitch 2 / 4 / 8 respectively.
    y = conv_bn_relu(x_ref[0], w1_ref, b1_ref, 1)      # (32, 256)
    y = conv_bn_relu(y, w2_ref, b2_ref, 2)             # (32, 256)
    y = conv_bn_relu(y, w3_ref, b3_ref, 4)             # (32, 256), rows 0/8/16 valid

    # Fused classifier: logits = sum_oh y[8*oh] @ Wc_oh + b.  Computed on full
    # aligned 8-row slabs; only row 0 of the result is meaningful.
    logits8 = jnp.dot(y[0:8, :], wc_ref[0], preferred_element_type=f32)
    logits8 = logits8 + jnp.dot(y[8:16, :], wc_ref[1], preferred_element_type=f32)
    logits8 = logits8 + jnp.dot(y[16:24, :], wc_ref[2], preferred_element_type=f32)
    o_ref[0] = logits8 + bc_ref[...]                   # (8, 128); row 0 = logits


# ---------------------- Host-side parameter packing ------------------------ #
def _fold_bn(p, eps=1e-5):
    s = np.asarray(p["gamma"]) / np.sqrt(np.asarray(p["var"]) + eps)
    t = np.asarray(p["beta"]) + (np.asarray(p["b"]) - np.asarray(p["mean"])) * s
    return s.astype(np.float32), t.astype(np.float32)


def _build_conv_rows_weight(w_pt, scale, cin_pad, w_out, cout_pad,
                            in_width, out_width):
    # Row-matmul weight: W_kh[w*cin_pad + ci, ow*cout_pad + co]
    #   = scale[co] * w_pt[co, ci, kh, w - 2*ow]   for 0 <= w - 2*ow <= 2.
    w_pt = np.asarray(w_pt, np.float32)                 # [co, ci, 3, 3]
    co_n, ci_n, KH, KW = w_pt.shape
    ws = w_pt * scale[:, None, None, None]
    W = np.zeros((KH, in_width, out_width), np.float32)
    for kh in range(KH):
        for kw in range(KW):
            blk = ws[:, :, kh, kw].T                    # [ci, co]
            for ow in range(w_out):
                r0 = (2 * ow + kw) * cin_pad
                c0 = ow * cout_pad
                W[kh, r0:r0 + ci_n, c0:c0 + co_n] = blk
    return W


def _build_conv_rows_bias(t, w_out, cout_pad, out_width):
    b = np.zeros((1, out_width), np.float32)
    for ow in range(w_out):
        b[0, ow * cout_pad:ow * cout_pad + t.shape[0]] = t
    return b


def _build_classifier(w_lin, b_lin, in_width=256, out_width=128):
    # PyTorch x.view(-1, 576) flattens NCHW as j = co*9 + oh*3 + ow.
    w_lin = np.asarray(w_lin, np.float32)               # [10, 576]
    k_n = w_lin.shape[0]
    w4 = w_lin.reshape(k_n, 64, 3, 3)                   # [k, co, oh, ow]
    Wc = np.zeros((3, in_width, out_width), np.float32)
    for oh in range(3):
        blk = np.transpose(w4[:, :, oh, :], (2, 1, 0)).reshape(3 * 64, k_n)
        Wc[oh, :3 * 64, :k_n] = blk                      # rows = ow*64 + co
    bc = np.zeros((1, out_width), np.float32)
    bc[0, :k_n] = np.asarray(b_lin, np.float32)
    return Wc, bc


def prepare_fused_params(params):
    fused = {}
    for i, spec in enumerate(_LAYER_SPECS):
        p = params[f"conv{i}"]
        s, t = _fold_bn(p)
        fused[f"w{i + 1}"] = jnp.asarray(_build_conv_rows_weight(
            p["w"], s, spec["cin_pad"], spec["w_out"], spec["cout_pad"],
            spec["in_width"], spec["out_width"]))
        fused[f"b{i + 1}"] = jnp.asarray(_build_conv_rows_bias(
            t, spec["w_out"], spec["cout_pad"], spec["out_width"]))
    wc, bc = _build_classifier(params["linear"]["w"], params["linear"]["b"])
    fused["wc"] = jnp.asarray(wc)
    fused["bc"] = jnp.asarray(bc)
    return fused


# ------------------------------- Forward ----------------------------------- #
def _to_row_major(x_nchw):
    # [N,3,32,32] -> [N, 32, 32*4]: one image row per sublane row, channel-minor,
    # channels zero-padded 3 -> 4 so the row width is a clean 128 lanes.
    N, C, H, W = x_nchw.shape
    x = jnp.transpose(x_nchw, (0, 2, 3, 1))                        # NHWC
    x = jnp.pad(x, ((0, 0), (0, 0), (0, 0), (0, _CIN0_PAD - C)))
    return x.reshape(N, H, W * _CIN0_PAD)


def simple_model_forward(x_nchw, fused):
    N, C, H, W = x_nchw.shape
    assert (C, H, W) == (3, 32, 32), "SimpleModel requires 3x32x32 inputs"
    xr = _to_row_major(x_nchw)                                     # [N, 32, 128]

    out = pl.pallas_call(
        _fused_forward_kernel,
        out_shape=jax.ShapeDtypeStruct((N, 8, 128), jnp.float32),
        grid=(N,),
        in_specs=[
            pl.BlockSpec((1, 32, 128), lambda n: (n, 0, 0)),   # input rows
            pl.BlockSpec((3, 128, 256), lambda n: (0, 0, 0)),  # w1 (const block)
            pl.BlockSpec((1, 256), lambda n: (0, 0)),          # b1
            pl.BlockSpec((3, 256, 256), lambda n: (0, 0, 0)),  # w2
            pl.BlockSpec((1, 256), lambda n: (0, 0)),          # b2
            pl.BlockSpec((3, 256, 256), lambda n: (0, 0, 0)),  # w3
            pl.BlockSpec((1, 256), lambda n: (0, 0)),          # b3
            pl.BlockSpec((3, 256, 128), lambda n: (0, 0, 0)),  # classifier w
            pl.BlockSpec((1, 128), lambda n: (0, 0)),          # classifier b
        ],
        out_specs=pl.BlockSpec((1, 8, 128), lambda n: (n, 0, 0)),
        compiler_params=pltpu.CompilerParams(
            dimension_semantics=("parallel",),          # megacore on v7x
            vmem_limit_bytes=32 * 1024 * 1024,
        ),
    )(xr, fused["w1"], fused["b1"], fused["w2"], fused["b2"],
      fused["w3"], fused["b3"], fused["wc"], fused["bc"])

    return out[:, 0, :10]                                          # [N, 10]


# --------------------------- Deterministic init ---------------------------- #
def init_params(key):
    params = {}
    specs = [(16, 3), (32, 16), (64, 32)]
    for i, (c_out, c_in) in enumerate(specs):
        key, k1, k2, k3, k4, k5, k6 = jax.random.split(key, 7)
        params[f"conv{i}"] = dict(
            w=0.1 * jax.random.normal(k1, (c_out, c_in, 3, 3), jnp.float32),
            b=0.05 * jax.random.normal(k2, (c_out,), jnp.float32),
            gamma=1.0 + 0.1 * jax.random.normal(k3, (c_out,), jnp.float32),
            beta=0.05 * jax.random.normal(k4, (c_out,), jnp.float32),
            mean=0.05 * jax.random.normal(k5, (c_out,), jnp.float32),
            var=1.0 + 0.1 * jax.random.uniform(k6, (c_out,), jnp.float32),
        )
    key, k1, k2 = jax.random.split(key, 3)
    params["linear"] = dict(
        w=0.05 * jax.random.normal(k1, (10, 576), jnp.float32),
        b=0.05 * jax.random.normal(k2, (10,), jnp.float32),
    )
    return params


# ------------------------------ Reference ---------------------------------- #
def _reference_forward(x_nchw, params):
    x = jnp.transpose(x_nchw, (0, 2, 3, 1))
    for i in range(3):
        p = params[f"conv{i}"]
        y = jax.lax.conv_general_dilated(
            x, jnp.transpose(p["w"], (2, 3, 1, 0)),
            window_strides=(2, 2), padding="VALID",
            dimension_numbers=("NHWC", "HWIO", "NHWC"))
        y = y + p["b"]
        s = p["gamma"] / jnp.sqrt(p["var"] + 1e-5)
        y = (y - p["mean"]) * s + p["beta"]
        x = jnp.maximum(y, 0.0)
    x = jnp.transpose(x, (0, 3, 1, 2)).reshape(x.shape[0], -1)
    lin = params["linear"]
    return x @ lin["w"].T + lin["b"]


if __name__ == "__main__":
    key = jax.random.PRNGKey(0)
    kx, kp = jax.random.split(key)
    # Input must be 32x32 so three stride-2 3x3 convs yield 3x3x64 = 576 features.
    x = jax.random.normal(kx, (2, 3, 32, 32), jnp.float32)
    params = init_params(kp)

    fused = prepare_fused_params(params)          # one-time parameter packing
    forward = jax.jit(simple_model_forward)

    out = jax.block_until_ready(forward(x, fused))
    assert out.shape == (2, 10)

    ref = _reference_forward(x, params)
    assert jnp.allclose(out, ref, atol=1e-3, rtol=1e-3), "mismatch vs reference"

    print("KERNEL_OK")
</pallas_src>

<mosaic_0001>
module attributes {stable_mosaic.version = 11 : i64} {
  func.func @_fused_forward_kernel(%arg0: i32, %arg1: memref<1x32x128xf32, #tpu.memory_space<vmem>>, %arg2: memref<3x128x256xf32, #tpu.memory_space<vmem>>, %arg3: memref<1x256xf32, #tpu.memory_space<vmem>>, %arg4: memref<3x256x256xf32, #tpu.memory_space<vmem>>, %arg5: memref<1x256xf32, #tpu.memory_space<vmem>>, %arg6: memref<3x256x256xf32, #tpu.memory_space<vmem>>, %arg7: memref<1x256xf32, #tpu.memory_space<vmem>>, %arg8: memref<3x256x128xf32, #tpu.memory_space<vmem>>, %arg9: memref<1x128xf32, #tpu.memory_space<vmem>>, %arg10: memref<1x8x128xf32, #tpu.memory_space<vmem>>) attributes {dimension_semantics = [#tpu.dimension_semantics<parallel>], iteration_bounds = array<i64: 2>, scalar_prefetch = 0 : i64, scratch_operands = 0 : i64, tpu.core_type = #tpu.core_type<tc>, window_params = [{transform_indices = @transform_0, window_bounds = array<i64: 1, 32, 128>}, {pipeline_mode = #tpu.pipeline_mode<synchronous>, transform_indices = @transform_1, window_bounds = array<i64: 3, 128, 256>}, {pipeline_mode = #tpu.pipeline_mode<synchronous>, transform_indices = @transform_2, window_bounds = array<i64: 1, 256>}, {pipeline_mode = #tpu.pipeline_mode<synchronous>, transform_indices = @transform_3, window_bounds = array<i64: 3, 256, 256>}, {pipeline_mode = #tpu.pipeline_mode<synchronous>, transform_indices = @transform_4, window_bounds = array<i64: 1, 256>}, {pipeline_mode = #tpu.pipeline_mode<synchronous>, transform_indices = @transform_5, window_bounds = array<i64: 3, 256, 256>}, {pipeline_mode = #tpu.pipeline_mode<synchronous>, transform_indices = @transform_6, window_bounds = array<i64: 1, 256>}, {pipeline_mode = #tpu.pipeline_mode<synchronous>, transform_indices = @transform_7, window_bounds = array<i64: 3, 256, 128>}, {pipeline_mode = #tpu.pipeline_mode<synchronous>, transform_indices = @transform_8, window_bounds = array<i64: 1, 128>}, {transform_indices = @transform_9, window_bounds = array<i64: 1, 8, 128>}]} {
    %c0 = arith.constant 0 : index
    %c0_0 = arith.constant 0 : index
    %c0_1 = arith.constant 0 : index
    %0 = vector.load %arg1[%c0, %c0_0, %c0_1] : memref<1x32x128xf32, #tpu.memory_space<vmem>>, vector<1x32x128xf32>
    %1 = vector.shape_cast %0 : vector<1x32x128xf32> to vector<32x128xf32>
    %c0_2 = arith.constant 0 : index
    %c0_3 = arith.constant 0 : index
    %c0_4 = arith.constant 0 : index
    %2 = vector.load %arg2[%c0_2, %c0_3, %c0_4] : memref<3x128x256xf32, #tpu.memory_space<vmem>>, vector<1x128x256xf32>
    %3 = vector.shape_cast %2 : vector<1x128x256xf32> to vector<128x256xf32>
    %cst = arith.constant dense<0.000000e+00> : vector<32x256xf32>
    %4 = tpu.matmul %1, %3, %cst {dimension_numbers = #tpu.dot_dimension_numbers<[1], [0], [0], [1], [0, 0, 1, 1], [], []>} : vector<32x128xf32>, vector<128x256xf32>, vector<32x256xf32> -> vector<32x256xf32>
    %c1 = arith.constant 1 : index
    %c0_5 = arith.constant 0 : index
    %c0_6 = arith.constant 0 : index
    %5 = vector.load %arg2[%c1, %c0_5, %c0_6] : memref<3x128x256xf32, #tpu.memory_space<vmem>>, vector<1x128x256xf32>
    %6 = vector.shape_cast %5 : vector<1x128x256xf32> to vector<128x256xf32>
    %cst_7 = arith.constant dense<0.000000e+00> : vector<32x256xf32>
    %7 = tpu.matmul %1, %6, %cst_7 {dimension_numbers = #tpu.dot_dimension_numbers<[1], [0], [0], [1], [0, 0, 1, 1], [], []>} : vector<32x128xf32>, vector<128x256xf32>, vector<32x256xf32> -> vector<32x256xf32>
    %8 = tpu.iota {dimensions = array<i32: 0>} : vector<32x32xi32>
    %9 = tpu.iota {dimensions = array<i32: 1>} : vector<32x32xi32>
    %c1_i32 = arith.constant 1 : i32
    %10 = vector.broadcast %c1_i32 : i32 to vector<32x32xi32>
    %11 = arith.addi %8, %10 : vector<32x32xi32>
    %12 = arith.cmpi eq, %9, %11 : vector<32x32xi32>
    %13 = arith.extui %12 : vector<32x32xi1> to vector<32x32xi32>
    %14 = arith.sitofp %13 : vector<32x32xi32> to vector<32x32xf32>
    %cst_8 = arith.constant dense<0.000000e+00> : vector<32x256xf32>
    %15 = tpu.matmul %14, %7, %cst_8 {dimension_numbers = #tpu.dot_dimension_numbers<[1], [0], [0], [1], [0, 0, 1, 1], [], []>} : vector<32x32xf32>, vector<32x256xf32>, vector<32x256xf32> -> vector<32x256xf32>
    %16 = arith.addf %4, %15 : vector<32x256xf32>
    %c2 = arith.constant 2 : index
    %c0_9 = arith.constant 0 : index
    %c0_10 = arith.constant 0 : index
    %17 = vector.load %arg2[%c2, %c0_9, %c0_10] : memref<3x128x256xf32, #tpu.memory_space<vmem>>, vector<1x128x256xf32>
    %18 = vector.shape_cast %17 : vector<1x128x256xf32> to vector<128x256xf32>
    %cst_11 = arith.constant dense<0.000000e+00> : vector<32x256xf32>
    %19 = tpu.matmul %1, %18, %cst_11 {dimension_numbers = #tpu.dot_dimension_numbers<[1], [0], [0], [1], [0, 0, 1, 1], [], []>} : vector<32x128xf32>, vector<128x256xf32>, vector<32x256xf32> -> vector<32x256xf32>
    %20 = tpu.iota {dimensions = array<i32: 0>} : vector<32x32xi32>
    %21 = tpu.iota {dimensions = array<i32: 1>} : vector<32x32xi32>
    %c2_i32 = arith.constant 2 : i32
    %22 = vector.broadcast %c2_i32 : i32 to vector<32x32xi32>
    %23 = arith.addi %20, %22 : vector<32x32xi32>
    %24 = arith.cmpi eq, %21, %23 : vector<32x32xi32>
    %25 = arith.extui %24 : vector<32x32xi1> to vector<32x32xi32>
    %26 = arith.sitofp %25 : vector<32x32xi32> to vector<32x32xf32>
    %cst_12 = arith.constant dense<0.000000e+00> : vector<32x256xf32>
    %27 = tpu.matmul %26, %19, %cst_12 {dimension_numbers = #tpu.dot_dimension_numbers<[1], [0], [0], [1], [0, 0, 1, 1], [], []>} : vector<32x32xf32>, vector<32x256xf32>, vector<32x256xf32> -> vector<32x256xf32>
    %28 = arith.addf %16, %27 : vector<32x256xf32>
    %c0_13 = arith.constant 0 : index
    %c0_14 = arith.constant 0 : index
    %29 = vector.load %arg3[%c0_13, %c0_14] : memref<1x256xf32, #tpu.memory_space<vmem>>, vector<1x256xf32>
    %30 = vector.broadcast %29 : vector<1x256xf32> to vector<32x256xf32>
    %31 = arith.addf %28, %30 : vector<32x256xf32>
    %cst_15 = arith.constant 0.000000e+00 : f32
    %32 = vector.broadcast %cst_15 : f32 to vector<32x256xf32>
    %33 = arith.maximumf %31, %32 : vector<32x256xf32>
    %c0_16 = arith.constant 0 : index
    %c0_17 = arith.constant 0 : index
    %c0_18 = arith.constant 0 : index
    %34 = vector.load %arg4[%c0_16, %c0_17, %c0_18] : memref<3x256x256xf32, #tpu.memory_space<vmem>>, vector<1x256x256xf32>
    %35 = vector.shape_cast %34 : vector<1x256x256xf32> to vector<256x256xf32>
    %cst_19 = arith.constant dense<0.000000e+00> : vector<32x256xf32>
    %36 = tpu.matmul %33, %35, %cst_19 {dimension_numbers = #tpu.dot_dimension_numbers<[1], [0], [0], [1], [0, 0, 1, 1], [], []>} : vector<32x256xf32>, vector<256x256xf32>, vector<32x256xf32> -> vector<32x256xf32>
    %c1_20 = arith.constant 1 : index
    %c0_21 = arith.constant 0 : index
    %c0_22 = arith.constant 0 : index
    %37 = vector.load %arg4[%c1_20, %c0_21, %c0_22] : memref<3x256x256xf32, #tpu.memory_space<vmem>>, vector<1x256x256xf32>
    %38 = vector.shape_cast %37 : vector<1x256x256xf32> to vector<256x256xf32>
    %cst_23 = arith.constant dense<0.000000e+00> : vector<32x256xf32>
    %39 = tpu.matmul %33, %38, %cst_23 {dimension_numbers = #tpu.dot_dimension_numbers<[1], [0], [0], [1], [0, 0, 1, 1], [], []>} : vector<32x256xf32>, vector<256x256xf32>, vector<32x256xf32> -> vector<32x256xf32>
    %40 = tpu.iota {dimensions = array<i32: 0>} : vector<32x32xi32>
    %41 = tpu.iota {dimensions = array<i32: 1>} : vector<32x32xi32>
    %c2_i32_24 = arith.constant 2 : i32
    %42 = vector.broadcast %c2_i32_24 : i32 to vector<32x32xi32>
    %43 = arith.addi %40, %42 : vector<32x32xi32>
    %44 = arith.cmpi eq, %41, %43 : vector<32x32xi32>
    %45 = arith.extui %44 : vector<32x32xi1> to vector<32x32xi32>
    %46 = arith.sitofp %45 : vector<32x32xi32> to vector<32x32xf32>
    %cst_25 = arith.constant dense<0.000000e+00> : vector<32x256xf32>
    %47 = tpu.matmul %46, %39, %cst_25 {dimension_numbers = #tpu.dot_dimension_numbers<[1], [0], [0], [1], [0, 0, 1, 1], [], []>} : vector<32x32xf32>, vector<32x256xf32>, vector<32x256xf32> -> vector<32x256xf32>
    %48 = arith.addf %36, %47 : vector<32x256xf32>
    %c2_26 = arith.constant 2 : index
    %c0_27 = arith.constant 0 : index
    %c0_28 = arith.constant 0 : index
    %49 = vector.load %arg4[%c2_26, %c0_27, %c0_28] : memref<3x256x256xf32, #tpu.memory_space<vmem>>, vector<1x256x256xf32>
    %50 = vector.shape_cast %49 : vector<1x256x256xf32> to vector<256x256xf32>
    %cst_29 = arith.constant dense<0.000000e+00> : vector<32x256xf32>
    %51 = tpu.matmul %33, %50, %cst_29 {dimension_numbers = #tpu.dot_dimension_numbers<[1], [0], [0], [1], [0, 0, 1, 1], [], []>} : vector<32x256xf32>, vector<256x256xf32>, vector<32x256xf32> -> vector<32x256xf32>
    %52 = tpu.iota {dimensions = array<i32: 0>} : vector<32x32xi32>
    %53 = tpu.iota {dimensions = array<i32: 1>} : vector<32x32xi32>
    %c4_i32 = arith.constant 4 : i32
    %54 = vector.broadcast %c4_i32 : i32 to vector<32x32xi32>
    %55 = arith.addi %52, %54 : vector<32x32xi32>
    %56 = arith.cmpi eq, %53, %55 : vector<32x32xi32>
    %57 = arith.extui %56 : vector<32x32xi1> to vector<32x32xi32>
    %58 = arith.sitofp %57 : vector<32x32xi32> to vector<32x32xf32>
    %cst_30 = arith.constant dense<0.000000e+00> : vector<32x256xf32>
    %59 = tpu.matmul %58, %51, %cst_30 {dimension_numbers = #tpu.dot_dimension_numbers<[1], [0], [0], [1], [0, 0, 1, 1], [], []>} : vector<32x32xf32>, vector<32x256xf32>, vector<32x256xf32> -> vector<32x256xf32>
    %60 = arith.addf %48, %59 : vector<32x256xf32>
    %c0_31 = arith.constant 0 : index
    %c0_32 = arith.constant 0 : index
    %61 = vector.load %arg5[%c0_31, %c0_32] : memref<1x256xf32, #tpu.memory_space<vmem>>, vector<1x256xf32>
    %62 = vector.broadcast %61 : vector<1x256xf32> to vector<32x256xf32>
    %63 = arith.addf %60, %62 : vector<32x256xf32>
    %cst_33 = arith.constant 0.000000e+00 : f32
    %64 = vector.broadcast %cst_33 : f32 to vector<32x256xf32>
    %65 = arith.maximumf %63, %64 : vector<32x256xf32>
    %c0_34 = arith.constant 0 : index
    %c0_35 = arith.constant 0 : index
    %c0_36 = arith.constant 0 : index
    %66 = vector.load %arg6[%c0_34, %c0_35, %c0_36] : memref<3x256x256xf32, #tpu.memory_space<vmem>>, vector<1x256x256xf32>
    %67 = vector.shape_cast %66 : vector<1x256x256xf32> to vector<256x256xf32>
    %cst_37 = arith.constant dense<0.000000e+00> : vector<32x256xf32>
    %68 = tpu.matmul %65, %67, %cst_37 {dimension_numbers = #tpu.dot_dimension_numbers<[1], [0], [0], [1], [0, 0, 1, 1], [], []>} : vector<32x256xf32>, vector<256x256xf32>, vector<32x256xf32> -> vector<32x256xf32>
    %c1_38 = arith.constant 1 : index
    %c0_39 = arith.constant 0 : index
    %c0_40 = arith.constant 0 : index
    %69 = vector.load %arg6[%c1_38, %c0_39, %c0_40] : memref<3x256x256xf32, #tpu.memory_space<vmem>>, vector<1x256x256xf32>
    %70 = vector.shape_cast %69 : vector<1x256x256xf32> to vector<256x256xf32>
    %cst_41 = arith.constant dense<0.000000e+00> : vector<32x256xf32>
    %71 = tpu.matmul %65, %70, %cst_41 {dimension_numbers = #tpu.dot_dimension_numbers<[1], [0], [0], [1], [0, 0, 1, 1], [], []>} : vector<32x256xf32>, vector<256x256xf32>, vector<32x256xf32> -> vector<32x256xf32>
    %72 = tpu.iota {dimensions = array<i32: 0>} : vector<32x32xi32>
    %73 = tpu.iota {dimensions = array<i32: 1>} : vector<32x32xi32>
    %c4_i32_42 = arith.constant 4 : i32
    %74 = vector.broadcast %c4_i32_42 : i32 to vector<32x32xi32>
    %75 = arith.addi %72, %74 : vector<32x32xi32>
    %76 = arith.cmpi eq, %73, %75 : vector<32x32xi32>
    %77 = arith.extui %76 : vector<32x32xi1> to vector<32x32xi32>
    %78 = arith.sitofp %77 : vector<32x32xi32> to vector<32x32xf32>
    %cst_43 = arith.constant dense<0.000000e+00> : vector<32x256xf32>
    %79 = tpu.matmul %78, %71, %cst_43 {dimension_numbers = #tpu.dot_dimension_numbers<[1], [0], [0], [1], [0, 0, 1, 1], [], []>} : vector<32x32xf32>, vector<32x256xf32>, vector<32x256xf32> -> vector<32x256xf32>
    %80 = arith.addf %68, %79 : vector<32x256xf32>
    %c2_44 = arith.constant 2 : index
    %c0_45 = arith.constant 0 : index
    %c0_46 = arith.constant 0 : index
    %81 = vector.load %arg6[%c2_44, %c0_45, %c0_46] : memref<3x256x256xf32, #tpu.memory_space<vmem>>, vector<1x256x256xf32>
    %82 = vector.shape_cast %81 : vector<1x256x256xf32> to vector<256x256xf32>
    %cst_47 = arith.constant dense<0.000000e+00> : vector<32x256xf32>
    %83 = tpu.matmul %65, %82, %cst_47 {dimension_numbers = #tpu.dot_dimension_numbers<[1], [0], [0], [1], [0, 0, 1, 1], [], []>} : vector<32x256xf32>, vector<256x256xf32>, vector<32x256xf32> -> vector<32x256xf32>
    %84 = tpu.iota {dimensions = array<i32: 0>} : vector<32x32xi32>
    %85 = tpu.iota {dimensions = array<i32: 1>} : vector<32x32xi32>
    %c8_i32 = arith.constant 8 : i32
    %86 = vector.broadcast %c8_i32 : i32 to vector<32x32xi32>
    %87 = arith.addi %84, %86 : vector<32x32xi32>
    %88 = arith.cmpi eq, %85, %87 : vector<32x32xi32>
    %89 = arith.extui %88 : vector<32x32xi1> to vector<32x32xi32>
    %90 = arith.sitofp %89 : vector<32x32xi32> to vector<32x32xf32>
    %cst_48 = arith.constant dense<0.000000e+00> : vector<32x256xf32>
    %91 = tpu.matmul %90, %83, %cst_48 {dimension_numbers = #tpu.dot_dimension_numbers<[1], [0], [0], [1], [0, 0, 1, 1], [], []>} : vector<32x32xf32>, vector<32x256xf32>, vector<32x256xf32> -> vector<32x256xf32>
    %92 = arith.addf %80, %91 : vector<32x256xf32>
    %c0_49 = arith.constant 0 : index
    %c0_50 = arith.constant 0 : index
    %93 = vector.load %arg7[%c0_49, %c0_50] : memref<1x256xf32, #tpu.memory_space<vmem>>, vector<1x256xf32>
    %94 = vector.broadcast %93 : vector<1x256xf32> to vector<32x256xf32>
    %95 = arith.addf %92, %94 : vector<32x256xf32>
    %cst_51 = arith.constant 0.000000e+00 : f32
    %96 = vector.broadcast %cst_51 : f32 to vector<32x256xf32>
    %97 = arith.maximumf %95, %96 : vector<32x256xf32>
    %98 = vector.extract_strided_slice %97 {offsets = [0, 0], sizes = [8, 256], strides = [1, 1]} : vector<32x256xf32> to vector<8x256xf32>
    %c0_52 = arith.constant 0 : index
    %c0_53 = arith.constant 0 : index
    %c0_54 = arith.constant 0 : index
    %99 = vector.load %arg8[%c0_52, %c0_53, %c0_54] : memref<3x256x128xf32, #tpu.memory_space<vmem>>, vector<1x256x128xf32>
    %100 = vector.shape_cast %99 : vector<1x256x128xf32> to vector<256x128xf32>
    %cst_55 = arith.constant dense<0.000000e+00> : vector<8x128xf32>
    %101 = tpu.matmul %98, %100, %cst_55 {dimension_numbers = #tpu.dot_dimension_numbers<[1], [0], [0], [1], [0, 0, 1, 1], [], []>} : vector<8x256xf32>, vector<256x128xf32>, vector<8x128xf32> -> vector<8x128xf32>
    %102 = vector.extract_strided_slice %97 {offsets = [8, 0], sizes = [8, 256], strides = [1, 1]} : vector<32x256xf32> to vector<8x256xf32>
    %c1_56 = arith.constant 1 : index
    %c0_57 = arith.constant 0 : index
    %c0_58 = arith.constant 0 : index
    %103 = vector.load %arg8[%c1_56, %c0_57, %c0_58] : memref<3x256x128xf32, #tpu.memory_space<vmem>>, vector<1x256x128xf32>
    %104 = vector.shape_cast %103 : vector<1x256x128xf32> to vector<256x128xf32>
    %cst_59 = arith.constant dense<0.000000e+00> : vector<8x128xf32>
    %105 = tpu.matmul %102, %104, %cst_59 {dimension_numbers = #tpu.dot_dimension_numbers<[1], [0], [0], [1], [0, 0, 1, 1], [], []>} : vector<8x256xf32>, vector<256x128xf32>, vector<8x128xf32> -> vector<8x128xf32>
    %106 = arith.addf %101, %105 : vector<8x128xf32>
    %107 = vector.extract_strided_slice %97 {offsets = [16, 0], sizes = [8, 256], strides = [1, 1]} : vector<32x256xf32> to vector<8x256xf32>
    %c2_60 = arith.constant 2 : index
    %c0_61 = arith.constant 0 : index
    %c0_62 = arith.constant 0 : index
    %108 = vector.load %arg8[%c2_60, %c0_61, %c0_62] : memref<3x256x128xf32, #tpu.memory_space<vmem>>, vector<1x256x128xf32>
    %109 = vector.shape_cast %108 : vector<1x256x128xf32> to vector<256x128xf32>
    %cst_63 = arith.constant dense<0.000000e+00> : vector<8x128xf32>
    %110 = tpu.matmul %107, %109, %cst_63 {dimension_numbers = #tpu.dot_dimension_numbers<[1], [0], [0], [1], [0, 0, 1, 1], [], []>} : vector<8x256xf32>, vector<256x128xf32>, vector<8x128xf32> -> vector<8x128xf32>
    %111 = arith.addf %106, %110 : vector<8x128xf32>
    %c0_64 = arith.constant 0 : index
    %c0_65 = arith.constant 0 : index
    %112 = vector.load %arg9[%c0_64, %c0_65] : memref<1x128xf32, #tpu.memory_space<vmem>>, vector<1x128xf32>
    %113 = vector.broadcast %112 : vector<1x128xf32> to vector<8x128xf32>
    %114 = arith.addf %111, %113 : vector<8x128xf32>
    %c0_66 = arith.constant 0 : index
    %c0_67 = arith.constant 0 : index
    %c0_68 = arith.constant 0 : index
    %115 = vector.load %arg10[%c0_66, %c0_67, %c0_68] : memref<1x8x128xf32, #tpu.memory_space<vmem>>, vector<1x8x128xf32>
    %116 = vector.shape_cast %115 : vector<1x8x128xf32> to vector<8x128xf32>
    %117 = vector.shape_cast %114 : vector<8x128xf32> to vector<1x8x128xf32>
    tpu.vector_store %arg10[%c0_66, %c0_67, %c0_68], %117 {strides = array<i32>} : memref<1x8x128xf32, #tpu.memory_space<vmem>>, vector<1x8x128xf32>,
    return
  }
  func.func @transform_0(%arg0: i32) -> (i32, i32, i32) {
    %c0_i32 = arith.constant 0 : i32
    %c0_i32_0 = arith.constant 0 : i32
    %c0_i32_1 = arith.constant 0 : i32
    return %arg0, %c0_i32, %c0_i32_0 : i32, i32, i32
  }
  func.func @transform_1(%arg0: i32) -> (i32, i32, i32) {
    %c0_i32 = arith.constant 0 : i32
    %c0_i32_0 = arith.constant 0 : i32
    %c0_i32_1 = arith.constant 0 : i32
    %c0_i32_2 = arith.constant 0 : i32
    return %c0_i32, %c0_i32_0, %c0_i32_1 : i32, i32, i32
  }
  func.func @transform_2(%arg0: i32) -> (i32, i32) {
    %c0_i32 = arith.constant 0 : i32
    %c0_i32_0 = arith.constant 0 : i32
    %c0_i32_1 = arith.constant 0 : i32
    return %c0_i32, %c0_i32_0 : i32, i32
  }
  func.func @transform_3(%arg0: i32) -> (i32, i32, i32) {
    %c0_i32 = arith.constant 0 : i32
    %c0_i32_0 = arith.constant 0 : i32
    %c0_i32_1 = arith.constant 0 : i32
    %c0_i32_2 = arith.constant 0 : i32
    return %c0_i32, %c0_i32_0, %c0_i32_1 : i32, i32, i32
  }
  func.func @transform_4(%arg0: i32) -> (i32, i32) {
    %c0_i32 = arith.constant 0 : i32
    %c0_i32_0 = arith.constant 0 : i32
    %c0_i32_1 = arith.constant 0 : i32
    return %c0_i32, %c0_i32_0 : i32, i32
  }
  func.func @transform_5(%arg0: i32) -> (i32, i32, i32) {
    %c0_i32 = arith.constant 0 : i32
    %c0_i32_0 = arith.constant 0 : i32
    %c0_i32_1 = arith.constant 0 : i32
    %c0_i32_2 = arith.constant 0 : i32
    return %c0_i32, %c0_i32_0, %c0_i32_1 : i32, i32, i32
  }
  func.func @transform_6(%arg0: i32) -> (i32, i32) {
    %c0_i32 = arith.constant 0 : i32
    %c0_i32_0 = arith.constant 0 : i32
    %c0_i32_1 = arith.constant 0 : i32
    return %c0_i32, %c0_i32_0 : i32, i32
  }
  func.func @transform_7(%arg0: i32) -> (i32, i32, i32) {
    %c0_i32 = arith.constant 0 : i32
    %c0_i32_0 = arith.constant 0 : i32
    %c0_i32_1 = arith.constant 0 : i32
    %c0_i32_2 = arith.constant 0 : i32
    return %c0_i32, %c0_i32_0, %c0_i32_1 : i32, i32, i32
  }
  func.func @transform_8(%arg0: i32) -> (i32, i32) {
    %c0_i32 = arith.constant 0 : i32
    %c0_i32_0 = arith.constant 0 : i32
    %c0_i32_1 = arith.constant 0 : i32
    return %c0_i32, %c0_i32_0 : i32, i32
  }
  func.func @transform_9(%arg0: i32) -> (i32, i32, i32) {
    %c0_i32 = arith.constant 0 : i32
    %c0_i32_0 = arith.constant 0 : i32
    %c0_i32_1 = arith.constant 0 : i32
    return %arg0, %c0_i32, %c0_i32_0 : i32, i32, i32
  }
}

</mosaic_0001>

<llo_original>
// kernel: simple_model_forward.1
$region0: #{simple_model_forward.1}
  #allocation0 [shape = 'u32[]', space=smem, size = 0x4, offset = 0x4, fixed_abs, tag = 'smem constant byte address 0x4 - core index']
  #allocation1 [shape = 'u32[144,128]{1,0:T(1,128)}', space=vmem, size = 0x12000, scoped, tag = 'internal scratch']
  %s0 = inlined_call_operand.vmem [shape: f32[2,32,128], index: 0, kind: input, shape index: {}]
  %s1 = inlined_call_operand.vmem [shape: f32[3,128,256], index: 1, kind: input, shape index: {}]
  %s2 = inlined_call_operand.vmem [shape: f32[1,256], index: 2, kind: input, shape index: {}]
  %s3 = inlined_call_operand.hbm [shape: f32[3,256,256], index: 3, kind: input, shape index: {}]
  %s4 = inlined_call_operand.vmem [shape: f32[1,256], index: 4, kind: input, shape index: {}]
  %s5 = inlined_call_operand.hbm [shape: f32[3,256,256], index: 5, kind: input, shape index: {}]
  %s6 = inlined_call_operand.vmem [shape: f32[1,256], index: 6, kind: input, shape index: {}]
  %s7 = inlined_call_operand.hbm [shape: f32[3,256,128], index: 7, kind: input, shape index: {}]
  %s8 = inlined_call_operand.vmem [shape: f32[1,128], index: 8, kind: input, shape index: {}]
  %s9 = inlined_call_operand.vmem [shape: f32[2,8,128], index: 9, kind: output, shape index: {}]
  %s10 = sld [smem:[#allocation0]]
  $region81: #{simple_model_forward.1} parent=0
    _
  %s12 = ssub.s32 1, %s10
  %s13 = scalar_select 0, %s12, %s10
  $region1: #{simple_model_forward.1} parent=0
    #allocation2 [shape = 'u8[786432]{0}', space=vmem, size = 0xc0000, scoped, tag = 'input window, operand 3, single buffered']
    #allocation3 [shape = 's32[2]{0}', space=sflag, size = 0x8, scoped, tag = 'scoped memory for simple_model_forward.1']
    #allocation4 [shape = 'u8[786432]{0}', space=vmem, size = 0xc0000, scoped, tag = 'input window, operand 5, single buffered']
    #allocation5 [shape = 's32[1]{0}', space=sflag, size = 0x4, scoped, tag = 'scoped memory for simple_model_forward.1']
    #allocation6 [shape = 'u8[393216]{0}', space=vmem, size = 0x60000, scoped, tag = 'input window, operand 7, single buffered']
    %14 = vsyncpa [#allocation3], 0
    %15 = vsyncpa [#allocation5], 0
    loop: start=0, step=1, limit=4
    $region2: #{simple_model_forward.1} parent=1 // loop_pre_header
      _
    $region3: #{simple_model_forward.1} parent=1 // loop_header
      %s17 = sphi 0, %s21
      %p18 = scmp.ge.s32.totalorder %s17, 4
      %s27 = sphi 0, %s29
      %s30 = sphi 0, %s27
      %s31 = sphi 0, %s30
      %s47 = sphi 0, %s31
      %s51 = sphi 0, %s51
      %s53 = sphi 0, %s51
      %s54 = sphi 0, %s53
      %s68 = sphi 0, %s54
      %s72 = sphi 0, %s72
      %s74 = sphi 0, %s72
      %s75 = sphi 0, %s74
      %s89 = sphi 0, %s75
      %s93 = sphi 0, %s93
      %s95 = sphi 0, %s93
      %s96 = sphi 0, %s95
      %s110 = sphi 0, %s96
      %s114 = sphi 0, %s114
      %s116 = sphi 0, %s114
      %s117 = sphi 0, %s116
      %s131 = sphi 0, %s117
      %s135 = sphi 0, %s135
      %s137 = sphi 0, %s135
      %s138 = sphi 0, %s137
      %s152 = sphi 0, %s138
      %s156 = sphi 0, %s156
      %s158 = sphi 0, %s156
      %s159 = sphi 0, %s158
      %s173 = sphi 0, %s159
      %s177 = sphi 0, %s177
      %s179 = sphi 0, %s177
      %s180 = sphi 0, %s179
      %s194 = sphi 0, %s180
      %s198 = sphi 0, %s198
      %s200 = sphi 0, %s198
      %s201 = sphi 0, %s200
      %s215 = sphi 0, %s201
      %s221 = sphi 0, %s223
      %s224 = sphi 0, %s221
      %s225 = sphi 0, %s224
      %s241 = sphi 0, %s225
    $region4: #{simple_model_forward.1} parent=1 // loop_header_branch
      %20 = sbr.rel (%p18) target = $region8
    $region5: #{simple_model_forward.1} parent=1 // loop_body
      %s22 = ssub.s32 %s17, 1
      %s23 = ssub.s32 %s17, 2
      %s24 = sadd.s32 %s17, 1
      %s25 = ssub.s32 %s17, %s24
      %p26 = scmp.eq.s32.totalorder %s25, 0
      %s28 = sadd.s32 %s27, 1
      %s29 = scalar_select %p26, %s27, %s28
      %p32 = pneg %p26
      %p33 = scmp.eq.s32.totalorder %s17, 1
      %p34 = por %p32, %p33
      %p35 = scmp.ne.s32.totalorder %s27, %s30
      %p36 = scmp.eq.s32.totalorder %s17, 0
      %p37 = por %p35, %p36
      %p38 = scmp.ne.s32.totalorder %s27, %s30
      %p39 = scmp.eq.s32.totalorder %s22, 1
      %p40 = por %p38, %p39
      %p41 = scmp.ne.s32.totalorder %s30, %s31
      %p42 = scmp.eq.s32.totalorder %s22, 0
      %p43 = por %p41, %p42
      %p44 = scmp.ne.s32.totalorder %s30, %s31
      %p45 = scmp.eq.s32.totalorder %s23, 1
      %p46 = por %p44, %p45
      %p48 = scmp.ne.s32.totalorder %s31, %s47
      %p49 = scmp.eq.s32.totalorder %s23, 0
      %p50 = por %p48, %p49
      %s52 = sadd.s32 %s51, 1
      %p55 = scmp.eq.s32.totalorder %s17, 1
      %p56 = scmp.ne.s32.totalorder %s51, %s53
      %p57 = scmp.eq.s32.totalorder %s17, 0
      %p58 = por %p56, %p57
      %p59 = scmp.ne.s32.totalorder %s51, %s53
      %p60 = scmp.eq.s32.totalorder %s22, 1
      %p61 = por %p59, %p60
      %p62 = scmp.ne.s32.totalorder %s53, %s54
      %p63 = scmp.eq.s32.totalorder %s22, 0
      %p64 = por %p62, %p63
      %p65 = scmp.ne.s32.totalorder %s53, %s54
      %p66 = scmp.eq.s32.totalorder %s23, 1
      %p67 = por %p65, %p66
      %p69 = scmp.ne.s32.totalorder %s54, %s68
      %p70 = scmp.eq.s32.totalorder %s23, 0
      %p71 = por %p69, %p70
      %s73 = sadd.s32 %s72, 1
      %p76 = scmp.eq.s32.totalorder %s17, 1
      %p77 = scmp.ne.s32.totalorder %s72, %s74
      %p78 = scmp.eq.s32.totalorder %s17, 0
      %p79 = por %p77, %p78
      %p80 = scmp.ne.s32.totalorder %s72, %s74
      %p81 = scmp.eq.s32.totalorder %s22, 1
      %p82 = por %p80, %p81
      %p83 = scmp.ne.s32.totalorder %s74, %s75
      %p84 = scmp.eq.s32.totalorder %s22, 0
      %p85 = por %p83, %p84
      %p86 = scmp.ne.s32.totalorder %s74, %s75
      %p87 = scmp.eq.s32.totalorder %s23, 1
      %p88 = por %p86, %p87
      %p90 = scmp.ne.s32.totalorder %s75, %s89
      %p91 = scmp.eq.s32.totalorder %s23, 0
      %p92 = por %p90, %p91
      %s94 = sadd.s32 %s93, 1
      %p97 = scmp.eq.s32.totalorder %s17, 1
      %p98 = scmp.ne.s32.totalorder %s93, %s95
      %p99 = scmp.eq.s32.totalorder %s17, 0
      %p100 = por %p98, %p99
      %p101 = scmp.ne.s32.totalorder %s93, %s95
      %p102 = scmp.eq.s32.totalorder %s22, 1
      %p103 = por %p101, %p102
      %p104 = scmp.ne.s32.totalorder %s95, %s96
      %p105 = scmp.eq.s32.totalorder %s22, 0
      %p106 = por %p104, %p105
      %p107 = scmp.ne.s32.totalorder %s95, %s96
      %p108 = scmp.eq.s32.totalorder %s23, 1
      %p109 = por %p107, %p108
      %p111 = scmp.ne.s32.totalorder %s96, %s110
      %p112 = scmp.eq.s32.totalorder %s23, 0
      %p113 = por %p111, %p112
      %s115 = sadd.s32 %s114, 1
      %p118 = scmp.eq.s32.totalorder %s17, 1
      %p119 = scmp.ne.s32.totalorder %s114, %s116
      %p120 = scmp.eq.s32.totalorder %s17, 0
      %p121 = por %p119, %p120
      %p122 = scmp.ne.s32.totalorder %s114, %s116
      %p123 = scmp.eq.s32.totalorder %s22, 1
      %p124 = por %p122, %p123
      %p125 = scmp.ne.s32.totalorder %s116, %s117
      %p126 = scmp.eq.s32.totalorder %s22, 0
      %p127 = por %p125, %p126
      %p128 = scmp.ne.s32.totalorder %s116, %s117
      %p129 = scmp.eq.s32.totalorder %s23, 1
      %p130 = por %p128, %p129
      %p132 = scmp.ne.s32.totalorder %s117, %s131
      %p133 = scmp.eq.s32.totalorder %s23, 0
      %p134 = por %p132, %p133
      %s136 = sadd.s32 %s135, 1
      %p139 = scmp.eq.s32.totalorder %s17, 1
      %p140 = scmp.ne.s32.totalorder %s135, %s137
      %p141 = scmp.eq.s32.totalorder %s17, 0
      %p142 = por %p140, %p141
      %p143 = scmp.ne.s32.totalorder %s135, %s137
      %p144 = scmp.eq.s32.totalorder %s22, 1
      %p145 = por %p143, %p144
      %p146 = scmp.ne.s32.totalorder %s137, %s138
      %p147 = scmp.eq.s32.totalorder %s22, 0
      %p148 = por %p146, %p147
      %p149 = scmp.ne.s32.totalorder %s137, %s138
      %p150 = scmp.eq.s32.totalorder %s23, 1
      %p151 = por %p149, %p150
      %p153 = scmp.ne.s32.totalorder %s138, %s152
      %p154 = scmp.eq.s32.totalorder %s23, 0
      %p155 = por %p153, %p154
      %s157 = sadd.s32 %s156, 1
      %p160 = scmp.eq.s32.totalorder %s17, 1
      %p161 = scmp.ne.s32.totalorder %s156, %s158
      %p162 = scmp.eq.s32.totalorder %s17, 0
      %p163 = por %p161, %p162
      %p164 = scmp.ne.s32.totalorder %s156, %s158
      %p165 = scmp.eq.s32.totalorder %s22, 1
      %p166 = por %p164, %p165
      %p167 = scmp.ne.s32.totalorder %s158, %s159
      %p168 = scmp.eq.s32.totalorder %s22, 0
      %p169 = por %p167, %p168
      %p170 = scmp.ne.s32.totalorder %s158, %s159
      %p171 = scmp.eq.s32.totalorder %s23, 1
      %p172 = por %p170, %p171
      %p174 = scmp.ne.s32.totalorder %s159, %s173
      %p175 = scmp.eq.s32.totalorder %s23, 0
      %p176 = por %p174, %p175
      %s178 = sadd.s32 %s177, 1
      %p181 = scmp.eq.s32.totalorder %s17, 1
      %p182 = scmp.ne.s32.totalorder %s177, %s179
      %p183 = scmp.eq.s32.totalorder %s17, 0
      %p184 = por %p182, %p183
      %p185 = scmp.ne.s32.totalorder %s177, %s179
      %p186 = scmp.eq.s32.totalorder %s22, 1
      %p187 = por %p185, %p186
      %p188 = scmp.ne.s32.totalorder %s179, %s180
      %p189 = scmp.eq.s32.totalorder %s22, 0
      %p190 = por %p188, %p189
      %p191 = scmp.ne.s32.totalorder %s179, %s180
      %p192 = scmp.eq.s32.totalorder %s23, 1
      %p193 = por %p191, %p192
      %p195 = scmp.ne.s32.totalorder %s180, %s194
      %p196 = scmp.eq.s32.totalorder %s23, 0
      %p197 = por %p195, %p196
      %s199 = sadd.s32 %s198, 1
      %p202 = scmp.eq.s32.totalorder %s17, 1
      %p203 = scmp.ne.s32.totalorder %s198, %s200
      %p204 = scmp.eq.s32.totalorder %s17, 0
      %p205 = por %p203, %p204
      %p206 = scmp.ne.s32.totalorder %s198, %s200
      %p207 = scmp.eq.s32.totalorder %s22, 1
      %p208 = por %p206, %p207
      %p209 = scmp.ne.s32.totalorder %s200, %s201
      %p210 = scmp.eq.s32.totalorder %s22, 0
      %p211 = por %p209, %p210
      %p212 = scmp.ne.s32.totalorder %s200, %s201
      %p213 = scmp.eq.s32.totalorder %s23, 1
      %p214 = por %p212, %p213
      %p216 = scmp.ne.s32.totalorder %s201, %s215
      %p217 = scmp.eq.s32.totalorder %s23, 0
      %p218 = por %p216, %p217
      %s219 = ssub.s32 %s17, %s24
      %p220 = scmp.eq.s32.totalorder %s219, 0
      %s222 = sadd.s32 %s221, 1
      %s223 = scalar_select %p220, %s221, %s222
      %p226 = pneg %p220
      %p227 = scmp.eq.s32.totalorder %s17, 1
      %p228 = por %p226, %p227
      %p229 = scmp.ne.s32.totalorder %s221, %s224
      %p230 = scmp.eq.s32.totalorder %s17, 0
      %p231 = por %p229, %p230
      %p232 = scmp.ne.s32.totalorder %s221, %s224
      %p233 = scmp.eq.s32.totalorder %s22, 1
      %p234 = por %p232, %p233
      %p235 = scmp.ne.s32.totalorder %s224, %s225
      %p236 = scmp.eq.s32.totalorder %s22, 0
      %p237 = por %p235, %p236
      %p238 = scmp.ne.s32.totalorder %s224, %s225
      %p239 = scmp.eq.s32.totalorder %s23, 1
      %p240 = por %p238, %p239
      %p242 = scmp.ne.s32.totalorder %s225, %s241
      %p243 = scmp.eq.s32.totalorder %s23, 0
      %p244 = por %p242, %p243
      %p245 = scmp.le.s32.totalorder 1, %s17
      %p246 = scmp.lt.s32.totalorder %s17, 3
      %p247 = pnand %p245, %p246
      %p248 = pneg %p247
      // Predicated region
      $region9: #{simple_model_forward.1} parent=5 // pred_check
        _
      $region10: #{simple_model_forward.1} parent=5 // pred_check_branch
        %250 = sbr.rel (%p247) target = $region12
      $region11: #{simple_model_forward.1} parent=5 // pred_region
        %s251 = ssub.s32 %s17, 1
        // Predicated region
        $region13: #{simple_model_forward.1} parent=11 // pred_check
          %p252 = pneg %p64
        $region14: #{simple_model_forward.1} parent=11 // pred_check_branch
          %254 = sbr.rel (%p252) target = $region16
        $region15: #{simple_model_forward.1} parent=11 // pred_region
          _
        $region16: #{simple_model_forward.1} parent=11 // pred_fallthru
          _
        // Predicated region
        $region17: #{simple_model_forward.1} parent=11 // pred_check
          %p255 = pneg %p85
        $region18: #{simple_model_forward.1} parent=11 // pred_check_branch
          %257 = sbr.rel (%p255) target = $region20
        $region19: #{simple_model_forward.1} parent=11 // pred_region
          _
        $region20: #{simple_model_forward.1} parent=11 // pred_fallthru
          _
        // Predicated region
        $region21: #{simple_model_forward.1} parent=11 // pred_check
          %p258 = pneg %p106
        $region22: #{simple_model_forward.1} parent=11 // pred_check_branch
          %260 = sbr.rel (%p258) target = $region24
        $region23: #{simple_model_forward.1} parent=11 // pred_region
          %s262 = ssub.s32 24576, 24576
          %263 = vsyncadd [#allocation3], %s262
          %s264 = sshll.u32 [#allocation2], 4
          %s265 = int_to_ptr.vmem [resolvable:$true] %s264
          %270 = dma.hbm_to_vmem [thread:$0]  %s3, 24576, %s265, [#allocation3], 256, 256, 16
        $region24: #{simple_model_forward.1} parent=11 // pred_fallthru
          _
        // Predicated region
        $region25: #{simple_model_forward.1} parent=11 // pred_check
          %p271 = pneg %p127
        $region26: #{simple_model_forward.1} parent=11 // pred_check_branch
          %273 = sbr.rel (%p271) target = $region28
        $region27: #{simple_model_forward.1} parent=11 // pred_region
          _
        $region28: #{simple_model_forward.1} parent=11 // pred_fallthru
          _
        // Predicated region
        $region29: #{simple_model_forward.1} parent=11 // pred_check
          %p274 = pneg %p148
        $region30: #{simple_model_forward.1} parent=11 // pred_check_branch
          %276 = sbr.rel (%p274) target = $region32
        $region31: #{simple_model_forward.1} parent=11 // pred_region
          %s278 = ssub.s32 24576, 24576
          %279 = vsyncadd [#allocation5], %s278
          %s280 = sshll.u32 [#allocation4], 4
          %s281 = int_to_ptr.vmem [resolvable:$true] %s280
          %286 = dma.hbm_to_vmem [thread:$0]  %s5, 24576, %s281, [#allocation5], 256, 256, 16
        $region32: #{simple_model_forward.1} parent=11 // pred_fallthru
          _
        // Predicated region
        $region33: #{simple_model_forward.1} parent=11 // pred_check
          %p287 = pneg %p169
        $region34: #{simple_model_forward.1} parent=11 // pred_check_branch
          %289 = sbr.rel (%p287) target = $region36
        $region35: #{simple_model_forward.1} parent=11 // pred_region
          _
        $region36: #{simple_model_forward.1} parent=11 // pred_fallthru
          _
        // Predicated region
        $region37: #{simple_model_forward.1} parent=11 // pred_check
          %p290 = pneg %p190
        $region38: #{simple_model_forward.1} parent=11 // pred_check_branch
          %292 = sbr.rel (%p290) target = $region40
        $region39: #{simple_model_forward.1} parent=11 // pred_region
          %s294 = ssub.s32 12288, 12288
          %295 = vsyncadd [#allocation5], %s294
          %s296 = sshll.u32 [#allocation6], 4
          %s297 = int_to_ptr.vmem [resolvable:$true] %s296
          %302 = dma.hbm_to_vmem [thread:$0]  %s7, 12288, %s297, [#allocation5], 128, 128, 8
        $region40: #{simple_model_forward.1} parent=11 // pred_fallthru
          _
        // Predicated region
        $region41: #{simple_model_forward.1} parent=11 // pred_check
          %p303 = pneg %p211
        $region42: #{simple_model_forward.1} parent=11 // pred_check_branch
          %305 = sbr.rel (%p303) target = $region44
        $region43: #{simple_model_forward.1} parent=11 // pred_region
          _
        $region44: #{simple_model_forward.1} parent=11 // pred_fallthru
          _
      $region12: #{simple_model_forward.1} parent=5 // pred_fallthru
        _
      %p306 = scmp.lt.s32.totalorder %s17, 2
      // Predicated region
      $region45: #{simple_model_forward.1} parent=5 // pred_check
        %p307 = pneg %p306
      $region46: #{simple_model_forward.1} parent=5 // pred_check_branch
        %309 = sbr.rel (%p307) target = $region48
      $region47: #{simple_model_forward.1} parent=5 // pred_region
        // Predicated region
        $region49: #{simple_model_forward.1} parent=47 // pred_check
          %p310 = pneg %p37
        $region50: #{simple_model_forward.1} parent=47 // pred_check_branch
          %312 = sbr.rel (%p310) target = $region52
        $region51: #{simple_model_forward.1} parent=47 // pred_region
          %p313 = scmp.lt.s32.totalorder %s17, 1
          %s314 = scalar_select %p313, %s17, 1
          %s315 = smul.addr %s314, 4
          %s316 = smul.addr %s315, 8
          %s317 = scalar_lea.vmem %s0, %s316
        $region52: #{simple_model_forward.1} parent=47 // pred_fallthru
          _
      $region48: #{simple_model_forward.1} parent=5 // pred_fallthru
        _
      %p318 = scmp.le.s32.totalorder 1, %s17
      %p319 = scmp.lt.s32.totalorder %s17, 3
      %p320 = pnand %p318, %p319
      %p321 = pneg %p320
      // Predicated region
      $region53: #{simple_model_forward.1} parent=5 // pred_check
        _
      $region54: #{simple_model_forward.1} parent=5 // pred_check_branch
        %323 = sbr.rel (%p320) target = $region56
      $region55: #{simple_model_forward.1} parent=5 // pred_region
        %s324 = ssub.s32 %s17, 1
        // Predicated region
        $region57: #{simple_model_forward.1} parent=55 // pred_check
          %p325 = pneg %p106
        $region58: #{simple_model_forward.1} parent=55 // pred_check_branch
          %327 = sbr.rel (%p325) target = $region60
        $region59: #{simple_model_forward.1} parent=55 // pred_region
          %328 = dma.done [#allocation3], 24576
        $region60: #{simple_model_forward.1} parent=55 // pred_fallthru
          _
        // Predicated region
        $region61: #{simple_model_forward.1} parent=55 // pred_check
          %p329 = pneg %p148
        $region62: #{simple_model_forward.1} parent=55 // pred_check_branch
          %331 = sbr.rel (%p329) target = $region64
        $region63: #{simple_model_forward.1} parent=55 // pred_region
          %332 = dma.done [#allocation5], 24576
        $region64: #{simple_model_forward.1} parent=55 // pred_fallthru
          _
        // Predicated region
        $region65: #{simple_model_forward.1} parent=55 // pred_check
          %p333 = pneg %p190
        $region66: #{simple_model_forward.1} parent=55 // pred_check_branch
          %335 = sbr.rel (%p333) target = $region68
        $region67: #{simple_model_forward.1} parent=55 // pred_region
          %336 = dma.done [#allocation5], 12288
        $region68: #{simple_model_forward.1} parent=55 // pred_fallthru
          _
        %p337 = scmp.lt.s32.totalorder %s22, 1
        %s338 = scalar_select %p337, %s22, 1
        %s339 = smul.addr %s338, 4
        %s340 = smul.addr %s339, 8
        %s341 = scalar_lea.vmem %s0, %s340
        %p342 = pneg %p43
        %p343 = pneg %p40
        %p344 = pneg %p64
        %p345 = pneg %p61
        %p346 = pneg %p85
        %p347 = pneg %p82
        %p348 = pneg %p106
        %p349 = pneg %p103
        %p350 = pneg %p127
        %p351 = pneg %p124
        %p352 = pneg %p148
        %p353 = pneg %p145
        %p354 = pneg %p169
        %p355 = pneg %p166
        %p356 = pneg %p190
        %p357 = pneg %p187
        %p358 = pneg %p211
        %p359 = pneg %p208
        %p360 = pneg %p237
        %p361 = pneg %p234
        %p362 = scmp.lt.s32.totalorder %s22, 1
        %s363 = scalar_select %p362, %s22, 1
        %s364 = smul.addr %s363, 8
        %s365 = scalar_lea.vmem %s9, %s364
        %p366 = scmp.lt.s32.totalorder %s22, 1
        %s367 = scalar_select %p366, %s22, 1
        %s368 = smul.addr %s367, 4
        %s369 = smul.addr %s368, 8
        %s370 = scalar_lea.vmem %s0, %s369
        %p371 = scmp.lt.s32.totalorder %s22, 1
        %s372 = scalar_select %p371, %s22, 1
        %s373 = smul.addr %s372, 8
        %s374 = scalar_lea.vmem %s9, %s373
        %v375 = vld [vmem:[%s370] sm:$0xff]
        %v376 = vld [vmem:[%s370 + $0x8] sm:$0xff]
        %v377 = vld [vmem:[%s370 + $0x10] sm:$0xff]
        %v378 = vld [vmem:[%s370 + $0x18] sm:$0xff]
        %v379 = vld [vmem:[%s1] sm:$0xff]
        %v380 = vld [vmem:[%s1 + $0x8] sm:$0xff]
        %v381 = vld [vmem:[%s1 + $0x10] sm:$0xff]
        %v382 = vld [vmem:[%s1 + $0x18] sm:$0xff]
        %v383 = vld [vmem:[%s1 + $0x20] sm:$0xff]
        %v384 = vld [vmem:[%s1 + $0x28] sm:$0xff]
        %v385 = vld [vmem:[%s1 + $0x30] sm:$0xff]
        %v386 = vld [vmem:[%s1 + $0x38] sm:$0xff]
        %v387 = vld [vmem:[%s1 + $0x40] sm:$0xff]
        %v388 = vld [vmem:[%s1 + $0x48] sm:$0xff]
        %v389 = vld [vmem:[%s1 + $0x50] sm:$0xff]
        %v390 = vld [vmem:[%s1 + $0x58] sm:$0xff]
        %v391 = vld [vmem:[%s1 + $0x60] sm:$0xff]
        %v392 = vld [vmem:[%s1 + $0x68] sm:$0xff]
        %v393 = vld [vmem:[%s1 + $0x70] sm:$0xff]
        %v394 = vld [vmem:[%s1 + $0x78] sm:$0xff]
        %v395 = vld [vmem:[%s1 + $0x80] sm:$0xff]
        %v396 = vld [vmem:[%s1 + $0x88] sm:$0xff]
        %v397 = vld [vmem:[%s1 + $0x90] sm:$0xff]
        %v398 = vld [vmem:[%s1 + $0x98] sm:$0xff]
        %v399 = vld [vmem:[%s1 + $0xa0] sm:$0xff]
        %v400 = vld [vmem:[%s1 + $0xa8] sm:$0xff]
        %v401 = vld [vmem:[%s1 + $0xb0] sm:$0xff]
        %v402 = vld [vmem:[%s1 + $0xb8] sm:$0xff]
        %v403 = vld [vmem:[%s1 + $0xc0] sm:$0xff]
        %v404 = vld [vmem:[%s1 + $0xc8] sm:$0xff]
        %v405 = vld [vmem:[%s1 + $0xd0] sm:$0xff]
        %v406 = vld [vmem:[%s1 + $0xd8] sm:$0xff]
        %v407 = vld [vmem:[%s1 + $0xe0] sm:$0xff]
        %v408 = vld [vmem:[%s1 + $0xe8] sm:$0xff]
        %v409 = vld [vmem:[%s1 + $0xf0] sm:$0xff]
        %v410 = vld [vmem:[%s1 + $0xf8] sm:$0xff]
        %s411 = scalar_lea.vmem %s1, 256
        %v412 = vld [vmem:[%s411] sm:$0xff]
        %v413 = vld [vmem:[%s411 + $0x8] sm:$0xff]
        %v414 = vld [vmem:[%s411 + $0x10] sm:$0xff]
        %v415 = vld [vmem:[%s411 + $0x18] sm:$0xff]
        %v416 = vld [vmem:[%s411 + $0x20] sm:$0xff]
        %v417 = vld [vmem:[%s411 + $0x28] sm:$0xff]
        %v418 = vld [vmem:[%s411 + $0x30] sm:$0xff]
        %v419 = vld [vmem:[%s411 + $0x38] sm:$0xff]
        %v420 = vld [vmem:[%s411 + $0x40] sm:$0xff]
        %v421 = vld [vmem:[%s411 + $0x48] sm:$0xff]
        %v422 = vld [vmem:[%s411 + $0x50] sm:$0xff]
        %v423 = vld [vmem:[%s411 + $0x58] sm:$0xff]
        %v424 = vld [vmem:[%s411 + $0x60] sm:$0xff]
        %v425 = vld [vmem:[%s411 + $0x68] sm:$0xff]
        %v426 = vld [vmem:[%s411 + $0x70] sm:$0xff]
        %v427 = vld [vmem:[%s411 + $0x78] sm:$0xff]
        %v428 = vld [vmem:[%s411 + $0x80] sm:$0xff]
        %v429 = vld [vmem:[%s411 + $0x88] sm:$0xff]
        %v430 = vld [vmem:[%s411 + $0x90] sm:$0xff]
        %v431 = vld [vmem:[%s411 + $0x98] sm:$0xff]
        %v432 = vld [vmem:[%s411 + $0xa0] sm:$0xff]
        %v433 = vld [vmem:[%s411 + $0xa8] sm:$0xff]
        %v434 = vld [vmem:[%s411 + $0xb0] sm:$0xff]
        %v435 = vld [vmem:[%s411 + $0xb8] sm:$0xff]
        %v436 = vld [vmem:[%s411 + $0xc0] sm:$0xff]
        %v437 = vld [vmem:[%s411 + $0xc8] sm:$0xff]
        %v438 = vld [vmem:[%s411 + $0xd0] sm:$0xff]
        %v439 = vld [vmem:[%s411 + $0xd8] sm:$0xff]
        %v440 = vld [vmem:[%s411 + $0xe0] sm:$0xff]
        %v441 = vld [vmem:[%s411 + $0xe8] sm:$0xff]
        %v442 = vld [vmem:[%s411 + $0xf0] sm:$0xff]
        %v443 = vld [vmem:[%s411 + $0xf8] sm:$0xff]
        %444 = vmatprep.subr.mxu0 %v413
        %445 = vmatpush1.msra.mxu0 %v412
        %446 = vmatprep.subr.mxu0 %v415
        %447 = vmatpush1.msra.mxu0 %v414
        %448 = vmatprep.subr.mxu0 %v417
        %449 = vmatpush1.msra.mxu0 %v416
        %450 = vmatprep.subr.mxu0 %v419
        %451 = vmatpush1.msra.mxu0 %v418
        %452 = vmatprep.subr.mxu0 %v421
        %453 = vmatpush1.msra.mxu0 %v420
        %454 = vmatprep.subr.mxu0 %v423
        %455 = vmatpush1.msra.mxu0 %v422
        %456 = vmatprep.subr.mxu0 %v425
        %457 = vmatpush1.msra.mxu0 %v424
        %458 = vmatprep.subr.mxu0 %v427
        %459 = vmatpush1.msra.mxu0 %v426
        %460 = vmatprep.subr.mxu0 %v429
        %461 = vmatpush1.msra.mxu0 %v428
        %462 = vmatprep.subr.mxu0 %v431
        %463 = vmatpush1.msra.mxu0 %v430
        %464 = vmatprep.subr.mxu0 %v433
        %465 = vmatpush1.msra.mxu0 %v432
        %466 = vmatprep.subr.mxu0 %v435
        %467 = vmatpush1.msra.mxu0 %v434
        %468 = vmatprep.subr.mxu0 %v437
        %469 = vmatpush1.msra.mxu0 %v436
        %470 = vmatprep.subr.mxu0 %v439
        %471 = vmatpush1.msra.mxu0 %v438
        %472 = vmatprep.subr.mxu0 %v441
        %473 = vmatpush1.msra.mxu0 %v440
        %474 = vmatprep.subr.mxu0 %v443
        %475 = vmatpush1.msra.mxu0 %v442
        %476 = vmatprep.subr.mxu0 0.0
        %477 = vmatpush1.msra.mxu0 0.0
        %478 = vmatprep.subr.mxu0 0.0
        %479 = vmatpush1.msra.mxu0 0.0
        %480 = vmatprep.subr.mxu0 0.0
        %481 = vmatpush1.msra.mxu0 0.0
        %482 = vmatprep.subr.mxu0 0.0
        %483 = vmatpush1.msra.mxu0 0.0
        %484 = vmatprep.subr.mxu0 0.0
        %485 = vmatpush1.msra.mxu0 0.0
        %486 = vmatprep.subr.mxu0 0.0
        %487 = vmatpush1.msra.mxu0 0.0
        %488 = vmatprep.subr.mxu0 0.0
        %489 = vmatpush1.msra.mxu0 0.0
        %490 = vmatprep.subr.mxu0 0.0
        %491 = vmatpush1.msra.mxu0 0.0
        %492 = vmatprep.subr.mxu0 0.0
        %493 = vmatpush1.msra.mxu0 0.0
        %494 = vmatprep.subr.mxu0 0.0
        %495 = vmatpush1.msra.mxu0 0.0
        %496 = vmatprep.subr.mxu0 0.0
        %497 = vmatpush1.msra.mxu0 0.0
        %498 = vmatprep.subr.mxu0 0.0
        %499 = vmatpush1.msra.mxu0 0.0
        %500 = vmatprep.subr.mxu0 0.0
        %501 = vmatpush1.msra.mxu0 0.0
        %502 = vmatprep.subr.mxu0 0.0
        %503 = vmatpush1.msra.mxu0 0.0
        %504 = vmatprep.subr.mxu0 0.0
        %505 = vmatpush1.msra.mxu0 0.0
        %506 = vmatprep.subr.mxu0 0.0
        %507 = vmatpush1.msra.mxu0 0.0
        %508 = vmatprep.mubr.f32.mxu0 0.0
        %509 = vmatmul.mubr.f32.gmra.mrb[0].mxu0 %v375
        %v510 = vpop.f32.mrb[0].mxu0
        %v511 = vadd.f32 0.0, %v510
        %v512 = vpop.f32.mrb[0].mxu0
        %v513 = vadd.f32 0.0, %v512
        %514 = vmatprep.mubr.f32.mxu0 0.0
        %515 = vmatmul.mubr.f32.gmra.mrb[0].mxu0 %v376
        %v516 = vpop.f32.mrb[0].mxu0
        %v517 = vadd.f32 0.0, %v516
        %v518 = vpop.f32.mrb[0].mxu0
        %v519 = vadd.f32 0.0, %v518
        %520 = vmatprep.mubr.f32.mxu0 0.0
        %521 = vmatmul.mubr.f32.gmra.mrb[0].mxu0 %v377
        %v522 = vpop.f32.mrb[0].mxu0
        %v523 = vadd.f32 0.0, %v522
        %v524 = vpop.f32.mrb[0].mxu0
        %v525 = vadd.f32 0.0, %v524
        %526 = vmatprep.mubr.f32.mxu0 0.0
        %527 = vmatmul.mubr.f32.gmra.mrb[0].mxu0 %v378
        %v528 = vpop.f32.mrb[0].mxu0
        %v529 = vadd.f32 0.0, %v528
        %v530 = vpop.f32.mrb[0].mxu0
        %v531 = vadd.f32 0.0, %v530
        %532 = vdwg.mxu0
        %v533 = vlaneseq
        %v534 = vshrl.u32 %v533, 7
        %v535 = vadd.s32 %v534, 8
        %v536 = vadd.s32 %v534, 16
        %v537 = vadd.s32 %v534, 24
        %v538 = vlaneseq
        %v539 = vand.u32 %v538, 127
        %v540 = vadd.s32 %v534, 1
        %v541 = vadd.s32 %v535, 1
        %v542 = vadd.s32 %v536, 1
        %v543 = vadd.s32 %v537, 1
        %vm544 = vcmp.eq.s32.totalorder %v539, %v540
        %vm545 = vcmp.eq.s32.totalorder %v539, %v541
        %vm546 = vcmp.eq.s32.totalorder %v539, %v542
        %vm547 = vcmp.eq.s32.totalorder %v539, %v543
        %v548 = vsel %vm544, 1, 0
        %v549 = vsel %vm545, 1, 0
        %v550 = vsel %vm546, 1, 0
        %v551 = vsel %vm547, 1, 0
        %v552 = vcvt.s32.f32 %v548
        %v553 = vcvt.s32.f32 %v549
        %v554 = vcvt.s32.f32 %v550
        %v555 = vcvt.s32.f32 %v551
        %vm556 = vcmask 261120
        %v558 = vsel %vm556, %v552, 0
        %v561 = vsel %vm556, %v553, 0
        %v564 = vsel %vm556, %v554, 0
        %v567 = vsel %vm556, %v555, 0
        %569 = vmatprep.subr.mxu0 %v513
        %570 = vmatpush1.msra.mxu0 %v511
        %571 = vmatprep.subr.mxu0 %v519
        %572 = vmatpush1.msra.mxu0 %v517
        %573 = vmatprep.subr.mxu0 %v525
        %574 = vmatpush1.msra.mxu0 %v523
        %575 = vmatprep.subr.mxu0 %v531
        %576 = vmatpush1.msra.mxu0 %v529
        %577 = vmatprep.subr.mxu0 0.0
        %578 = vmatpush1.msra.mxu0 0.0
        %579 = vmatprep.subr.mxu0 0.0
        %580 = vmatpush1.msra.mxu0 0.0
        %581 = vmatprep.subr.mxu0 0.0
        %582 = vmatpush1.msra.mxu0 0.0
        %583 = vmatprep.subr.mxu0 0.0
        %584 = vmatpush1.msra.mxu0 0.0
        %585 = vmatprep.subr.mxu0 0.0
        %586 = vmatpush1.msra.mxu0 0.0
        %587 = vmatprep.subr.mxu0 0.0
        %588 = vmatpush1.msra.mxu0 0.0
        %589 = vmatprep.subr.mxu0 0.0
        %590 = vmatpush1.msra.mxu0 0.0
        %591 = vmatprep.subr.mxu0 0.0
        %592 = vmatpush1.msra.mxu0 0.0
        %593 = vmatprep.subr.mxu0 0.0
        %594 = vmatpush1.msra.mxu0 0.0
        %595 = vmatprep.subr.mxu0 0.0
        %596 = vmatpush1.msra.mxu0 0.0
        %597 = vmatprep.subr.mxu0 0.0
        %598 = vmatpush1.msra.mxu0 0.0
        %599 = vmatprep.subr.mxu0 0.0
        %600 = vmatpush1.msra.mxu0 0.0
        %601 = vmatprep.subr.mxu0 0.0
        %602 = vmatpush1.msra.mxu0 0.0
        %603 = vmatprep.subr.mxu0 0.0
        %604 = vmatpush1.msra.mxu0 0.0
        %605 = vmatprep.subr.mxu0 0.0
        %606 = vmatpush1.msra.mxu0 0.0
        %607 = vmatprep.subr.mxu0 0.0
        %608 = vmatpush1.msra.mxu0 0.0
        %609 = vmatprep.subr.mxu0 0.0
        %610 = vmatpush1.msra.mxu0 0.0
        %611 = vmatprep.subr.mxu0 0.0
        %612 = vmatpush1.msra.mxu0 0.0
        %613 = vmatprep.subr.mxu0 0.0
        %614 = vmatpush1.msra.mxu0 0.0
        %615 = vmatprep.subr.mxu0 0.0
        %616 = vmatpush1.msra.mxu0 0.0
        %617 = vmatprep.subr.mxu0 0.0
        %618 = vmatpush1.msra.mxu0 0.0
        %619 = vmatprep.subr.mxu0 0.0
        %620 = vmatpush1.msra.mxu0 0.0
        %621 = vmatprep.subr.mxu0 0.0
        %622 = vmatpush1.msra.mxu0 0.0
        %623 = vmatprep.subr.mxu0 0.0
        %624 = vmatpush1.msra.mxu0 0.0
        %625 = vmatprep.subr.mxu0 0.0
        %626 = vmatpush1.msra.mxu0 0.0
        %627 = vmatprep.subr.mxu0 0.0
        %628 = vmatpush1.msra.mxu0 0.0
        %629 = vmatprep.subr.mxu0 0.0
        %630 = vmatpush1.msra.mxu0 0.0
        %631 = vmatprep.subr.mxu0 0.0
        %632 = vmatpush1.msra.mxu0 0.0
        %633 = vmatprep.mubr.f32.mxu0 0.0
        %634 = vmatmul.mubr.f32.gmra.mrb[0].mxu0 %v558
        %v635 = vpop.f32.mrb[0].mxu0
        %v636 = vadd.f32 0.0, %v635
        %v637 = vpop.f32.mrb[0].mxu0
        %v638 = vadd.f32 0.0, %v637
        %639 = vmatprep.mubr.f32.mxu0 0.0
        %640 = vmatmul.mubr.f32.gmra.mrb[0].mxu0 %v561
        %v641 = vpop.f32.mrb[0].mxu0
        %v642 = vadd.f32 0.0, %v641
        %v643 = vpop.f32.mrb[0].mxu0
        %v644 = vadd.f32 0.0, %v643
        %645 = vmatprep.mubr.f32.mxu0 0.0
        %646 = vmatmul.mubr.f32.gmra.mrb[0].mxu0 %v564
        %v647 = vpop.f32.mrb[0].mxu0
        %v648 = vadd.f32 0.0, %v647
        %v649 = vpop.f32.mrb[0].mxu0
        %v650 = vadd.f32 0.0, %v649
        %651 = vmatprep.mubr.f32.mxu0 0.0
        %652 = vmatmul.mubr.f32.gmra.mrb[0].mxu0 %v567
        %v653 = vpop.f32.mrb[0].mxu0
        %v654 = vadd.f32 0.0, %v653
        %v655 = vpop.f32.mrb[0].mxu0
        %v656 = vadd.f32 0.0, %v655
        %657 = vdwg.mxu0
        %658 = vmatprep.subr.mxu0 %v380
        %659 = vmatpush1.msra.mxu0 %v379
        %660 = vmatprep.subr.mxu0 %v382
        %661 = vmatpush1.msra.mxu0 %v381
        %662 = vmatprep.subr.mxu0 %v384
        %663 = vmatpush1.msra.mxu0 %v383
        %664 = vmatprep.subr.mxu0 %v386
        %665 = vmatpush1.msra.mxu0 %v385
        %666 = vmatprep.subr.mxu0 %v388
        %667 = vmatpush1.msra.mxu0 %v387
        %668 = vmatprep.subr.mxu0 %v390
        %669 = vmatpush1.msra.mxu0 %v389
        %670 = vmatprep.subr.mxu0 %v392
        %671 = vmatpush1.msra.mxu0 %v391
        %672 = vmatprep.subr.mxu0 %v394
        %673 = vmatpush1.msra.mxu0 %v393
        %674 = vmatprep.subr.mxu0 %v396
        %675 = vmatpush1.msra.mxu0 %v395
        %676 = vmatprep.subr.mxu0 %v398
        %677 = vmatpush1.msra.mxu0 %v397
        %678 = vmatprep.subr.mxu0 %v400
        %679 = vmatpush1.msra.mxu0 %v399
        %680 = vmatprep.subr.mxu0 %v402
        %681 = vmatpush1.msra.mxu0 %v401
        %682 = vmatprep.subr.mxu0 %v404
        %683 = vmatpush1.msra.mxu0 %v403
        %684 = vmatprep.subr.mxu0 %v406
        %685 = vmatpush1.msra.mxu0 %v405
        %686 = vmatprep.subr.mxu0 %v408
        %687 = vmatpush1.msra.mxu0 %v407
        %688 = vmatprep.subr.mxu0 %v410
        %689 = vmatpush1.msra.mxu0 %v409
        %690 = vmatprep.subr.mxu0 0.0
        %691 = vmatpush1.msra.mxu0 0.0
        %692 = vmatprep.subr.mxu0 0.0
        %693 = vmatpush1.msra.mxu0 0.0
        %694 = vmatprep.subr.mxu0 0.0
        %695 = vmatpush1.msra.mxu0 0.0
        %696 = vmatprep.subr.mxu0 0.0
        %697 = vmatpush1.msra.mxu0 0.0
        %698 = vmatprep.subr.mxu0 0.0
        %699 = vmatpush1.msra.mxu0 0.0
        %700 = vmatprep.subr.mxu0 0.0
        %701 = vmatpush1.msra.mxu0 0.0
        %702 = vmatprep.subr.mxu0 0.0
        %703 = vmatpush1.msra.mxu0 0.0
        %704 = vmatprep.subr.mxu0 0.0
        %705 = vmatpush1.msra.mxu0 0.0
        %706 = vmatprep.subr.mxu0 0.0
        %707 = vmatpush1.msra.mxu0 0.0
        %708 = vmatprep.subr.mxu0 0.0
        %709 = vmatpush1.msra.mxu0 0.0
        %710 = vmatprep.subr.mxu0 0.0
        %711 = vmatpush1.msra.mxu0 0.0
        %712 = vmatprep.subr.mxu0 0.0
        %713 = vmatpush1.msra.mxu0 0.0
        %714 = vmatprep.subr.mxu0 0.0
        %715 = vmatpush1.msra.mxu0 0.0
        %716 = vmatprep.subr.mxu0 0.0
        %717 = vmatpush1.msra.mxu0 0.0
        %718 = vmatprep.subr.mxu0 0.0
        %719 = vmatpush1.msra.mxu0 0.0
        %720 = vmatprep.subr.mxu0 0.0
        %721 = vmatpush1.msra.mxu0 0.0
        %722 = vmatprep.mubr.f32.mxu0 0.0
        %723 = vmatmul.mubr.f32.gmra.mrb[0].mxu0 %v375
        %v724 = vpop.f32.mrb[0].mxu0
        %v725 = vadd.f32 %v636, %v724
        %v726 = vpop.f32.mrb[0].mxu0
        %v727 = vadd.f32 %v638, %v726
        %728 = vmatprep.mubr.f32.mxu0 0.0
        %729 = vmatmul.mubr.f32.gmra.mrb[0].mxu0 %v376
        %v730 = vpop.f32.mrb[0].mxu0
        %v731 = vadd.f32 %v642, %v730
        %v732 = vpop.f32.mrb[0].mxu0
        %v733 = vadd.f32 %v644, %v732
        %734 = vmatprep.mubr.f32.mxu0 0.0
        %735 = vmatmul.mubr.f32.gmra.mrb[0].mxu0 %v377
        %v736 = vpop.f32.mrb[0].mxu0
        %v737 = vadd.f32 %v648, %v736
        %v738 = vpop.f32.mrb[0].mxu0
        %v739 = vadd.f32 %v650, %v738
        %740 = vmatprep.mubr.f32.mxu0 0.0
        %741 = vmatmul.mubr.f32.gmra.mrb[0].mxu0 %v378
        %v742 = vpop.f32.mrb[0].mxu0
        %v743 = vadd.f32 %v654, %v742
        %v744 = vpop.f32.mrb[0].mxu0
        %v745 = vadd.f32 %v656, %v744
        %746 = vdwg.mxu0
        %s747 = scalar_lea.vmem %s1, 512
        %v748 = vld [vmem:[%s747] sm:$0xff]
        %v749 = vld [vmem:[%s747 + $0x8] sm:$0xff]
        %v750 = vld [vmem:[%s747 + $0x10] sm:$0xff]
        %v751 = vld [vmem:[%s747 + $0x18] sm:$0xff]
        %v752 = vld [vmem:[%s747 + $0x20] sm:$0xff]
        %v753 = vld [vmem:[%s747 + $0x28] sm:$0xff]
        %v754 = vld [vmem:[%s747 + $0x30] sm:$0xff]
        %v755 = vld [vmem:[%s747 + $0x38] sm:$0xff]
        %v756 = vld [vmem:[%s747 + $0x40] sm:$0xff]
        %v757 = vld [vmem:[%s747 + $0x48] sm:$0xff]
        %v758 = vld [vmem:[%s747 + $0x50] sm:$0xff]
        %v759 = vld [vmem:[%s747 + $0x58] sm:$0xff]
        %v760 = vld [vmem:[%s747 + $0x60] sm:$0xff]
        %v761 = vld [vmem:[%s747 + $0x68] sm:$0xff]
        %v762 = vld [vmem:[%s747 + $0x70] sm:$0xff]
        %v763 = vld [vmem:[%s747 + $0x78] sm:$0xff]
        %v764 = vld [vmem:[%s747 + $0x80] sm:$0xff]
        %v765 = vld [vmem:[%s747 + $0x88] sm:$0xff]
        %v766 = vld [vmem:[%s747 + $0x90] sm:$0xff]
        %v767 = vld [vmem:[%s747 + $0x98] sm:$0xff]
        %v768 = vld [vmem:[%s747 + $0xa0] sm:$0xff]
        %v769 = vld [vmem:[%s747 + $0xa8] sm:$0xff]
        %v770 = vld [vmem:[%s747 + $0xb0] sm:$0xff]
        %v771 = vld [vmem:[%s747 + $0xb8] sm:$0xff]
        %v772 = vld [vmem:[%s747 + $0xc0] sm:$0xff]
        %v773 = vld [vmem:[%s747 + $0xc8] sm:$0xff]
        %v774 = vld [vmem:[%s747 + $0xd0] sm:$0xff]
        %v775 = vld [vmem:[%s747 + $0xd8] sm:$0xff]
        %v776 = vld [vmem:[%s747 + $0xe0] sm:$0xff]
        %v777 = vld [vmem:[%s747 + $0xe8] sm:$0xff]
        %v778 = vld [vmem:[%s747 + $0xf0] sm:$0xff]
        %v779 = vld [vmem:[%s747 + $0xf8] sm:$0xff]
        %780 = vmatprep.subr.mxu0 %v749
        %781 = vmatpush1.msra.mxu0 %v748
        %782 = vmatprep.subr.mxu0 %v751
        %783 = vmatpush1.msra.mxu0 %v750
        %784 = vmatprep.subr.mxu0 %v753
        %785 = vmatpush1.msra.mxu0 %v752
        %786 = vmatprep.subr.mxu0 %v755
        %787 = vmatpush1.msra.mxu0 %v754
        %788 = vmatprep.subr.mxu0 %v757
        %789 = vmatpush1.msra.mxu0 %v756
        %790 = vmatprep.subr.mxu0 %v759
        %791 = vmatpush1.msra.mxu0 %v758
        %792 = vmatprep.subr.mxu0 %v761
        %793 = vmatpush1.msra.mxu0 %v760
        %794 = vmatprep.subr.mxu0 %v763
        %795 = vmatpush1.msra.mxu0 %v762
        %796 = vmatprep.subr.mxu0 %v765
        %797 = vmatpush1.msra.mxu0 %v764
        %798 = vmatprep.subr.mxu0 %v767
        %799 = vmatpush1.msra.mxu0 %v766
        %800 = vmatprep.subr.mxu0 %v769
        %801 = vmatpush1.msra.mxu0 %v768
        %802 = vmatprep.subr.mxu0 %v771
        %803 = vmatpush1.msra.mxu0 %v770
        %804 = vmatprep.subr.mxu0 %v773
        %805 = vmatpush1.msra.mxu0 %v772
        %806 = vmatprep.subr.mxu0 %v775
        %807 = vmatpush1.msra.mxu0 %v774
        %808 = vmatprep.subr.mxu0 %v777
        %809 = vmatpush1.msra.mxu0 %v776
        %810 = vmatprep.subr.mxu0 %v779
        %811 = vmatpush1.msra.mxu0 %v778
        %812 = vmatprep.subr.mxu0 0.0
        %813 = vmatpush1.msra.mxu0 0.0
        %814 = vmatprep.subr.mxu0 0.0
        %815 = vmatpush1.msra.mxu0 0.0
        %816 = vmatprep.subr.mxu0 0.0
        %817 = vmatpush1.msra.mxu0 0.0
        %818 = vmatprep.subr.mxu0 0.0
        %819 = vmatpush1.msra.mxu0 0.0
        %820 = vmatprep.subr.mxu0 0.0
        %821 = vmatpush1.msra.mxu0 0.0
        %822 = vmatprep.subr.mxu0 0.0
        %823 = vmatpush1.msra.mxu0 0.0
        %824 = vmatprep.subr.mxu0 0.0
        %825 = vmatpush1.msra.mxu0 0.0
        %826 = vmatprep.subr.mxu0 0.0
        %827 = vmatpush1.msra.mxu0 0.0
        %828 = vmatprep.subr.mxu0 0.0
        %829 = vmatpush1.msra.mxu0 0.0
        %830 = vmatprep.subr.mxu0 0.0
        %831 = vmatpush1.msra.mxu0 0.0
        %832 = vmatprep.subr.mxu0 0.0
        %833 = vmatpush1.msra.mxu0 0.0
        %834 = vmatprep.subr.mxu0 0.0
        %835 = vmatpush1.msra.mxu0 0.0
        %836 = vmatprep.subr.mxu0 0.0
        %837 = vmatpush1.msra.mxu0 0.0
        %838 = vmatprep.subr.mxu0 0.0
        %839 = vmatpush1.msra.mxu0 0.0
        %840 = vmatprep.subr.mxu0 0.0
        %841 = vmatpush1.msra.mxu0 0.0
        %842 = vmatprep.subr.mxu0 0.0
        %843 = vmatpush1.msra.mxu0 0.0
        %844 = vmatprep.mubr.f32.mxu0 0.0
        %845 = vmatmul.mubr.f32.gmra.mrb[0].mxu0 %v375
        %v846 = vpop.f32.mrb[0].mxu0
        %v847 = vadd.f32 0.0, %v846
        %v848 = vpop.f32.mrb[0].mxu0
        %v849 = vadd.f32 0.0, %v848
        %850 = vmatprep.mubr.f32.mxu0 0.0
        %851 = vmatmul.mubr.f32.gmra.mrb[0].mxu0 %v376
        %v852 = vpop.f32.mrb[0].mxu0
        %v853 = vadd.f32 0.0, %v852
        %v854 = vpop.f32.mrb[0].mxu0
        %v855 = vadd.f32 0.0, %v854
        %856 = vmatprep.mubr.f32.mxu0 0.0
        %857 = vmatmul.mubr.f32.gmra.mrb[0].mxu0 %v377
        %v858 = vpop.f32.mrb[0].mxu0
        %v859 = vadd.f32 0.0, %v858
        %v860 = vpop.f32.mrb[0].mxu0
        %v861 = vadd.f32 0.0, %v860
        %862 = vmatprep.mubr.f32.mxu0 0.0
        %863 = vmatmul.mubr.f32.gmra.mrb[0].mxu0 %v378
        %v864 = vpop.f32.mrb[0].mxu0
        %v865 = vadd.f32 0.0, %v864
        %v866 = vpop.f32.mrb[0].mxu0
        %v867 = vadd.f32 0.0, %v866
        %868 = vdwg.mxu0
        %v869 = vadd.s32 %v534, 2
        %v870 = vadd.s32 %v535, 2
        %v871 = vadd.s32 %v536, 2
        %v872 = vadd.s32 %v537, 2
        %vm873 = vcmp.eq.s32.totalorder %v539, %v869
        %vm874 = vcmp.eq.s32.totalorder %v539, %v870
        %vm875 = vcmp.eq.s32.totalorder %v539, %v871
        %vm876 = vcmp.eq.s32.totalorder %v539, %v872
        %v877 = vsel %vm873, 1, 0
        %v878 = vsel %vm874, 1, 0
        %v879 = vsel %vm875, 1, 0
        %v880 = vsel %vm876, 1, 0
        %v881 = vcvt.s32.f32 %v877
        %v882 = vcvt.s32.f32 %v878
        %v883 = vcvt.s32.f32 %v879
        %v884 = vcvt.s32.f32 %v880
        %v886 = vsel %vm556, %v881, 0
        %v889 = vsel %vm556, %v882, 0
        %v892 = vsel %vm556, %v883, 0
        %v895 = vsel %vm556, %v884, 0
        %897 = vmatprep.subr.mxu0 %v849
        %898 = vmatpush1.msra.mxu0 %v847
        %899 = vmatprep.subr.mxu0 %v855
        %900 = vmatpush1.msra.mxu0 %v853
        %901 = vmatprep.subr.mxu0 %v861
        %902 = vmatpush1.msra.mxu0 %v859
        %903 = vmatprep.subr.mxu0 %v867
        %904 = vmatpush1.msra.mxu0 %v865
        %905 = vmatprep.subr.mxu0 0.0
        %906 = vmatpush1.msra.mxu0 0.0
        %907 = vmatprep.subr.mxu0 0.0
        %908 = vmatpush1.msra.mxu0 0.0
        %909 = vmatprep.subr.mxu0 0.0
        %910 = vmatpush1.msra.mxu0 0.0
        %911 = vmatprep.subr.mxu0 0.0
        %912 = vmatpush1.msra.mxu0 0.0
        %913 = vmatprep.subr.mxu0 0.0
        %914 = vmatpush1.msra.mxu0 0.0
        %915 = vmatprep.subr.mxu0 0.0
        %916 = vmatpush1.msra.mxu0 0.0
        %917 = vmatprep.subr.mxu0 0.0
        %918 = vmatpush1.msra.mxu0 0.0
        %919 = vmatprep.subr.mxu0 0.0
        %920 = vmatpush1.msra.mxu0 0.0
        %921 = vmatprep.subr.mxu0 0.0
        %922 = vmatpush1.msra.mxu0 0.0
        %923 = vmatprep.subr.mxu0 0.0
        %924 = vmatpush1.msra.mxu0 0.0
        %925 = vmatprep.subr.mxu0 0.0
        %926 = vmatpush1.msra.mxu0 0.0
        %927 = vmatprep.subr.mxu0 0.0
        %928 = vmatpush1.msra.mxu0 0.0
        %929 = vmatprep.subr.mxu0 0.0
        %930 = vmatpush1.msra.mxu0 0.0
        %931 = vmatprep.subr.mxu0 0.0
        %932 = vmatpush1.msra.mxu0 0.0
        %933 = vmatprep.subr.mxu0 0.0
        %934 = vmatpush1.msra.mxu0 0.0
        %935 = vmatprep.subr.mxu0 0.0
        %936 = vmatpush1.msra.mxu0 0.0
        %937 = vmatprep.subr.mxu0 0.0
        %938 = vmatpush1.msra.mxu0 0.0
        %939 = vmatprep.subr.mxu0 0.0
        %940 = vmatpush1.msra.mxu0 0.0
        %941 = vmatprep.subr.mxu0 0.0
        %942 = vmatpush1.msra.mxu0 0.0
        %943 = vmatprep.subr.mxu0 0.0
        %944 = vmatpush1.msra.mxu0 0.0
        %945 = vmatprep.subr.mxu0 0.0
        %946 = vmatpush1.msra.mxu0 0.0
        %947 = vmatprep.subr.mxu0 0.0
        %948 = vmatpush1.msra.mxu0 0.0
        %949 = vmatprep.subr.mxu0 0.0
        %950 = vmatpush1.msra.mxu0 0.0
        %951 = vmatprep.subr.mxu0 0.0
        %952 = vmatpush1.msra.mxu0 0.0
        %953 = vmatprep.subr.mxu0 0.0
        %954 = vmatpush1.msra.mxu0 0.0
        %955 = vmatprep.subr.mxu0 0.0
        %956 = vmatpush1.msra.mxu0 0.0
        %957 = vmatprep.subr.mxu0 0.0
        %958 = vmatpush1.msra.mxu0 0.0
        %959 = vmatprep.subr.mxu0 0.0
        %960 = vmatpush1.msra.mxu0 0.0
        %961 = vmatprep.mubr.f32.mxu0 0.0
        %962 = vmatmul.mubr.f32.gmra.mrb[0].mxu0 %v886
        %v963 = vpop.f32.mrb[0].mxu0
        %v964 = vadd.f32 0.0, %v963
        %v965 = vpop.f32.mrb[0].mxu0
        %v966 = vadd.f32 0.0, %v965
        %967 = vmatprep.mubr.f32.mxu0 0.0
        %968 = vmatmul.mubr.f32.gmra.mrb[0].mxu0 %v889
        %v969 = vpop.f32.mrb[0].mxu0
        %v970 = vadd.f32 0.0, %v969
        %v971 = vpop.f32.mrb[0].mxu0
        %v972 = vadd.f32 0.0, %v971
        %973 = vmatprep.mubr.f32.mxu0 0.0
        %974 = vmatmul.mubr.f32.gmra.mrb[0].mxu0 %v892
        %v975 = vpop.f32.mrb[0].mxu0
        %v976 = vadd.f32 0.0, %v975
        %v977 = vpop.f32.mrb[0].mxu0
        %v978 = vadd.f32 0.0, %v977
        %979 = vmatprep.mubr.f32.mxu0 0.0
        %980 = vmatmul.mubr.f32.gmra.mrb[0].mxu0 %v895
        %v981 = vpop.f32.mrb[0].mxu0
        %v982 = vadd.f32 0.0, %v981
        %v983 = vpop.f32.mrb[0].mxu0
        %v984 = vadd.f32 0.0, %v983
        %985 = vdwg.mxu0
        %v986 = vadd.f32 %v725, %v964
        %v987 = vadd.f32 %v727, %v966
        %v988 = vadd.f32 %v731, %v970
        %v989 = vadd.f32 %v733, %v972
        %v990 = vadd.f32 %v737, %v976
        %v991 = vadd.f32 %v739, %v978
        %v992 = vadd.f32 %v743, %v982
        %v993 = vadd.f32 %v745, %v984
        %v994 = vld [vmem:[%s2] sm:$0x3]
        %v996 = vlaneseq
        %v997 = vshrl.u32 %v996, 7
        %v998 = vsub.s32 0, %v997
        %v999 = vrot.slane %v994, %v998
        %v1000 = vlaneseq
        %v1001 = vshrl.u32 %v1000, 7
        %v1002 = vsub.s32 1, %v1001
        %v1003 = vrot.slane %v994, %v1002
        %v1006 = vadd.f32 %v986, %v999
        %v1007 = vadd.f32 %v987, %v1003
        %v1008 = vadd.f32 %v988, %v999
        %v1009 = vadd.f32 %v989, %v1003
        %v1010 = vadd.f32 %v990, %v999
        %v1011 = vadd.f32 %v991, %v1003
        %v1012 = vadd.f32 %v992, %v999
        %v1013 = vadd.f32 %v993, %v1003
        %v1014 = vmax.f32 %v1006, 0.0
        %v1015 = vmax.f32 %v1007, 0.0
        %v1016 = vmax.f32 %v1008, 0.0
        %v1017 = vmax.f32 %v1009, 0.0
        %v1018 = vmax.f32 %v1010, 0.0
        %v1019 = vmax.f32 %v1011, 0.0
        %v1020 = vmax.f32 %v1012, 0.0
        %v1021 = vmax.f32 %v1013, 0.0
        %v1022 = vld [vmem:[#allocation2] sm:$0xff]
        %v1023 = vld [vmem:[#allocation2 + $0x8] sm:$0xff]
        %v1024 = vld [vmem:[#allocation2 + $0x10] sm:$0xff]
        %v1025 = vld [vmem:[#allocation2 + $0x18] sm:$0xff]
        %v1026 = vld [vmem:[#allocation2 + $0x20] sm:$0xff]
        %v1027 = vld [vmem:[#allocation2 + $0x28] sm:$0xff]
        %v1028 = vld [vmem:[#allocation2 + $0x30] sm:$0xff]
        %v1029 = vld [vmem:[#allocation2 + $0x38] sm:$0xff]
        %v1030 = vld [vmem:[#allocation2 + $0x40] sm:$0xff]
        %v1031 = vld [vmem:[#allocation2 + $0x48] sm:$0xff]
        %v1032 = vld [vmem:[#allocation2 + $0x50] sm:$0xff]
        %v1033 = vld [vmem:[#allocation2 + $0x58] sm:$0xff]
        %v1034 = vld [vmem:[#allocation2 + $0x60] sm:$0xff]
        %v1035 = vld [vmem:[#allocation2 + $0x68] sm:$0xff]
        %v1036 = vld [vmem:[#allocation2 + $0x70] sm:$0xff]
        %v1037 = vld [vmem:[#allocation2 + $0x78] sm:$0xff]
        %v1038 = vld [vmem:[#allocation2 + $0x80] sm:$0xff]
        %v1039 = vld [vmem:[#allocation2 + $0x88] sm:$0xff]
        %v1040 = vld [vmem:[#allocation2 + $0x90] sm:$0xff]
        %v1041 = vld [vmem:[#allocation2 + $0x98] sm:$0xff]
        %v1042 = vld [vmem:[#allocation2 + $0xa0] sm:$0xff]
        %v1043 = vld [vmem:[#allocation2 + $0xa8] sm:$0xff]
        %v1044 = vld [vmem:[#allocation2 + $0xb0] sm:$0xff]
        %v1045 = vld [vmem:[#allocation2 + $0xb8] sm:$0xff]
        %v1046 = vld [vmem:[#allocation2 + $0xc0] sm:$0xff]
        %v1047 = vld [vmem:[#allocation2 + $0xc8] sm:$0xff]
        %v1048 = vld [vmem:[#allocation2 + $0xd0] sm:$0xff]
        %v1049 = vld [vmem:[#allocation2 + $0xd8] sm:$0xff]
        %v1050 = vld [vmem:[#allocation2 + $0xe0] sm:$0xff]
        %v1051 = vld [vmem:[#allocation2 + $0xe8] sm:$0xff]
        %v1052 = vld [vmem:[#allocation2 + $0xf0] sm:$0xff]
        %v1053 = vld [vmem:[#allocation2 + $0xf8] sm:$0xff]
        %v1054 = vld [vmem:[#allocation2 + $0x100] sm:$0xff]
        %v1055 = vld [vmem:[#allocation2 + $0x108] sm:$0xff]
        %v1056 = vld [vmem:[#allocation2 + $0x110] sm:$0xff]
        %v1057 = vld [vmem:[#allocation2 + $0x118] sm:$0xff]
        %v1058 = vld [vmem:[#allocation2 + $0x120] sm:$0xff]
        %v1059 = vld [vmem:[#allocation2 + $0x128] sm:$0xff]
        %v1060 = vld [vmem:[#allocation2 + $0x130] sm:$0xff]
        %v1061 = vld [vmem:[#allocation2 + $0x138] sm:$0xff]
        %v1062 = vld [vmem:[#allocation2 + $0x140] sm:$0xff]
        %v1063 = vld [vmem:[#allocation2 + $0x148] sm:$0xff]
        %v1064 = vld [vmem:[#allocation2 + $0x150] sm:$0xff]
        %v1065 = vld [vmem:[#allocation2 + $0x158] sm:$0xff]
        %v1066 = vld [vmem:[#allocation2 + $0x160] sm:$0xff]
        %v1067 = vld [vmem:[#allocation2 + $0x168] sm:$0xff]
        %v1068 = vld [vmem:[#allocation2 + $0x170] sm:$0xff]
        %v1069 = vld [vmem:[#allocation2 + $0x178] sm:$0xff]
        %v1070 = vld [vmem:[#allocation2 + $0x180] sm:$0xff]
        %v1071 = vld [vmem:[#allocation2 + $0x188] sm:$0xff]
        %v1072 = vld [vmem:[#allocation2 + $0x190] sm:$0xff]
        %v1073 = vld [vmem:[#allocation2 + $0x198] sm:$0xff]
        %v1074 = vld [vmem:[#allocation2 + $0x1a0] sm:$0xff]
        %v1075 = vld [vmem:[#allocation2 + $0x1a8] sm:$0xff]
        %v1076 = vld [vmem:[#allocation2 + $0x1b0] sm:$0xff]
        %v1077 = vld [vmem:[#allocation2 + $0x1b8] sm:$0xff]
        %v1078 = vld [vmem:[#allocation2 + $0x1c0] sm:$0xff]
        %v1079 = vld [vmem:[#allocation2 + $0x1c8] sm:$0xff]
        %v1080 = vld [vmem:[#allocation2 + $0x1d0] sm:$0xff]
        %v1081 = vld [vmem:[#allocation2 + $0x1d8] sm:$0xff]
        %v1082 = vld [vmem:[#allocation2 + $0x1e0] sm:$0xff]
        %v1083 = vld [vmem:[#allocation2 + $0x1e8] sm:$0xff]
        %v1084 = vld [vmem:[#allocation2 + $0x1f0] sm:$0xff]
        %v1085 = vld [vmem:[#allocation2 + $0x1f8] sm:$0xff]
        %s1086 = scalar_lea.vmem [#allocation2], 512
        %v1087 = vld [vmem:[%s1086] sm:$0xff]
        %v1088 = vld [vmem:[%s1086 + $0x8] sm:$0xff]
        %v1089 = vld [vmem:[%s1086 + $0x10] sm:$0xff]
        %v1090 = vld [vmem:[%s1086 + $0x18] sm:$0xff]
        %v1091 = vld [vmem:[%s1086 + $0x20] sm:$0xff]
        %v1092 = vld [vmem:[%s1086 + $0x28] sm:$0xff]
        %v1093 = vld [vmem:[%s1086 + $0x30] sm:$0xff]
        %v1094 = vld [vmem:[%s1086 + $0x38] sm:$0xff]
        %v1095 = vld [vmem:[%s1086 + $0x40] sm:$0xff]
        %v1096 = vld [vmem:[%s1086 + $0x48] sm:$0xff]
        %v1097 = vld [vmem:[%s1086 + $0x50] sm:$0xff]
        %v1098 = vld [vmem:[%s1086 + $0x58] sm:$0xff]
        %v1099 = vld [vmem:[%s1086 + $0x60] sm:$0xff]
        %v1100 = vld [vmem:[%s1086 + $0x68] sm:$0xff]
        %v1101 = vld [vmem:[%s1086 + $0x70] sm:$0xff]
        %v1102 = vld [vmem:[%s1086 + $0x78] sm:$0xff]
        %v1103 = vld [vmem:[%s1086 + $0x80] sm:$0xff]
        %v1104 = vld [vmem:[%s1086 + $0x88] sm:$0xff]
        %v1105 = vld [vmem:[%s1086 + $0x90] sm:$0xff]
        %v1106 = vld [vmem:[%s1086 + $0x98] sm:$0xff]
        %v1107 = vld [vmem:[%s1086 + $0xa0] sm:$0xff]
        %v1108 = vld [vmem:[%s1086 + $0xa8] sm:$0xff]
        %v1109 = vld [vmem:[%s1086 + $0xb0] sm:$0xff]
        %v1110 = vld [vmem:[%s1086 + $0xb8] sm:$0xff]
        %v1111 = vld [vmem:[%s1086 + $0xc0] sm:$0xff]
        %v1112 = vld [vmem:[%s1086 + $0xc8] sm:$0xff]
        %v1113 = vld [vmem:[%s1086 + $0xd0] sm:$0xff]
        %v1114 = vld [vmem:[%s1086 + $0xd8] sm:$0xff]
        %v1115 = vld [vmem:[%s1086 + $0xe0] sm:$0xff]
        %v1116 = vld [vmem:[%s1086 + $0xe8] sm:$0xff]
        %v1117 = vld [vmem:[%s1086 + $0xf0] sm:$0xff]
        %v1118 = vld [vmem:[%s1086 + $0xf8] sm:$0xff]
        %v1119 = vld [vmem:[%s1086 + $0x100] sm:$0xff]
        %v1120 = vld [vmem:[%s1086 + $0x108] sm:$0xff]
        %v1121 = vld [vmem:[%s1086 + $0x110] sm:$0xff]
        %v1122 = vld [vmem:[%s1086 + $0x118] sm:$0xff]
        %v1123 = vld [vmem:[%s1086 + $0x120] sm:$0xff]
        %v1124 = vld [vmem:[%s1086 + $0x128] sm:$0xff]
        %v1125 = vld [vmem:[%s1086 + $0x130] sm:$0xff]
        %v1126 = vld [vmem:[%s1086 + $0x138] sm:$0xff]
        %v1127 = vld [vmem:[%s1086 + $0x140] sm:$0xff]
        %v1128 = vld [vmem:[%s1086 + $0x148] sm:$0xff]
        %v1129 = vld [vmem:[%s1086 + $0x150] sm:$0xff]
        %v1130 = vld [vmem:[%s1086 + $0x158] sm:$0xff]
        %v1131 = vld [vmem:[%s1086 + $0x160] sm:$0xff]
        %v1132 = vld [vmem:[%s1086 + $0x168] sm:$0xff]
        %v1133 = vld [vmem:[%s1086 + $0x170] sm:$0xff]
        %v1134 = vld [vmem:[%s1086 + $0x178] sm:$0xff]
        %v1135 = vld [vmem:[%s1086 + $0x180] sm:$0xff]
        %v1136 = vld [vmem:[%s1086 + $0x188] sm:$0xff]
        %v1137 = vld [vmem:[%s1086 + $0x190] sm:$0xff]
        %v1138 = vld [vmem:[%s1086 + $0x198] sm:$0xff]
        %v1139 = vld [vmem:[%s1086 + $0x1a0] sm:$0xff]
        %v1140 = vld [vmem:[%s1086 + $0x1a8] sm:$0xff]
        %v1141 = vld [vmem:[%s1086 + $0x1b0] sm:$0xff]
        %v1142 = vld [vmem:[%s1086 + $0x1b8] sm:$0xff]
        %v1143 = vld [vmem:[%s1086 + $0x1c0] sm:$0xff]
        %v1144 = vld [vmem:[%s1086 + $0x1c8] sm:$0xff]
        %v1145 = vld [vmem:[%s1086 + $0x1d0] sm:$0xff]
        %v1146 = vld [vmem:[%s1086 + $0x1d8] sm:$0xff]
        %v1147 = vld [vmem:[%s1086 + $0x1e0] sm:$0xff]
        %v1148 = vld [vmem:[%s1086 + $0x1e8] sm:$0xff]
        %v1149 = vld [vmem:[%s1086 + $0x1f0] sm:$0xff]
        %v1150 = vld [vmem:[%s1086 + $0x1f8] sm:$0xff]
        %1151 = vmatprep.subr.mxu0 %v1088
        %1152 = vmatpush1.msra.mxu0 %v1087
        %1153 = vmatprep.subr.mxu0 %v1090
        %1154 = vmatpush1.msra.mxu0 %v1089
        %1155 = vmatprep.subr.mxu0 %v1092
        %1156 = vmatpush1.msra.mxu0 %v1091
        %1157 = vmatprep.subr.mxu0 %v1094
        %1158 = vmatpush1.msra.mxu0 %v1093
        %1159 = vmatprep.subr.mxu0 %v1096
        %1160 = vmatpush1.msra.mxu0 %v1095
        %1161 = vmatprep.subr.mxu0 %v1098
        %1162 = vmatpush1.msra.mxu0 %v1097
        %1163 = vmatprep.subr.mxu0 %v1100
        %1164 = vmatpush1.msra.mxu0 %v1099
        %1165 = vmatprep.subr.mxu0 %v1102
        %1166 = vmatpush1.msra.mxu0 %v1101
        %1167 = vmatprep.subr.mxu0 %v1104
        %1168 = vmatpush1.msra.mxu0 %v1103
        %1169 = vmatprep.subr.mxu0 %v1106
        %1170 = vmatpush1.msra.mxu0 %v1105
        %1171 = vmatprep.subr.mxu0 %v1108
        %1172 = vmatpush1.msra.mxu0 %v1107
        %1173 = vmatprep.subr.mxu0 %v1110
        %1174 = vmatpush1.msra.mxu0 %v1109
        %1175 = vmatprep.subr.mxu0 %v1112
        %1176 = vmatpush1.msra.mxu0 %v1111
        %1177 = vmatprep.subr.mxu0 %v1114
        %1178 = vmatpush1.msra.mxu0 %v1113
        %1179 = vmatprep.subr.mxu0 %v1116
        %1180 = vmatpush1.msra.mxu0 %v1115
        %1181 = vmatprep.subr.mxu0 %v1118
        %1182 = vmatpush1.msra.mxu0 %v1117
        %1183 = vmatprep.subr.mxu0 %v1120
        %1184 = vmatpush1.msra.mxu0 %v1119
        %1185 = vmatprep.subr.mxu0 %v1122
        %1186 = vmatpush1.msra.mxu0 %v1121
        %1187 = vmatprep.subr.mxu0 %v1124
        %1188 = vmatpush1.msra.mxu0 %v1123
        %1189 = vmatprep.subr.mxu0 %v1126
        %1190 = vmatpush1.msra.mxu0 %v1125
        %1191 = vmatprep.subr.mxu0 %v1128
        %1192 = vmatpush1.msra.mxu0 %v1127
        %1193 = vmatprep.subr.mxu0 %v1130
        %1194 = vmatpush1.msra.mxu0 %v1129
        %1195 = vmatprep.subr.mxu0 %v1132
        %1196 = vmatpush1.msra.mxu0 %v1131
        %1197 = vmatprep.subr.mxu0 %v1134
        %1198 = vmatpush1.msra.mxu0 %v1133
        %1199 = vmatprep.subr.mxu0 %v1136
        %1200 = vmatpush1.msra.mxu0 %v1135
        %1201 = vmatprep.subr.mxu0 %v1138
        %1202 = vmatpush1.msra.mxu0 %v1137
        %1203 = vmatprep.subr.mxu0 %v1140
        %1204 = vmatpush1.msra.mxu0 %v1139
        %1205 = vmatprep.subr.mxu0 %v1142
        %1206 = vmatpush1.msra.mxu0 %v1141
        %1207 = vmatprep.subr.mxu0 %v1144
        %1208 = vmatpush1.msra.mxu0 %v1143
        %1209 = vmatprep.subr.mxu0 %v1146
        %1210 = vmatpush1.msra.mxu0 %v1145
        %1211 = vmatprep.subr.mxu0 %v1148
        %1212 = vmatpush1.msra.mxu0 %v1147
        %1213 = vmatprep.subr.mxu0 %v1150
        %1214 = vmatpush1.msra.mxu0 %v1149
        %1215 = vmatprep.mubr.f32.mxu0 %v1015
        %1216 = vmatmul.mubr.f32.gmra.mrb[0].mxu0 %v1014
        %v1217 = vpop.f32.mrb[0].mxu0
        %v1218 = vadd.f32 0.0, %v1217
        %v1219 = vpop.f32.mrb[0].mxu0
        %v1220 = vadd.f32 0.0, %v1219
        %1221 = vmatprep.mubr.f32.mxu0 %v1017
        %1222 = vmatmul.mubr.f32.gmra.mrb[0].mxu0 %v1016
        %v1223 = vpop.f32.mrb[0].mxu0
        %v1224 = vadd.f32 0.0, %v1223
        %v1225 = vpop.f32.mrb[0].mxu0
        %v1226 = vadd.f32 0.0, %v1225
        %1227 = vmatprep.mubr.f32.mxu0 %v1019
        %1228 = vmatmul.mubr.f32.gmra.mrb[0].mxu0 %v1018
        %v1229 = vpop.f32.mrb[0].mxu0
        %v1230 = vadd.f32 0.0, %v1229
        %v1231 = vpop.f32.mrb[0].mxu0
        %v1232 = vadd.f32 0.0, %v1231
        %1233 = vmatprep.mubr.f32.mxu0 %v1021
        %1234 = vmatmul.mubr.f32.gmra.mrb[0].mxu0 %v1020
        %v1235 = vpop.f32.mrb[0].mxu0
        %v1236 = vadd.f32 0.0, %v1235
        %v1237 = vpop.f32.mrb[0].mxu0
        %v1238 = vadd.f32 0.0, %v1237
        %1239 = vdwg.mxu0
        %1240 = vmatprep.subr.mxu0 %v1220
        %1241 = vmatpush1.msra.mxu0 %v1218
        %1242 = vmatprep.subr.mxu0 %v1226
        %1243 = vmatpush1.msra.mxu0 %v1224
        %1244 = vmatprep.subr.mxu0 %v1232
        %1245 = vmatpush1.msra.mxu0 %v1230
        %1246 = vmatprep.subr.mxu0 %v1238
        %1247 = vmatpush1.msra.mxu0 %v1236
        %1248 = vmatprep.subr.mxu0 0.0
        %1249 = vmatpush1.msra.mxu0 0.0
        %1250 = vmatprep.subr.mxu0 0.0
        %1251 = vmatpush1.msra.mxu0 0.0
        %1252 = vmatprep.subr.mxu0 0.0
        %1253 = vmatpush1.msra.mxu0 0.0
        %1254 = vmatprep.subr.mxu0 0.0
        %1255 = vmatpush1.msra.mxu0 0.0
        %1256 = vmatprep.subr.mxu0 0.0
        %1257 = vmatpush1.msra.mxu0 0.0
        %1258 = vmatprep.subr.mxu0 0.0
        %1259 = vmatpush1.msra.mxu0 0.0
        %1260 = vmatprep.subr.mxu0 0.0
        %1261 = vmatpush1.msra.mxu0 0.0
        %1262 = vmatprep.subr.mxu0 0.0
        %1263 = vmatpush1.msra.mxu0 0.0
        %1264 = vmatprep.subr.mxu0 0.0
        %1265 = vmatpush1.msra.mxu0 0.0
        %1266 = vmatprep.subr.mxu0 0.0
        %1267 = vmatpush1.msra.mxu0 0.0
        %1268 = vmatprep.subr.mxu0 0.0
        %1269 = vmatpush1.msra.mxu0 0.0
        %1270 = vmatprep.subr.mxu0 0.0
        %1271 = vmatpush1.msra.mxu0 0.0
        %1272 = vmatprep.subr.mxu0 0.0
        %1273 = vmatpush1.msra.mxu0 0.0
        %1274 = vmatprep.subr.mxu0 0.0
        %1275 = vmatpush1.msra.mxu0 0.0
        %1276 = vmatprep.subr.mxu0 0.0
        %1277 = vmatpush1.msra.mxu0 0.0
        %1278 = vmatprep.subr.mxu0 0.0
        %1279 = vmatpush1.msra.mxu0 0.0
        %1280 = vmatprep.subr.mxu0 0.0
        %1281 = vmatpush1.msra.mxu0 0.0
        %1282 = vmatprep.subr.mxu0 0.0
        %1283 = vmatpush1.msra.mxu0 0.0
        %1284 = vmatprep.subr.mxu0 0.0
        %1285 = vmatpush1.msra.mxu0 0.0
        %1286 = vmatprep.subr.mxu0 0.0
        %1287 = vmatpush1.msra.mxu0 0.0
        %1288 = vmatprep.subr.mxu0 0.0
        %1289 = vmatpush1.msra.mxu0 0.0
        %1290 = vmatprep.subr.mxu0 0.0
        %1291 = vmatpush1.msra.mxu0 0.0
        %1292 = vmatprep.subr.mxu0 0.0
        %1293 = vmatpush1.msra.mxu0 0.0
        %1294 = vmatprep.subr.mxu0 0.0
        %1295 = vmatpush1.msra.mxu0 0.0
        %1296 = vmatprep.subr.mxu0 0.0
        %1297 = vmatpush1.msra.mxu0 0.0
        %1298 = vmatprep.subr.mxu0 0.0
        %1299 = vmatpush1.msra.mxu0 0.0
        %1300 = vmatprep.subr.mxu0 0.0
        %1301 = vmatpush1.msra.mxu0 0.0
        %1302 = vmatprep.subr.mxu0 0.0
        %1303 = vmatpush1.msra.mxu0 0.0
        %1304 = vmatprep.mubr.f32.mxu0 0.0
        %1305 = vmatmul.mubr.f32.gmra.mrb[0].mxu0 %v886
        %v1306 = vpop.f32.mrb[0].mxu0
        %v1307 = vadd.f32 0.0, %v1306
        %v1308 = vpop.f32.mrb[0].mxu0
        %v1309 = vadd.f32 0.0, %v1308
        %1310 = vmatprep.mubr.f32.mxu0 0.0
        %1311 = vmatmul.mubr.f32.gmra.mrb[0].mxu0 %v889
        %v1312 = vpop.f32.mrb[0].mxu0
        %v1313 = vadd.f32 0.0, %v1312
        %v1314 = vpop.f32.mrb[0].mxu0
        %v1315 = vadd.f32 0.0, %v1314
        %1316 = vmatprep.mubr.f32.mxu0 0.0
        %1317 = vmatmul.mubr.f32.gmra.mrb[0].mxu0 %v892
        %v1318 = vpop.f32.mrb[0].mxu0
        %v1319 = vadd.f32 0.0, %v1318
        %v1320 = vpop.f32.mrb[0].mxu0
        %v1321 = vadd.f32 0.0, %v1320
        %1322 = vmatprep.mubr.f32.mxu0 0.0
        %1323 = vmatmul.mubr.f32.gmra.mrb[0].mxu0 %v895
        %v1324 = vpop.f32.mrb[0].mxu0
        %v1325 = vadd.f32 0.0, %v1324
        %v1326 = vpop.f32.mrb[0].mxu0
        %v1327 = vadd.f32 0.0, %v1326
        %1328 = vdwg.mxu0
        %1329 = vmatprep.subr.mxu0 %v1023
        %1330 = vmatpush1.msra.mxu0 %v1022
        %1331 = vmatprep.subr.mxu0 %v1025
        %1332 = vmatpush1.msra.mxu0 %v1024
        %1333 = vmatprep.subr.mxu0 %v1027
        %1334 = vmatpush1.msra.mxu0 %v1026
        %1335 = vmatprep.subr.mxu0 %v1029
        %1336 = vmatpush1.msra.mxu0 %v1028
        %1337 = vmatprep.subr.mxu0 %v1031
        %1338 = vmatpush1.msra.mxu0 %v1030
        %1339 = vmatprep.subr.mxu0 %v1033
        %1340 = vmatpush1.msra.mxu0 %v1032
        %1341 = vmatprep.subr.mxu0 %v1035
        %1342 = vmatpush1.msra.mxu0 %v1034
        %1343 = vmatprep.subr.mxu0 %v1037
        %1344 = vmatpush1.msra.mxu0 %v1036
        %1345 = vmatprep.subr.mxu0 %v1039
        %1346 = vmatpush1.msra.mxu0 %v1038
        %1347 = vmatprep.subr.mxu0 %v1041
        %1348 = vmatpush1.msra.mxu0 %v1040
        %1349 = vmatprep.subr.mxu0 %v1043
        %1350 = vmatpush1.msra.mxu0 %v1042
        %1351 = vmatprep.subr.mxu0 %v1045
        %1352 = vmatpush1.msra.mxu0 %v1044
        %1353 = vmatprep.subr.mxu0 %v1047
        %1354 = vmatpush1.msra.mxu0 %v1046
        %1355 = vmatprep.subr.mxu0 %v1049
        %1356 = vmatpush1.msra.mxu0 %v1048
        %1357 = vmatprep.subr.mxu0 %v1051
        %1358 = vmatpush1.msra.mxu0 %v1050
        %1359 = vmatprep.subr.mxu0 %v1053
        %1360 = vmatpush1.msra.mxu0 %v1052
        %1361 = vmatprep.subr.mxu0 %v1055
        %1362 = vmatpush1.msra.mxu0 %v1054
        %1363 = vmatprep.subr.mxu0 %v1057
        %1364 = vmatpush1.msra.mxu0 %v1056
        %1365 = vmatprep.subr.mxu0 %v1059
        %1366 = vmatpush1.msra.mxu0 %v1058
        %1367 = vmatprep.subr.mxu0 %v1061
        %1368 = vmatpush1.msra.mxu0 %v1060
        %1369 = vmatprep.subr.mxu0 %v1063
        %1370 = vmatpush1.msra.mxu0 %v1062
        %1371 = vmatprep.subr.mxu0 %v1065
        %1372 = vmatpush1.msra.mxu0 %v1064
        %1373 = vmatprep.subr.mxu0 %v1067
        %1374 = vmatpush1.msra.mxu0 %v1066
        %1375 = vmatprep.subr.mxu0 %v1069
        %1376 = vmatpush1.msra.mxu0 %v1068
        %1377 = vmatprep.subr.mxu0 %v1071
        %1378 = vmatpush1.msra.mxu0 %v1070
        %1379 = vmatprep.subr.mxu0 %v1073
        %1380 = vmatpush1.msra.mxu0 %v1072
        %1381 = vmatprep.subr.mxu0 %v1075
        %1382 = vmatpush1.msra.mxu0 %v1074
        %1383 = vmatprep.subr.mxu0 %v1077
        %1384 = vmatpush1.msra.mxu0 %v1076
        %1385 = vmatprep.subr.mxu0 %v1079
        %1386 = vmatpush1.msra.mxu0 %v1078
        %1387 = vmatprep.subr.mxu0 %v1081
        %1388 = vmatpush1.msra.mxu0 %v1080
        %1389 = vmatprep.subr.mxu0 %v1083
        %1390 = vmatpush1.msra.mxu0 %v1082
        %1391 = vmatprep.subr.mxu0 %v1085
        %1392 = vmatpush1.msra.mxu0 %v1084
        %1393 = vmatprep.mubr.f32.mxu0 %v1015
        %1394 = vmatmul.mubr.f32.gmra.mrb[0].mxu0 %v1014
        %v1395 = vpop.f32.mrb[0].mxu0
        %v1396 = vadd.f32 %v1307, %v1395
        %v1397 = vpop.f32.mrb[0].mxu0
        %v1398 = vadd.f32 %v1309, %v1397
        %1399 = vmatprep.mubr.f32.mxu0 %v1017
        %1400 = vmatmul.mubr.f32.gmra.mrb[0].mxu0 %v1016
        %v1401 = vpop.f32.mrb[0].mxu0
        %v1402 = vadd.f32 %v1313, %v1401
        %v1403 = vpop.f32.mrb[0].mxu0
        %v1404 = vadd.f32 %v1315, %v1403
        %1405 = vmatprep.mubr.f32.mxu0 %v1019
        %1406 = vmatmul.mubr.f32.gmra.mrb[0].mxu0 %v1018
        %v1407 = vpop.f32.mrb[0].mxu0
        %v1408 = vadd.f32 %v1319, %v1407
        %v1409 = vpop.f32.mrb[0].mxu0
        %v1410 = vadd.f32 %v1321, %v1409
        %1411 = vmatprep.mubr.f32.mxu0 %v1021
        %1412 = vmatmul.mubr.f32.gmra.mrb[0].mxu0 %v1020
        %v1413 = vpop.f32.mrb[0].mxu0
        %v1414 = vadd.f32 %v1325, %v1413
        %v1415 = vpop.f32.mrb[0].mxu0
        %v1416 = vadd.f32 %v1327, %v1415
        %1417 = vdwg.mxu0
        %s1418 = scalar_lea.vmem [#allocation2], 1024
        %v1419 = vld [vmem:[%s1418] sm:$0xff]
        %v1420 = vld [vmem:[%s1418 + $0x8] sm:$0xff]
        %v1421 = vld [vmem:[%s1418 + $0x10] sm:$0xff]
        %v1422 = vld [vmem:[%s1418 + $0x18] sm:$0xff]
        %v1423 = vld [vmem:[%s1418 + $0x20] sm:$0xff]
        %v1424 = vld [vmem:[%s1418 + $0x28] sm:$0xff]
        %v1425 = vld [vmem:[%s1418 + $0x30] sm:$0xff]
        %v1426 = vld [vmem:[%s1418 + $0x38] sm:$0xff]
        %v1427 = vld [vmem:[%s1418 + $0x40] sm:$0xff]
        %v1428 = vld [vmem:[%s1418 + $0x48] sm:$0xff]
        %v1429 = vld [vmem:[%s1418 + $0x50] sm:$0xff]
        %v1430 = vld [vmem:[%s1418 + $0x58] sm:$0xff]
        %v1431 = vld [vmem:[%s1418 + $0x60] sm:$0xff]
        %v1432 = vld [vmem:[%s1418 + $0x68] sm:$0xff]
        %v1433 = vld [vmem:[%s1418 + $0x70] sm:$0xff]
        %v1434 = vld [vmem:[%s1418 + $0x78] sm:$0xff]
        %v1435 = vld [vmem:[%s1418 + $0x80] sm:$0xff]
        %v1436 = vld [vmem:[%s1418 + $0x88] sm:$0xff]
        %v1437 = vld [vmem:[%s1418 + $0x90] sm:$0xff]
        %v1438 = vld [vmem:[%s1418 + $0x98] sm:$0xff]
        %v1439 = vld [vmem:[%s1418 + $0xa0] sm:$0xff]
        %v1440 = vld [vmem:[%s1418 + $0xa8] sm:$0xff]
        %v1441 = vld [vmem:[%s1418 + $0xb0] sm:$0xff]
        %v1442 = vld [vmem:[%s1418 + $0xb8] sm:$0xff]
        %v1443 = vld [vmem:[%s1418 + $0xc0] sm:$0xff]
        %v1444 = vld [vmem:[%s1418 + $0xc8] sm:$0xff]
        %v1445 = vld [vmem:[%s1418 + $0xd0] sm:$0xff]
        %v1446 = vld [vmem:[%s1418 + $0xd8] sm:$0xff]
        %v1447 = vld [vmem:[%s1418 + $0xe0] sm:$0xff]
        %v1448 = vld [vmem:[%s1418 + $0xe8] sm:$0xff]
        %v1449 = vld [vmem:[%s1418 + $0xf0] sm:$0xff]
        %v1450 = vld [vmem:[%s1418 + $0xf8] sm:$0xff]
        %v1451 = vld [vmem:[%s1418 + $0x100] sm:$0xff]
        %v1452 = vld [vmem:[%s1418 + $0x108] sm:$0xff]
        %v1453 = vld [vmem:[%s1418 + $0x110] sm:$0xff]
        %v1454 = vld [vmem:[%s1418 + $0x118] sm:$0xff]
        %v1455 = vld [vmem:[%s1418 + $0x120] sm:$0xff]
        %v1456 = vld [vmem:[%s1418 + $0x128] sm:$0xff]
        %v1457 = vld [vmem:[%s1418 + $0x130] sm:$0xff]
        %v1458 = vld [vmem:[%s1418 + $0x138] sm:$0xff]
        %v1459 = vld [vmem:[%s1418 + $0x140] sm:$0xff]
        %v1460 = vld [vmem:[%s1418 + $0x148] sm:$0xff]
        %v1461 = vld [vmem:[%s1418 + $0x150] sm:$0xff]
        %v1462 = vld [vmem:[%s1418 + $0x158] sm:$0xff]
        %v1463 = vld [vmem:[%s1418 + $0x160] sm:$0xff]
        %v1464 = vld [vmem:[%s1418 + $0x168] sm:$0xff]
        %v1465 = vld [vmem:[%s1418 + $0x170] sm:$0xff]
        %v1466 = vld [vmem:[%s1418 + $0x178] sm:$0xff]
        %v1467 = vld [vmem:[%s1418 + $0x180] sm:$0xff]
        %v1468 = vld [vmem:[%s1418 + $0x188] sm:$0xff]
        %v1469 = vld [vmem:[%s1418 + $0x190] sm:$0xff]
        %v1470 = vld [vmem:[%s1418 + $0x198] sm:$0xff]
        %v1471 = vld [vmem:[%s1418 + $0x1a0] sm:$0xff]
        %v1472 = vld [vmem:[%s1418 + $0x1a8] sm:$0xff]
        %v1473 = vld [vmem:[%s1418 + $0x1b0] sm:$0xff]
        %v1474 = vld [vmem:[%s1418 + $0x1b8] sm:$0xff]
        %v1475 = vld [vmem:[%s1418 + $0x1c0] sm:$0xff]
        %v1476 = vld [vmem:[%s1418 + $0x1c8] sm:$0xff]
        %v1477 = vld [vmem:[%s1418 + $0x1d0] sm:$0xff]
        %v1478 = vld [vmem:[%s1418 + $0x1d8] sm:$0xff]
        %v1479 = vld [vmem:[%s1418 + $0x1e0] sm:$0xff]
        %v1480 = vld [vmem:[%s1418 + $0x1e8] sm:$0xff]
        %v1481 = vld [vmem:[%s1418 + $0x1f0] sm:$0xff]
        %v1482 = vld [vmem:[%s1418 + $0x1f8] sm:$0xff]
        %1483 = vmatprep.subr.mxu0 %v1420
        %1484 = vmatpush1.msra.mxu0 %v1419
        %1485 = vmatprep.subr.mxu0 %v1422
        %1486 = vmatpush1.msra.mxu0 %v1421
        %1487 = vmatprep.subr.mxu0 %v1424
        %1488 = vmatpush1.msra.mxu0 %v1423
        %1489 = vmatprep.subr.mxu0 %v1426
        %1490 = vmatpush1.msra.mxu0 %v1425
        %1491 = vmatprep.subr.mxu0 %v1428
        %1492 = vmatpush1.msra.mxu0 %v1427
        %1493 = vmatprep.subr.mxu0 %v1430
        %1494 = vmatpush1.msra.mxu0 %v1429
        %1495 = vmatprep.subr.mxu0 %v1432
        %1496 = vmatpush1.msra.mxu0 %v1431
        %1497 = vmatprep.subr.mxu0 %v1434
        %1498 = vmatpush1.msra.mxu0 %v1433
        %1499 = vmatprep.subr.mxu0 %v1436
        %1500 = vmatpush1.msra.mxu0 %v1435
        %1501 = vmatprep.subr.mxu0 %v1438
        %1502 = vmatpush1.msra.mxu0 %v1437
        %1503 = vmatprep.subr.mxu0 %v1440
        %1504 = vmatpush1.msra.mxu0 %v1439
        %1505 = vmatprep.subr.mxu0 %v1442
        %1506 = vmatpush1.msra.mxu0 %v1441
        %1507 = vmatprep.subr.mxu0 %v1444
        %1508 = vmatpush1.msra.mxu0 %v1443
        %1509 = vmatprep.subr.mxu0 %v1446
        %1510 = vmatpush1.msra.mxu0 %v1445
        %1511 = vmatprep.subr.mxu0 %v1448
        %1512 = vmatpush1.msra.mxu0 %v1447
        %1513 = vmatprep.subr.mxu0 %v1450
        %1514 = vmatpush1.msra.mxu0 %v1449
        %1515 = vmatprep.subr.mxu0 %v1452
        %1516 = vmatpush1.msra.mxu0 %v1451
        %1517 = vmatprep.subr.mxu0 %v1454
        %1518 = vmatpush1.msra.mxu0 %v1453
        %1519 = vmatprep.subr.mxu0 %v1456
        %1520 = vmatpush1.msra.mxu0 %v1455
        %1521 = vmatprep.subr.mxu0 %v1458
        %1522 = vmatpush1.msra.mxu0 %v1457
        %1523 = vmatprep.subr.mxu0 %v1460
        %1524 = vmatpush1.msra.mxu0 %v1459
        %1525 = vmatprep.subr.mxu0 %v1462
        %1526 = vmatpush1.msra.mxu0 %v1461
        %1527 = vmatprep.subr.mxu0 %v1464
        %1528 = vmatpush1.msra.mxu0 %v1463
        %1529 = vmatprep.subr.mxu0 %v1466
        %1530 = vmatpush1.msra.mxu0 %v1465
        %1531 = vmatprep.subr.mxu0 %v1468
        %1532 = vmatpush1.msra.mxu0 %v1467
        %1533 = vmatprep.subr.mxu0 %v1470
        %1534 = vmatpush1.msra.mxu0 %v1469
        %1535 = vmatprep.subr.mxu0 %v1472
        %1536 = vmatpush1.msra.mxu0 %v1471
        %1537 = vmatprep.subr.mxu0 %v1474
        %1538 = vmatpush1.msra.mxu0 %v1473
        %1539 = vmatprep.subr.mxu0 %v1476
        %1540 = vmatpush1.msra.mxu0 %v1475
        %1541 = vmatprep.subr.mxu0 %v1478
        %1542 = vmatpush1.msra.mxu0 %v1477
        %1543 = vmatprep.subr.mxu0 %v1480
        %1544 = vmatpush1.msra.mxu0 %v1479
        %1545 = vmatprep.subr.mxu0 %v1482
        %1546 = vmatpush1.msra.mxu0 %v1481
        %1547 = vmatprep.mubr.f32.mxu0 %v1015
        %1548 = vmatmul.mubr.f32.gmra.mrb[0].mxu0 %v1014
        %v1549 = vpop.f32.mrb[0].mxu0
        %v1550 = vadd.f32 0.0, %v1549
        %v1551 = vpop.f32.mrb[0].mxu0
        %v1552 = vadd.f32 0.0, %v1551
        %1553 = vmatprep.mubr.f32.mxu0 %v1017
        %1554 = vmatmul.mubr.f32.gmra.mrb[0].mxu0 %v1016
        %v1555 = vpop.f32.mrb[0].mxu0
        %v1556 = vadd.f32 0.0, %v1555
        %v1557 = vpop.f32.mrb[0].mxu0
        %v1558 = vadd.f32 0.0, %v1557
        %1559 = vmatprep.mubr.f32.mxu0 %v1019
        %1560 = vmatmul.mubr.f32.gmra.mrb[0].mxu0 %v1018
        %v1561 = vpop.f32.mrb[0].mxu0
        %v1562 = vadd.f32 0.0, %v1561
        %v1563 = vpop.f32.mrb[0].mxu0
        %v1564 = vadd.f32 0.0, %v1563
        %1565 = vmatprep.mubr.f32.mxu0 %v1021
        %1566 = vmatmul.mubr.f32.gmra.mrb[0].mxu0 %v1020
        %v1567 = vpop.f32.mrb[0].mxu0
        %v1568 = vadd.f32 0.0, %v1567
        %v1569 = vpop.f32.mrb[0].mxu0
        %v1570 = vadd.f32 0.0, %v1569
        %1571 = vdwg.mxu0
        %v1572 = vadd.s32 %v534, 4
        %v1573 = vadd.s32 %v535, 4
        %v1574 = vadd.s32 %v536, 4
        %v1575 = vadd.s32 %v537, 4
        %vm1576 = vcmp.eq.s32.totalorder %v539, %v1572
        %vm1577 = vcmp.eq.s32.totalorder %v539, %v1573
        %vm1578 = vcmp.eq.s32.totalorder %v539, %v1574
        %vm1579 = vcmp.eq.s32.totalorder %v539, %v1575
        %v1580 = vsel %vm1576, 1, 0
        %v1581 = vsel %vm1577, 1, 0
        %v1582 = vsel %vm1578, 1, 0
        %v1583 = vsel %vm1579, 1, 0
        %v1584 = vcvt.s32.f32 %v1580
        %v1585 = vcvt.s32.f32 %v1581
        %v1586 = vcvt.s32.f32 %v1582
        %v1587 = vcvt.s32.f32 %v1583
        %v1589 = vsel %vm556, %v1584, 0
        %v1592 = vsel %vm556, %v1585, 0
        %v1595 = vsel %vm556, %v1586, 0
        %v1598 = vsel %vm556, %v1587, 0
        %1600 = vmatprep.subr.mxu0 %v1552
        %1601 = vmatpush1.msra.mxu0 %v1550
        %1602 = vmatprep.subr.mxu0 %v1558
        %1603 = vmatpush1.msra.mxu0 %v1556
        %1604 = vmatprep.subr.mxu0 %v1564
        %1605 = vmatpush1.msra.mxu0 %v1562
        %1606 = vmatprep.subr.mxu0 %v1570
        %1607 = vmatpush1.msra.mxu0 %v1568
        %1608 = vmatprep.subr.mxu0 0.0
        %1609 = vmatpush1.msra.mxu0 0.0
        %1610 = vmatprep.subr.mxu0 0.0
        %1611 = vmatpush1.msra.mxu0 0.0
        %1612 = vmatprep.subr.mxu0 0.0
        %1613 = vmatpush1.msra.mxu0 0.0
        %1614 = vmatprep.subr.mxu0 0.0
        %1615 = vmatpush1.msra.mxu0 0.0
        %1616 = vmatprep.subr.mxu0 0.0
        %1617 = vmatpush1.msra.mxu0 0.0
        %1618 = vmatprep.subr.mxu0 0.0
        %1619 = vmatpush1.msra.mxu0 0.0
        %1620 = vmatprep.subr.mxu0 0.0
        %1621 = vmatpush1.msra.mxu0 0.0
        %1622 = vmatprep.subr.mxu0 0.0
        %1623 = vmatpush1.msra.mxu0 0.0
        %1624 = vmatprep.subr.mxu0 0.0
        %1625 = vmatpush1.msra.mxu0 0.0
        %1626 = vmatprep.subr.mxu0 0.0
        %1627 = vmatpush1.msra.mxu0 0.0
        %1628 = vmatprep.subr.mxu0 0.0
        %1629 = vmatpush1.msra.mxu0 0.0
        %1630 = vmatprep.subr.mxu0 0.0
        %1631 = vmatpush1.msra.mxu0 0.0
        %1632 = vmatprep.subr.mxu0 0.0
        %1633 = vmatpush1.msra.mxu0 0.0
        %1634 = vmatprep.subr.mxu0 0.0
        %1635 = vmatpush1.msra.mxu0 0.0
        %1636 = vmatprep.subr.mxu0 0.0
        %1637 = vmatpush1.msra.mxu0 0.0
        %1638 = vmatprep.subr.mxu0 0.0
        %1639 = vmatpush1.msra.mxu0 0.0
        %1640 = vmatprep.subr.mxu0 0.0
        %1641 = vmatpush1.msra.mxu0 0.0
        %1642 = vmatprep.subr.mxu0 0.0
        %1643 = vmatpush1.msra.mxu0 0.0
        %1644 = vmatprep.subr.mxu0 0.0
        %1645 = vmatpush1.msra.mxu0 0.0
        %1646 = vmatprep.subr.mxu0 0.0
        %1647 = vmatpush1.msra.mxu0 0.0
        %1648 = vmatprep.subr.mxu0 0.0
        %1649 = vmatpush1.msra.mxu0 0.0
        %1650 = vmatprep.subr.mxu0 0.0
        %1651 = vmatpush1.msra.mxu0 0.0
        %1652 = vmatprep.subr.mxu0 0.0
        %1653 = vmatpush1.msra.mxu0 0.0
        %1654 = vmatprep.subr.mxu0 0.0
        %1655 = vmatpush1.msra.mxu0 0.0
        %1656 = vmatprep.subr.mxu0 0.0
        %1657 = vmatpush1.msra.mxu0 0.0
        %1658 = vmatprep.subr.mxu0 0.0
        %1659 = vmatpush1.msra.mxu0 0.0
        %1660 = vmatprep.subr.mxu0 0.0
        %1661 = vmatpush1.msra.mxu0 0.0
        %1662 = vmatprep.subr.mxu0 0.0
        %1663 = vmatpush1.msra.mxu0 0.0
        %1664 = vmatprep.mubr.f32.mxu0 0.0
        %1665 = vmatmul.mubr.f32.gmra.mrb[0].mxu0 %v1589
        %v1666 = vpop.f32.mrb[0].mxu0
        %v1667 = vadd.f32 0.0, %v1666
        %v1668 = vpop.f32.mrb[0].mxu0
        %v1669 = vadd.f32 0.0, %v1668
        %1670 = vmatprep.mubr.f32.mxu0 0.0
        %1671 = vmatmul.mubr.f32.gmra.mrb[0].mxu0 %v1592
        %v1672 = vpop.f32.mrb[0].mxu0
        %v1673 = vadd.f32 0.0, %v1672
        %v1674 = vpop.f32.mrb[0].mxu0
        %v1675 = vadd.f32 0.0, %v1674
        %1676 = vmatprep.mubr.f32.mxu0 0.0
        %1677 = vmatmul.mubr.f32.gmra.mrb[0].mxu0 %v1595
        %v1678 = vpop.f32.mrb[0].mxu0
        %v1679 = vadd.f32 0.0, %v1678
        %v1680 = vpop.f32.mrb[0].mxu0
        %v1681 = vadd.f32 0.0, %v1680
        %1682 = vmatprep.mubr.f32.mxu0 0.0
        %1683 = vmatmul.mubr.f32.gmra.mrb[0].mxu0 %v1598
        %v1684 = vpop.f32.mrb[0].mxu0
        %v1685 = vadd.f32 0.0, %v1684
        %v1686 = vpop.f32.mrb[0].mxu0
        %v1687 = vadd.f32 0.0, %v1686
        %1688 = vdwg.mxu0
        %v1689 = vadd.f32 %v1396, %v1667
        %v1690 = vadd.f32 %v1398, %v1669
        %v1691 = vadd.f32 %v1402, %v1673
        %v1692 = vadd.f32 %v1404, %v1675
        %v1693 = vadd.f32 %v1408, %v1679
        %v1694 = vadd.f32 %v1410, %v1681
        %v1695 = vadd.f32 %v1414, %v1685
        %v1696 = vadd.f32 %v1416, %v1687
        %v1697 = vld [vmem:[%s4] sm:$0x3]
        %v1699 = vlaneseq
        %v1700 = vshrl.u32 %v1699, 7
        %v1701 = vsub.s32 0, %v1700
        %v1702 = vrot.slane %v1697, %v1701
        %v1703 = vlaneseq
        %v1704 = vshrl.u32 %v1703, 7
        %v1705 = vsub.s32 1, %v1704
        %v1706 = vrot.slane %v1697, %v1705
        %v1709 = vadd.f32 %v1689, %v1702
        %v1710 = vadd.f32 %v1690, %v1706
        %v1711 = vadd.f32 %v1691, %v1702
        %v1712 = vadd.f32 %v1692, %v1706
        %v1713 = vadd.f32 %v1693, %v1702
        %v1714 = vadd.f32 %v1694, %v1706
        %v1715 = vadd.f32 %v1695, %v1702
        %v1716 = vadd.f32 %v1696, %v1706
        %v1717 = vmax.f32 %v1709, 0.0
        %v1718 = vmax.f32 %v1710, 0.0
        %v1719 = vmax.f32 %v1711, 0.0
        %v1720 = vmax.f32 %v1712, 0.0
        %v1721 = vmax.f32 %v1713, 0.0
        %v1722 = vmax.f32 %v1714, 0.0
        %v1723 = vmax.f32 %v1715, 0.0
        %v1724 = vmax.f32 %v1716, 0.0
        %v1725 = vld [vmem:[#allocation4] sm:$0xff]
        %v1726 = vld [vmem:[#allocation4 + $0x8] sm:$0xff]
        %v1727 = vld [vmem:[#allocation4 + $0x10] sm:$0xff]
        %v1728 = vld [vmem:[#allocation4 + $0x18] sm:$0xff]
        %v1729 = vld [vmem:[#allocation4 + $0x20] sm:$0xff]
        %v1730 = vld [vmem:[#allocation4 + $0x28] sm:$0xff]
        %v1731 = vld [vmem:[#allocation4 + $0x30] sm:$0xff]
        %v1732 = vld [vmem:[#allocation4 + $0x38] sm:$0xff]
        %v1733 = vld [vmem:[#allocation4 + $0x40] sm:$0xff]
        %v1734 = vld [vmem:[#allocation4 + $0x48] sm:$0xff]
        %v1735 = vld [vmem:[#allocation4 + $0x50] sm:$0xff]
        %v1736 = vld [vmem:[#allocation4 + $0x58] sm:$0xff]
        %v1737 = vld [vmem:[#allocation4 + $0x60] sm:$0xff]
        %v1738 = vld [vmem:[#allocation4 + $0x68] sm:$0xff]
        %v1739 = vld [vmem:[#allocation4 + $0x70] sm:$0xff]
        %v1740 = vld [vmem:[#allocation4 + $0x78] sm:$0xff]
        %v1741 = vld [vmem:[#allocation4 + $0x80] sm:$0xff]
        %v1742 = vld [vmem:[#allocation4 + $0x88] sm:$0xff]
        %v1743 = vld [vmem:[#allocation4 + $0x90] sm:$0xff]
        %v1744 = vld [vmem:[#allocation4 + $0x98] sm:$0xff]
        %v1745 = vld [vmem:[#allocation4 + $0xa0] sm:$0xff]
        %v1746 = vld [vmem:[#allocation4 + $0xa8] sm:$0xff]
        %v1747 = vld [vmem:[#allocation4 + $0xb0] sm:$0xff]
        %v1748 = vld [vmem:[#allocation4 + $0xb8] sm:$0xff]
        %v1749 = vld [vmem:[#allocation4 + $0xc0] sm:$0xff]
        %v1750 = vld [vmem:[#allocation4 + $0xc8] sm:$0xff]
        %v1751 = vld [vmem:[#allocation4 + $0xd0] sm:$0xff]
        %v1752 = vld [vmem:[#allocation4 + $0xd8] sm:$0xff]
        %v1753 = vld [vmem:[#allocation4 + $0xe0] sm:$0xff]
        %v1754 = vld [vmem:[#allocation4 + $0xe8] sm:$0xff]
        %v1755 = vld [vmem:[#allocation4 + $0xf0] sm:$0xff]
        %v1756 = vld [vmem:[#allocation4 + $0xf8] sm:$0xff]
        %v1757 = vld [vmem:[#allocation4 + $0x100] sm:$0xff]
        %v1758 = vld [vmem:[#allocation4 + $0x108] sm:$0xff]
        %v1759 = vld [vmem:[#allocation4 + $0x110] sm:$0xff]
        %v1760 = vld [vmem:[#allocation4 + $0x118] sm:$0xff]
        %v1761 = vld [vmem:[#allocation4 + $0x120] sm:$0xff]
        %v1762 = vld [vmem:[#allocation4 + $0x128] sm:$0xff]
        %v1763 = vld [vmem:[#allocation4 + $0x130] sm:$0xff]
        %v1764 = vld [vmem:[#allocation4 + $0x138] sm:$0xff]
        %v1765 = vld [vmem:[#allocation4 + $0x140] sm:$0xff]
        %v1766 = vld [vmem:[#allocation4 + $0x148] sm:$0xff]
        %v1767 = vld [vmem:[#allocation4 + $0x150] sm:$0xff]
        %v1768 = vld [vmem:[#allocation4 + $0x158] sm:$0xff]
        %v1769 = vld [vmem:[#allocation4 + $0x160] sm:$0xff]
        %v1770 = vld [vmem:[#allocation4 + $0x168] sm:$0xff]
        %v1771 = vld [vmem:[#allocation4 + $0x170] sm:$0xff]
        %v1772 = vld [vmem:[#allocation4 + $0x178] sm:$0xff]
        %v1773 = vld [vmem:[#allocation4 + $0x180] sm:$0xff]
        %v1774 = vld [vmem:[#allocation4 + $0x188] sm:$0xff]
        %v1775 = vld [vmem:[#allocation4 + $0x190] sm:$0xff]
        %v1776 = vld [vmem:[#allocation4 + $0x198] sm:$0xff]
        %v1777 = vld [vmem:[#allocation4 + $0x1a0] sm:$0xff]
        %v1778 = vld [vmem:[#allocation4 + $0x1a8] sm:$0xff]
        %v1779 = vld [vmem:[#allocation4 + $0x1b0] sm:$0xff]
        %v1780 = vld [vmem:[#allocation4 + $0x1b8] sm:$0xff]
        %v1781 = vld [vmem:[#allocation4 + $0x1c0] sm:$0xff]
        %v1782 = vld [vmem:[#allocation4 + $0x1c8] sm:$0xff]
        %v1783 = vld [vmem:[#allocation4 + $0x1d0] sm:$0xff]
        %v1784 = vld [vmem:[#allocation4 + $0x1d8] sm:$0xff]
        %v1785 = vld [vmem:[#allocation4 + $0x1e0] sm:$0xff]
        %v1786 = vld [vmem:[#allocation4 + $0x1e8] sm:$0xff]
        %v1787 = vld [vmem:[#allocation4 + $0x1f0] sm:$0xff]
        %v1788 = vld [vmem:[#allocation4 + $0x1f8] sm:$0xff]
        %s1789 = scalar_lea.vmem [#allocation4], 512
        %v1790 = vld [vmem:[%s1789] sm:$0xff]
        %v1791 = vld [vmem:[%s1789 + $0x8] sm:$0xff]
        %v1792 = vld [vmem:[%s1789 + $0x10] sm:$0xff]
        %v1793 = vld [vmem:[%s1789 + $0x18] sm:$0xff]
        %v1794 = vld [vmem:[%s1789 + $0x20] sm:$0xff]
        %v1795 = vld [vmem:[%s1789 + $0x28] sm:$0xff]
        %v1796 = vld [vmem:[%s1789 + $0x30] sm:$0xff]
        %v1797 = vld [vmem:[%s1789 + $0x38] sm:$0xff]
        %v1798 = vld [vmem:[%s1789 + $0x40] sm:$0xff]
        %v1799 = vld [vmem:[%s1789 + $0x48] sm:$0xff]
        %v1800 = vld [vmem:[%s1789 + $0x50] sm:$0xff]
        %v1801 = vld [vmem:[%s1789 + $0x58] sm:$0xff]
        %v1802 = vld [vmem:[%s1789 + $0x60] sm:$0xff]
        %v1803 = vld [vmem:[%s1789 + $0x68] sm:$0xff]
        %v1804 = vld [vmem:[%s1789 + $0x70] sm:$0xff]
        %v1805 = vld [vmem:[%s1789 + $0x78] sm:$0xff]
        %v1806 = vld [vmem:[%s1789 + $0x80] sm:$0xff]
        %v1807 = vld [vmem:[%s1789 + $0x88] sm:$0xff]
        %v1808 = vld [vmem:[%s1789 + $0x90] sm:$0xff]
        %v1809 = vld [vmem:[%s1789 + $0x98] sm:$0xff]
        %v1810 = vld [vmem:[%s1789 + $0xa0] sm:$0xff]
        %v1811 = vld [vmem:[%s1789 + $0xa8] sm:$0xff]
        %v1812 = vld [vmem:[%s1789 + $0xb0] sm:$0xff]
        %v1813 = vld [vmem:[%s1789 + $0xb8] sm:$0xff]
        %v1814 = vld [vmem:[%s1789 + $0xc0] sm:$0xff]
        %v1815 = vld [vmem:[%s1789 + $0xc8] sm:$0xff]
        %v1816 = vld [vmem:[%s1789 + $0xd0] sm:$0xff]
        %v1817 = vld [vmem:[%s1789 + $0xd8] sm:$0xff]
        %v1818 = vld [vmem:[%s1789 + $0xe0] sm:$0xff]
        %v1819 = vld [vmem:[%s1789 + $0xe8] sm:$0xff]
        %v1820 = vld [vmem:[%s1789 + $0xf0] sm:$0xff]
        %v1821 = vld [vmem:[%s1789 + $0xf8] sm:$0xff]
        %v1822 = vld [vmem:[%s1789 + $0x100] sm:$0xff]
        %v1823 = vld [vmem:[%s1789 + $0x108] sm:$0xff]
        %v1824 = vld [vmem:[%s1789 + $0x110] sm:$0xff]
        %v1825 = vld [vmem:[%s1789 + $0x118] sm:$0xff]
        %v1826 = vld [vmem:[%s1789 + $0x120] sm:$0xff]
        %v1827 = vld [vmem:[%s1789 + $0x128] sm:$0xff]
        %v1828 = vld [vmem:[%s1789 + $0x130] sm:$0xff]
        %v1829 = vld [vmem:[%s1789 + $0x138] sm:$0xff]
        %v1830 = vld [vmem:[%s1789 + $0x140] sm:$0xff]
        %v1831 = vld [vmem:[%s1789 + $0x148] sm:$0xff]
        %v1832 = vld [vmem:[%s1789 + $0x150] sm:$0xff]
        %v1833 = vld [vmem:[%s1789 + $0x158] sm:$0xff]
        %v1834 = vld [vmem:[%s1789 + $0x160] sm:$0xff]
        %v1835 = vld [vmem:[%s1789 + $0x168] sm:$0xff]
        %v1836 = vld [vmem:[%s1789 + $0x170] sm:$0xff]
        %v1837 = vld [vmem:[%s1789 + $0x178] sm:$0xff]
        %v1838 = vld [vmem:[%s1789 + $0x180] sm:$0xff]
        %v1839 = vld [vmem:[%s1789 + $0x188] sm:$0xff]
        %v1840 = vld [vmem:[%s1789 + $0x190] sm:$0xff]
        %v1841 = vld [vmem:[%s1789 + $0x198] sm:$0xff]
        %v1842 = vld [vmem:[%s1789 + $0x1a0] sm:$0xff]
        %v1843 = vld [vmem:[%s1789 + $0x1a8] sm:$0xff]
        %v1844 = vld [vmem:[%s1789 + $0x1b0] sm:$0xff]
        %v1845 = vld [vmem:[%s1789 + $0x1b8] sm:$0xff]
        %v1846 = vld [vmem:[%s1789 + $0x1c0] sm:$0xff]
        %v1847 = vld [vmem:[%s1789 + $0x1c8] sm:$0xff]
        %v1848 = vld [vmem:[%s1789 + $0x1d0] sm:$0xff]
        %v1849 = vld [vmem:[%s1789 + $0x1d8] sm:$0xff]
        %v1850 = vld [vmem:[%s1789 + $0x1e0] sm:$0xff]
        %v1851 = vld [vmem:[%s1789 + $0x1e8] sm:$0xff]
        %v1852 = vld [vmem:[%s1789 + $0x1f0] sm:$0xff]
        %v1853 = vld [vmem:[%s1789 + $0x1f8] sm:$0xff]
        %1854 = vmatprep.subr.mxu0 %v1791
        %1855 = vmatpush1.msra.mxu0 %v1790
        %1856 = vmatprep.subr.mxu0 %v1793
        %1857 = vmatpush1.msra.mxu0 %v1792
        %1858 = vmatprep.subr.mxu0 %v1795
        %1859 = vmatpush1.msra.mxu0 %v1794
        %1860 = vmatprep.subr.mxu0 %v1797
        %1861 = vmatpush1.msra.mxu0 %v1796
        %1862 = vmatprep.subr.mxu0 %v1799
        %1863 = vmatpush1.msra.mxu0 %v1798
        %1864 = vmatprep.subr.mxu0 %v1801
        %1865 = vmatpush1.msra.mxu0 %v1800
        %1866 = vmatprep.subr.mxu0 %v1803
        %1867 = vmatpush1.msra.mxu0 %v1802
        %1868 = vmatprep.subr.mxu0 %v1805
        %1869 = vmatpush1.msra.mxu0 %v1804
        %1870 = vmatprep.subr.mxu0 %v1807
        %1871 = vmatpush1.msra.mxu0 %v1806
        %1872 = vmatprep.subr.mxu0 %v1809
        %1873 = vmatpush1.msra.mxu0 %v1808
        %1874 = vmatprep.subr.mxu0 %v1811
        %1875 = vmatpush1.msra.mxu0 %v1810
        %1876 = vmatprep.subr.mxu0 %v1813
        %1877 = vmatpush1.msra.mxu0 %v1812
        %1878 = vmatprep.subr.mxu0 %v1815
        %1879 = vmatpush1.msra.mxu0 %v1814
        %1880 = vmatprep.subr.mxu0 %v1817
        %1881 = vmatpush1.msra.mxu0 %v1816
        %1882 = vmatprep.subr.mxu0 %v1819
        %1883 = vmatpush1.msra.mxu0 %v1818
        %1884 = vmatprep.subr.mxu0 %v1821
        %1885 = vmatpush1.msra.mxu0 %v1820
        %1886 = vmatprep.subr.mxu0 %v1823
        %1887 = vmatpush1.msra.mxu0 %v1822
        %1888 = vmatprep.subr.mxu0 %v1825
        %1889 = vmatpush1.msra.mxu0 %v1824
        %1890 = vmatprep.subr.mxu0 %v1827
        %1891 = vmatpush1.msra.mxu0 %v1826
        %1892 = vmatprep.subr.mxu0 %v1829
        %1893 = vmatpush1.msra.mxu0 %v1828
        %1894 = vmatprep.subr.mxu0 %v1831
        %1895 = vmatpush1.msra.mxu0 %v1830
        %1896 = vmatprep.subr.mxu0 %v1833
        %1897 = vmatpush1.msra.mxu0 %v1832
        %1898 = vmatprep.subr.mxu0 %v1835
        %1899 = vmatpush1.msra.mxu0 %v1834
        %1900 = vmatprep.subr.mxu0 %v1837
        %1901 = vmatpush1.msra.mxu0 %v1836
        %1902 = vmatprep.subr.mxu0 %v1839
        %1903 = vmatpush1.msra.mxu0 %v1838
        %1904 = vmatprep.subr.mxu0 %v1841
        %1905 = vmatpush1.msra.mxu0 %v1840
        %1906 = vmatprep.subr.mxu0 %v1843
        %1907 = vmatpush1.msra.mxu0 %v1842
        %1908 = vmatprep.subr.mxu0 %v1845
        %1909 = vmatpush1.msra.mxu0 %v1844
        %1910 = vmatprep.subr.mxu0 %v1847
        %1911 = vmatpush1.msra.mxu0 %v1846
        %1912 = vmatprep.subr.mxu0 %v1849
        %1913 = vmatpush1.msra.mxu0 %v1848
        %1914 = vmatprep.subr.mxu0 %v1851
        %1915 = vmatpush1.msra.mxu0 %v1850
        %1916 = vmatprep.subr.mxu0 %v1853
        %1917 = vmatpush1.msra.mxu0 %v1852
        %1918 = vmatprep.mubr.f32.mxu0 %v1718
        %1919 = vmatmul.mubr.f32.gmra.mrb[0].mxu0 %v1717
        %v1920 = vpop.f32.mrb[0].mxu0
        %v1921 = vadd.f32 0.0, %v1920
        %v1922 = vpop.f32.mrb[0].mxu0
        %v1923 = vadd.f32 0.0, %v1922
        %1924 = vmatprep.mubr.f32.mxu0 %v1720
        %1925 = vmatmul.mubr.f32.gmra.mrb[0].mxu0 %v1719
        %v1926 = vpop.f32.mrb[0].mxu0
        %v1927 = vadd.f32 0.0, %v1926
        %v1928 = vpop.f32.mrb[0].mxu0
        %v1929 = vadd.f32 0.0, %v1928
        %1930 = vmatprep.mubr.f32.mxu0 %v1722
        %1931 = vmatmul.mubr.f32.gmra.mrb[0].mxu0 %v1721
        %v1932 = vpop.f32.mrb[0].mxu0
        %v1933 = vadd.f32 0.0, %v1932
        %v1934 = vpop.f32.mrb[0].mxu0
        %v1935 = vadd.f32 0.0, %v1934
        %1936 = vmatprep.mubr.f32.mxu0 %v1724
        %1937 = vmatmul.mubr.f32.gmra.mrb[0].mxu0 %v1723
        %v1938 = vpop.f32.mrb[0].mxu0
        %v1939 = vadd.f32 0.0, %v1938
        %v1940 = vpop.f32.mrb[0].mxu0
        %v1941 = vadd.f32 0.0, %v1940
        %1942 = vdwg.mxu0
        %1943 = vmatprep.subr.mxu0 %v1923
        %1944 = vmatpush1.msra.mxu0 %v1921
        %1945 = vmatprep.subr.mxu0 %v1929
        %1946 = vmatpush1.msra.mxu0 %v1927
        %1947 = vmatprep.subr.mxu0 %v1935
        %1948 = vmatpush1.msra.mxu0 %v1933
        %1949 = vmatprep.subr.mxu0 %v1941
        %1950 = vmatpush1.msra.mxu0 %v1939
        %1951 = vmatprep.subr.mxu0 0.0
        %1952 = vmatpush1.msra.mxu0 0.0
        %1953 = vmatprep.subr.mxu0 0.0
        %1954 = vmatpush1.msra.mxu0 0.0
        %1955 = vmatprep.subr.mxu0 0.0
        %1956 = vmatpush1.msra.mxu0 0.0
        %1957 = vmatprep.subr.mxu0 0.0
        %1958 = vmatpush1.msra.mxu0 0.0
        %1959 = vmatprep.subr.mxu0 0.0
        %1960 = vmatpush1.msra.mxu0 0.0
        %1961 = vmatprep.subr.mxu0 0.0
        %1962 = vmatpush1.msra.mxu0 0.0
        %1963 = vmatprep.subr.mxu0 0.0
        %1964 = vmatpush1.msra.mxu0 0.0
        %1965 = vmatprep.subr.mxu0 0.0
        %1966 = vmatpush1.msra.mxu0 0.0
        %1967 = vmatprep.subr.mxu0 0.0
        %1968 = vmatpush1.msra.mxu0 0.0
        %1969 = vmatprep.subr.mxu0 0.0
        %1970 = vmatpush1.msra.mxu0 0.0
        %1971 = vmatprep.subr.mxu0 0.0
        %1972 = vmatpush1.msra.mxu0 0.0
        %1973 = vmatprep.subr.mxu0 0.0
        %1974 = vmatpush1.msra.mxu0 0.0
        %1975 = vmatprep.subr.mxu0 0.0
        %1976 = vmatpush1.msra.mxu0 0.0
        %1977 = vmatprep.subr.mxu0 0.0
        %1978 = vmatpush1.msra.mxu0 0.0
        %1979 = vmatprep.subr.mxu0 0.0
        %1980 = vmatpush1.msra.mxu0 0.0
        %1981 = vmatprep.subr.mxu0 0.0
        %1982 = vmatpush1.msra.mxu0 0.0
        %1983 = vmatprep.subr.mxu0 0.0
        %1984 = vmatpush1.msra.mxu0 0.0
        %1985 = vmatprep.subr.mxu0 0.0
        %1986 = vmatpush1.msra.mxu0 0.0
        %1987 = vmatprep.subr.mxu0 0.0
        %1988 = vmatpush1.msra.mxu0 0.0
        %1989 = vmatprep.subr.mxu0 0.0
        %1990 = vmatpush1.msra.mxu0 0.0
        %1991 = vmatprep.subr.mxu0 0.0
        %1992 = vmatpush1.msra.mxu0 0.0
        %1993 = vmatprep.subr.mxu0 0.0
        %1994 = vmatpush1.msra.mxu0 0.0
        %1995 = vmatprep.subr.mxu0 0.0
        %1996 = vmatpush1.msra.mxu0 0.0
        %1997 = vmatprep.subr.mxu0 0.0
        %1998 = vmatpush1.msra.mxu0 0.0
        %1999 = vmatprep.subr.mxu0 0.0
        %2000 = vmatpush1.msra.mxu0 0.0
        %2001 = vmatprep.subr.mxu0 0.0
        %2002 = vmatpush1.msra.mxu0 0.0
        %2003 = vmatprep.subr.mxu0 0.0
        %2004 = vmatpush1.msra.mxu0 0.0
        %2005 = vmatprep.subr.mxu0 0.0
        %2006 = vmatpush1.msra.mxu0 0.0
        %2007 = vmatprep.mubr.f32.mxu0 0.0
        %2008 = vmatmul.mubr.f32.gmra.mrb[0].mxu0 %v1589
        %v2009 = vpop.f32.mrb[0].mxu0
        %v2010 = vadd.f32 0.0, %v2009
        %v2011 = vpop.f32.mrb[0].mxu0
        %v2012 = vadd.f32 0.0, %v2011
        %2013 = vmatprep.mubr.f32.mxu0 0.0
        %2014 = vmatmul.mubr.f32.gmra.mrb[0].mxu0 %v1592
        %v2015 = vpop.f32.mrb[0].mxu0
        %v2016 = vadd.f32 0.0, %v2015
        %v2017 = vpop.f32.mrb[0].mxu0
        %v2018 = vadd.f32 0.0, %v2017
        %2019 = vmatprep.mubr.f32.mxu0 0.0
        %2020 = vmatmul.mubr.f32.gmra.mrb[0].mxu0 %v1595
        %v2021 = vpop.f32.mrb[0].mxu0
        %v2022 = vadd.f32 0.0, %v2021
        %v2023 = vpop.f32.mrb[0].mxu0
        %v2024 = vadd.f32 0.0, %v2023
        %2025 = vmatprep.mubr.f32.mxu0 0.0
        %2026 = vmatmul.mubr.f32.gmra.mrb[0].mxu0 %v1598
        %v2027 = vpop.f32.mrb[0].mxu0
        %v2028 = vpop.f32.mrb[0].mxu0
        %2029 = vdwg.mxu0
        %2030 = vmatprep.subr.mxu0 %v1726
        %2031 = vmatpush1.msra.mxu0 %v1725
        %2032 = vmatprep.subr.mxu0 %v1728
        %2033 = vmatpush1.msra.mxu0 %v1727
        %2034 = vmatprep.subr.mxu0 %v1730
        %2035 = vmatpush1.msra.mxu0 %v1729
        %2036 = vmatprep.subr.mxu0 %v1732
        %2037 = vmatpush1.msra.mxu0 %v1731
        %2038 = vmatprep.subr.mxu0 %v1734
        %2039 = vmatpush1.msra.mxu0 %v1733
        %2040 = vmatprep.subr.mxu0 %v1736
        %2041 = vmatpush1.msra.mxu0 %v1735
        %2042 = vmatprep.subr.mxu0 %v1738
        %2043 = vmatpush1.msra.mxu0 %v1737
        %2044 = vmatprep.subr.mxu0 %v1740
        %2045 = vmatpush1.msra.mxu0 %v1739
        %2046 = vmatprep.subr.mxu0 %v1742
        %2047 = vmatpush1.msra.mxu0 %v1741
        %2048 = vmatprep.subr.mxu0 %v1744
        %2049 = vmatpush1.msra.mxu0 %v1743
        %2050 = vmatprep.subr.mxu0 %v1746
        %2051 = vmatpush1.msra.mxu0 %v1745
        %2052 = vmatprep.subr.mxu0 %v1748
        %2053 = vmatpush1.msra.mxu0 %v1747
        %2054 = vmatprep.subr.mxu0 %v1750
        %2055 = vmatpush1.msra.mxu0 %v1749
        %2056 = vmatprep.subr.mxu0 %v1752
        %2057 = vmatpush1.msra.mxu0 %v1751
        %2058 = vmatprep.subr.mxu0 %v1754
        %2059 = vmatpush1.msra.mxu0 %v1753
        %2060 = vmatprep.subr.mxu0 %v1756
        %2061 = vmatpush1.msra.mxu0 %v1755
        %2062 = vmatprep.subr.mxu0 %v1758
        %2063 = vmatpush1.msra.mxu0 %v1757
        %2064 = vmatprep.subr.mxu0 %v1760
        %2065 = vmatpush1.msra.mxu0 %v1759
        %2066 = vmatprep.subr.mxu0 %v1762
        %2067 = vmatpush1.msra.mxu0 %v1761
        %2068 = vmatprep.subr.mxu0 %v1764
        %2069 = vmatpush1.msra.mxu0 %v1763
        %2070 = vmatprep.subr.mxu0 %v1766
        %2071 = vmatpush1.msra.mxu0 %v1765
        %2072 = vmatprep.subr.mxu0 %v1768
        %2073 = vmatpush1.msra.mxu0 %v1767
        %2074 = vmatprep.subr.mxu0 %v1770
        %2075 = vmatpush1.msra.mxu0 %v1769
        %2076 = vmatprep.subr.mxu0 %v1772
        %2077 = vmatpush1.msra.mxu0 %v1771
        %2078 = vmatprep.subr.mxu0 %v1774
        %2079 = vmatpush1.msra.mxu0 %v1773
        %2080 = vmatprep.subr.mxu0 %v1776
        %2081 = vmatpush1.msra.mxu0 %v1775
        %2082 = vmatprep.subr.mxu0 %v1778
        %2083 = vmatpush1.msra.mxu0 %v1777
        %2084 = vmatprep.subr.mxu0 %v1780
        %2085 = vmatpush1.msra.mxu0 %v1779
        %2086 = vmatprep.subr.mxu0 %v1782
        %2087 = vmatpush1.msra.mxu0 %v1781
        %2088 = vmatprep.subr.mxu0 %v1784
        %2089 = vmatpush1.msra.mxu0 %v1783
        %2090 = vmatprep.subr.mxu0 %v1786
        %2091 = vmatpush1.msra.mxu0 %v1785
        %2092 = vmatprep.subr.mxu0 %v1788
        %2093 = vmatpush1.msra.mxu0 %v1787
        %2094 = vmatprep.mubr.f32.mxu0 %v1718
        %2095 = vmatmul.mubr.f32.gmra.mrb[0].mxu0 %v1717
        %v2096 = vpop.f32.mrb[0].mxu0
        %v2097 = vadd.f32 %v2010, %v2096
        %v2098 = vpop.f32.mrb[0].mxu0
        %v2099 = vadd.f32 %v2012, %v2098
        %2100 = vmatprep.mubr.f32.mxu0 %v1720
        %2101 = vmatmul.mubr.f32.gmra.mrb[0].mxu0 %v1719
        %v2102 = vpop.f32.mrb[0].mxu0
        %v2103 = vadd.f32 %v2016, %v2102
        %v2104 = vpop.f32.mrb[0].mxu0
        %v2105 = vadd.f32 %v2018, %v2104
        %2106 = vmatprep.mubr.f32.mxu0 %v1722
        %2107 = vmatmul.mubr.f32.gmra.mrb[0].mxu0 %v1721
        %v2108 = vpop.f32.mrb[0].mxu0
        %v2109 = vadd.f32 %v2022, %v2108
        %v2110 = vpop.f32.mrb[0].mxu0
        %v2111 = vadd.f32 %v2024, %v2110
        %2112 = vmatprep.mubr.f32.mxu0 %v1724
        %2113 = vmatmul.mubr.f32.gmra.mrb[0].mxu0 %v1723
        %v2114 = vpop.f32.mrb[0].mxu0
        %v2115 = vpop.f32.mrb[0].mxu0
        %2116 = vdwg.mxu0
        %s2117 = scalar_lea.vmem [#allocation4], 1024
        %v2118 = vld [vmem:[%s2117] sm:$0xff]
        %v2119 = vld [vmem:[%s2117 + $0x8] sm:$0xff]
        %v2120 = vld [vmem:[%s2117 + $0x10] sm:$0xff]
        %v2121 = vld [vmem:[%s2117 + $0x18] sm:$0xff]
        %v2122 = vld [vmem:[%s2117 + $0x20] sm:$0xff]
        %v2123 = vld [vmem:[%s2117 + $0x28] sm:$0xff]
        %v2124 = vld [vmem:[%s2117 + $0x30] sm:$0xff]
        %v2125 = vld [vmem:[%s2117 + $0x38] sm:$0xff]
        %v2126 = vld [vmem:[%s2117 + $0x40] sm:$0xff]
        %v2127 = vld [vmem:[%s2117 + $0x48] sm:$0xff]
        %v2128 = vld [vmem:[%s2117 + $0x50] sm:$0xff]
        %v2129 = vld [vmem:[%s2117 + $0x58] sm:$0xff]
        %v2130 = vld [vmem:[%s2117 + $0x60] sm:$0xff]
        %v2131 = vld [vmem:[%s2117 + $0x68] sm:$0xff]
        %v2132 = vld [vmem:[%s2117 + $0x70] sm:$0xff]
        %v2133 = vld [vmem:[%s2117 + $0x78] sm:$0xff]
        %v2134 = vld [vmem:[%s2117 + $0x80] sm:$0xff]
        %v2135 = vld [vmem:[%s2117 + $0x88] sm:$0xff]
        %v2136 = vld [vmem:[%s2117 + $0x90] sm:$0xff]
        %v2137 = vld [vmem:[%s2117 + $0x98] sm:$0xff]
        %v2138 = vld [vmem:[%s2117 + $0xa0] sm:$0xff]
        %v2139 = vld [vmem:[%s2117 + $0xa8] sm:$0xff]
        %v2140 = vld [vmem:[%s2117 + $0xb0] sm:$0xff]
        %v2141 = vld [vmem:[%s2117 + $0xb8] sm:$0xff]
        %v2142 = vld [vmem:[%s2117 + $0xc0] sm:$0xff]
        %v2143 = vld [vmem:[%s2117 + $0xc8] sm:$0xff]
        %v2144 = vld [vmem:[%s2117 + $0xd0] sm:$0xff]
        %v2145 = vld [vmem:[%s2117 + $0xd8] sm:$0xff]
        %v2146 = vld [vmem:[%s2117 + $0xe0] sm:$0xff]
        %v2147 = vld [vmem:[%s2117 + $0xe8] sm:$0xff]
        %v2148 = vld [vmem:[%s2117 + $0xf0] sm:$0xff]
        %v2149 = vld [vmem:[%s2117 + $0xf8] sm:$0xff]
        %v2150 = vld [vmem:[%s2117 + $0x100] sm:$0xff]
        %v2151 = vld [vmem:[%s2117 + $0x108] sm:$0xff]
        %v2152 = vld [vmem:[%s2117 + $0x110] sm:$0xff]
        %v2153 = vld [vmem:[%s2117 + $0x118] sm:$0xff]
        %v2154 = vld [vmem:[%s2117 + $0x120] sm:$0xff]
        %v2155 = vld [vmem:[%s2117 + $0x128] sm:$0xff]
        %v2156 = vld [vmem:[%s2117 + $0x130] sm:$0xff]
        %v2157 = vld [vmem:[%s2117 + $0x138] sm:$0xff]
        %v2158 = vld [vmem:[%s2117 + $0x140] sm:$0xff]
        %v2159 = vld [vmem:[%s2117 + $0x148] sm:$0xff]
        %v2160 = vld [vmem:[%s2117 + $0x150] sm:$0xff]
        %v2161 = vld [vmem:[%s2117 + $0x158] sm:$0xff]
        %v2162 = vld [vmem:[%s2117 + $0x160] sm:$0xff]
        %v2163 = vld [vmem:[%s2117 + $0x168] sm:$0xff]
        %v2164 = vld [vmem:[%s2117 + $0x170] sm:$0xff]
        %v2165 = vld [vmem:[%s2117 + $0x178] sm:$0xff]
        %v2166 = vld [vmem:[%s2117 + $0x180] sm:$0xff]
        %v2167 = vld [vmem:[%s2117 + $0x188] sm:$0xff]
        %v2168 = vld [vmem:[%s2117 + $0x190] sm:$0xff]
        %v2169 = vld [vmem:[%s2117 + $0x198] sm:$0xff]
        %v2170 = vld [vmem:[%s2117 + $0x1a0] sm:$0xff]
        %v2171 = vld [vmem:[%s2117 + $0x1a8] sm:$0xff]
        %v2172 = vld [vmem:[%s2117 + $0x1b0] sm:$0xff]
        %v2173 = vld [vmem:[%s2117 + $0x1b8] sm:$0xff]
        %v2174 = vld [vmem:[%s2117 + $0x1c0] sm:$0xff]
        %v2175 = vld [vmem:[%s2117 + $0x1c8] sm:$0xff]
        %v2176 = vld [vmem:[%s2117 + $0x1d0] sm:$0xff]
        %v2177 = vld [vmem:[%s2117 + $0x1d8] sm:$0xff]
        %v2178 = vld [vmem:[%s2117 + $0x1e0] sm:$0xff]
        %v2179 = vld [vmem:[%s2117 + $0x1e8] sm:$0xff]
        %v2180 = vld [vmem:[%s2117 + $0x1f0] sm:$0xff]
        %v2181 = vld [vmem:[%s2117 + $0x1f8] sm:$0xff]
        %2182 = vmatprep.subr.mxu0 %v2119
        %2183 = vmatpush1.msra.mxu0 %v2118
        %2184 = vmatprep.subr.mxu0 %v2121
        %2185 = vmatpush1.msra.mxu0 %v2120
        %2186 = vmatprep.subr.mxu0 %v2123
        %2187 = vmatpush1.msra.mxu0 %v2122
        %2188 = vmatprep.subr.mxu0 %v2125
        %2189 = vmatpush1.msra.mxu0 %v2124
        %2190 = vmatprep.subr.mxu0 %v2127
        %2191 = vmatpush1.msra.mxu0 %v2126
        %2192 = vmatprep.subr.mxu0 %v2129
        %2193 = vmatpush1.msra.mxu0 %v2128
        %2194 = vmatprep.subr.mxu0 %v2131
        %2195 = vmatpush1.msra.mxu0 %v2130
        %2196 = vmatprep.subr.mxu0 %v2133
        %2197 = vmatpush1.msra.mxu0 %v2132
        %2198 = vmatprep.subr.mxu0 %v2135
        %2199 = vmatpush1.msra.mxu0 %v2134
        %2200 = vmatprep.subr.mxu0 %v2137
        %2201 = vmatpush1.msra.mxu0 %v2136
        %2202 = vmatprep.subr.mxu0 %v2139
        %2203 = vmatpush1.msra.mxu0 %v2138
        %2204 = vmatprep.subr.mxu0 %v2141
        %2205 = vmatpush1.msra.mxu0 %v2140
        %2206 = vmatprep.subr.mxu0 %v2143
        %2207 = vmatpush1.msra.mxu0 %v2142
        %2208 = vmatprep.subr.mxu0 %v2145
        %2209 = vmatpush1.msra.mxu0 %v2144
        %2210 = vmatprep.subr.mxu0 %v2147
        %2211 = vmatpush1.msra.mxu0 %v2146
        %2212 = vmatprep.subr.mxu0 %v2149
        %2213 = vmatpush1.msra.mxu0 %v2148
        %2214 = vmatprep.subr.mxu0 %v2151
        %2215 = vmatpush1.msra.mxu0 %v2150
        %2216 = vmatprep.subr.mxu0 %v2153
        %2217 = vmatpush1.msra.mxu0 %v2152
        %2218 = vmatprep.subr.mxu0 %v2155
        %2219 = vmatpush1.msra.mxu0 %v2154
        %2220 = vmatprep.subr.mxu0 %v2157
        %2221 = vmatpush1.msra.mxu0 %v2156
        %2222 = vmatprep.subr.mxu0 %v2159
        %2223 = vmatpush1.msra.mxu0 %v2158
        %2224 = vmatprep.subr.mxu0 %v2161
        %2225 = vmatpush1.msra.mxu0 %v2160
        %2226 = vmatprep.subr.mxu0 %v2163
        %2227 = vmatpush1.msra.mxu0 %v2162
        %2228 = vmatprep.subr.mxu0 %v2165
        %2229 = vmatpush1.msra.mxu0 %v2164
        %2230 = vmatprep.subr.mxu0 %v2167
        %2231 = vmatpush1.msra.mxu0 %v2166
        %2232 = vmatprep.subr.mxu0 %v2169
        %2233 = vmatpush1.msra.mxu0 %v2168
        %2234 = vmatprep.subr.mxu0 %v2171
        %2235 = vmatpush1.msra.mxu0 %v2170
        %2236 = vmatprep.subr.mxu0 %v2173
        %2237 = vmatpush1.msra.mxu0 %v2172
        %2238 = vmatprep.subr.mxu0 %v2175
        %2239 = vmatpush1.msra.mxu0 %v2174
        %2240 = vmatprep.subr.mxu0 %v2177
        %2241 = vmatpush1.msra.mxu0 %v2176
        %2242 = vmatprep.subr.mxu0 %v2179
        %2243 = vmatpush1.msra.mxu0 %v2178
        %2244 = vmatprep.subr.mxu0 %v2181
        %2245 = vmatpush1.msra.mxu0 %v2180
        %2246 = vmatprep.mubr.f32.mxu0 %v1718
        %2247 = vmatmul.mubr.f32.gmra.mrb[0].mxu0 %v1717
        %v2248 = vpop.f32.mrb[0].mxu0
        %v2249 = vadd.f32 0.0, %v2248
        %v2250 = vpop.f32.mrb[0].mxu0
        %v2251 = vadd.f32 0.0, %v2250
        %2252 = vmatprep.mubr.f32.mxu0 %v1720
        %2253 = vmatmul.mubr.f32.gmra.mrb[0].mxu0 %v1719
        %v2254 = vpop.f32.mrb[0].mxu0
        %v2255 = vadd.f32 0.0, %v2254
        %v2256 = vpop.f32.mrb[0].mxu0
        %v2257 = vadd.f32 0.0, %v2256
        %2258 = vmatprep.mubr.f32.mxu0 %v1722
        %2259 = vmatmul.mubr.f32.gmra.mrb[0].mxu0 %v1721
        %v2260 = vpop.f32.mrb[0].mxu0
        %v2261 = vadd.f32 0.0, %v2260
        %v2262 = vpop.f32.mrb[0].mxu0
        %v2263 = vadd.f32 0.0, %v2262
        %2264 = vmatprep.mubr.f32.mxu0 %v1724
        %2265 = vmatmul.mubr.f32.gmra.mrb[0].mxu0 %v1723
        %v2266 = vpop.f32.mrb[0].mxu0
        %v2267 = vadd.f32 0.0, %v2266
        %v2268 = vpop.f32.mrb[0].mxu0
        %v2269 = vadd.f32 0.0, %v2268
        %2270 = vdwg.mxu0
        %v2271 = vadd.s32 %v535, 8
        %v2272 = vadd.s32 %v536, 8
        %v2273 = vadd.s32 %v537, 8
        %vm2274 = vcmp.eq.s32.totalorder %v539, %v535
        %vm2275 = vcmp.eq.s32.totalorder %v539, %v2271
        %vm2276 = vcmp.eq.s32.totalorder %v539, %v2272
        %vm2277 = vcmp.eq.s32.totalorder %v539, %v2273
        %v2278 = vsel %vm2274, 1, 0
        %v2279 = vsel %vm2275, 1, 0
        %v2280 = vsel %vm2276, 1, 0
        %v2281 = vsel %vm2277, 1, 0
        %v2282 = vcvt.s32.f32 %v2278
        %v2283 = vcvt.s32.f32 %v2279
        %v2284 = vcvt.s32.f32 %v2280
        %v2285 = vcvt.s32.f32 %v2281
        %v2287 = vsel %vm556, %v2282, 0
        %v2290 = vsel %vm556, %v2283, 0
        %v2293 = vsel %vm556, %v2284, 0
        %v2296 = vsel %vm556, %v2285, 0
        %2298 = vmatprep.subr.mxu0 %v2251
        %2299 = vmatpush1.msra.mxu0 %v2249
        %2300 = vmatprep.subr.mxu0 %v2257
        %2301 = vmatpush1.msra.mxu0 %v2255
        %2302 = vmatprep.subr.mxu0 %v2263
        %2303 = vmatpush1.msra.mxu0 %v2261
        %2304 = vmatprep.subr.mxu0 %v2269
        %2305 = vmatpush1.msra.mxu0 %v2267
        %2306 = vmatprep.subr.mxu0 0.0
        %2307 = vmatpush1.msra.mxu0 0.0
        %2308 = vmatprep.subr.mxu0 0.0
        %2309 = vmatpush1.msra.mxu0 0.0
        %2310 = vmatprep.subr.mxu0 0.0
        %2311 = vmatpush1.msra.mxu0 0.0
        %2312 = vmatprep.subr.mxu0 0.0
        %2313 = vmatpush1.msra.mxu0 0.0
        %2314 = vmatprep.subr.mxu0 0.0
        %2315 = vmatpush1.msra.mxu0 0.0
        %2316 = vmatprep.subr.mxu0 0.0
        %2317 = vmatpush1.msra.mxu0 0.0
        %2318 = vmatprep.subr.mxu0 0.0
        %2319 = vmatpush1.msra.mxu0 0.0
        %2320 = vmatprep.subr.mxu0 0.0
        %2321 = vmatpush1.msra.mxu0 0.0
        %2322 = vmatprep.subr.mxu0 0.0
        %2323 = vmatpush1.msra.mxu0 0.0
        %2324 = vmatprep.subr.mxu0 0.0
        %2325 = vmatpush1.msra.mxu0 0.0
        %2326 = vmatprep.subr.mxu0 0.0
        %2327 = vmatpush1.msra.mxu0 0.0
        %2328 = vmatprep.subr.mxu0 0.0
        %2329 = vmatpush1.msra.mxu0 0.0
        %2330 = vmatprep.subr.mxu0 0.0
        %2331 = vmatpush1.msra.mxu0 0.0
        %2332 = vmatprep.subr.mxu0 0.0
        %2333 = vmatpush1.msra.mxu0 0.0
        %2334 = vmatprep.subr.mxu0 0.0
        %2335 = vmatpush1.msra.mxu0 0.0
        %2336 = vmatprep.subr.mxu0 0.0
        %2337 = vmatpush1.msra.mxu0 0.0
        %2338 = vmatprep.subr.mxu0 0.0
        %2339 = vmatpush1.msra.mxu0 0.0
        %2340 = vmatprep.subr.mxu0 0.0
        %2341 = vmatpush1.msra.mxu0 0.0
        %2342 = vmatprep.subr.mxu0 0.0
        %2343 = vmatpush1.msra.mxu0 0.0
        %2344 = vmatprep.subr.mxu0 0.0
        %2345 = vmatpush1.msra.mxu0 0.0
        %2346 = vmatprep.subr.mxu0 0.0
        %2347 = vmatpush1.msra.mxu0 0.0
        %2348 = vmatprep.subr.mxu0 0.0
        %2349 = vmatpush1.msra.mxu0 0.0
        %2350 = vmatprep.subr.mxu0 0.0
        %2351 = vmatpush1.msra.mxu0 0.0
        %2352 = vmatprep.subr.mxu0 0.0
        %2353 = vmatpush1.msra.mxu0 0.0
        %2354 = vmatprep.subr.mxu0 0.0
        %2355 = vmatpush1.msra.mxu0 0.0
        %2356 = vmatprep.subr.mxu0 0.0
        %2357 = vmatpush1.msra.mxu0 0.0
        %2358 = vmatprep.subr.mxu0 0.0
        %2359 = vmatpush1.msra.mxu0 0.0
        %2360 = vmatprep.subr.mxu0 0.0
        %2361 = vmatpush1.msra.mxu0 0.0
        %2362 = vmatprep.mubr.f32.mxu0 0.0
        %2363 = vmatmul.mubr.f32.gmra.mrb[0].mxu0 %v2287
        %v2364 = vpop.f32.mrb[0].mxu0
        %v2365 = vadd.f32 0.0, %v2364
        %v2366 = vpop.f32.mrb[0].mxu0
        %v2367 = vadd.f32 0.0, %v2366
        %2368 = vmatprep.mubr.f32.mxu0 0.0
        %2369 = vmatmul.mubr.f32.gmra.mrb[0].mxu0 %v2290
        %v2370 = vpop.f32.mrb[0].mxu0
        %v2371 = vadd.f32 0.0, %v2370
        %v2372 = vpop.f32.mrb[0].mxu0
        %v2373 = vadd.f32 0.0, %v2372
        %2374 = vmatprep.mubr.f32.mxu0 0.0
        %2375 = vmatmul.mubr.f32.gmra.mrb[0].mxu0 %v2293
        %v2376 = vpop.f32.mrb[0].mxu0
        %v2377 = vadd.f32 0.0, %v2376
        %v2378 = vpop.f32.mrb[0].mxu0
        %v2379 = vadd.f32 0.0, %v2378
        %2380 = vmatprep.mubr.f32.mxu0 0.0
        %2381 = vmatmul.mubr.f32.gmra.mrb[0].mxu0 %v2296
        %v2382 = vpop.f32.mrb[0].mxu0
        %v2383 = vpop.f32.mrb[0].mxu0
        %2384 = vdwg.mxu0
        %v2385 = vadd.f32 %v2097, %v2365
        %v2386 = vadd.f32 %v2099, %v2367
        %v2387 = vadd.f32 %v2103, %v2371
        %v2388 = vadd.f32 %v2105, %v2373
        %v2389 = vadd.f32 %v2109, %v2377
        %v2390 = vadd.f32 %v2111, %v2379
        %v2391 = vld [vmem:[%s6] sm:$0x3]
        %v2393 = vlaneseq
        %v2394 = vshrl.u32 %v2393, 7
        %v2395 = vsub.s32 0, %v2394
        %v2396 = vrot.slane %v2391, %v2395
        %v2397 = vlaneseq
        %v2398 = vshrl.u32 %v2397, 7
        %v2399 = vsub.s32 1, %v2398
        %v2400 = vrot.slane %v2391, %v2399
        %v2403 = vadd.f32 %v2385, %v2396
        %v2404 = vadd.f32 %v2386, %v2400
        %v2405 = vadd.f32 %v2387, %v2396
        %v2406 = vadd.f32 %v2388, %v2400
        %v2407 = vadd.f32 %v2389, %v2396
        %v2408 = vadd.f32 %v2390, %v2400
        %v2409 = vmax.f32 %v2403, 0.0
        %v2410 = vmax.f32 %v2404, 0.0
        %v2411 = vmax.f32 %v2405, 0.0
        %v2412 = vmax.f32 %v2406, 0.0
        %v2413 = vmax.f32 %v2407, 0.0
        %v2414 = vmax.f32 %v2408, 0.0
        %v2415 = vld [vmem:[#allocation6] sm:$0xff]
        %v2416 = vld [vmem:[#allocation6 + $0x8] sm:$0xff]
        %v2417 = vld [vmem:[#allocation6 + $0x10] sm:$0xff]
        %v2418 = vld [vmem:[#allocation6 + $0x18] sm:$0xff]
        %v2419 = vld [vmem:[#allocation6 + $0x20] sm:$0xff]
        %v2420 = vld [vmem:[#allocation6 + $0x28] sm:$0xff]
        %v2421 = vld [vmem:[#allocation6 + $0x30] sm:$0xff]
        %v2422 = vld [vmem:[#allocation6 + $0x38] sm:$0xff]
        %v2423 = vld [vmem:[#allocation6 + $0x40] sm:$0xff]
        %v2424 = vld [vmem:[#allocation6 + $0x48] sm:$0xff]
        %v2425 = vld [vmem:[#allocation6 + $0x50] sm:$0xff]
        %v2426 = vld [vmem:[#allocation6 + $0x58] sm:$0xff]
        %v2427 = vld [vmem:[#allocation6 + $0x60] sm:$0xff]
        %v2428 = vld [vmem:[#allocation6 + $0x68] sm:$0xff]
        %v2429 = vld [vmem:[#allocation6 + $0x70] sm:$0xff]
        %v2430 = vld [vmem:[#allocation6 + $0x78] sm:$0xff]
        %v2431 = vld [vmem:[#allocation6 + $0x80] sm:$0xff]
        %v2432 = vld [vmem:[#allocation6 + $0x88] sm:$0xff]
        %v2433 = vld [vmem:[#allocation6 + $0x90] sm:$0xff]
        %v2434 = vld [vmem:[#allocation6 + $0x98] sm:$0xff]
        %v2435 = vld [vmem:[#allocation6 + $0xa0] sm:$0xff]
        %v2436 = vld [vmem:[#allocation6 + $0xa8] sm:$0xff]
        %v2437 = vld [vmem:[#allocation6 + $0xb0] sm:$0xff]
        %v2438 = vld [vmem:[#allocation6 + $0xb8] sm:$0xff]
        %v2439 = vld [vmem:[#allocation6 + $0xc0] sm:$0xff]
        %v2440 = vld [vmem:[#allocation6 + $0xc8] sm:$0xff]
        %v2441 = vld [vmem:[#allocation6 + $0xd0] sm:$0xff]
        %v2442 = vld [vmem:[#allocation6 + $0xd8] sm:$0xff]
        %v2443 = vld [vmem:[#allocation6 + $0xe0] sm:$0xff]
        %v2444 = vld [vmem:[#allocation6 + $0xe8] sm:$0xff]
        %v2445 = vld [vmem:[#allocation6 + $0xf0] sm:$0xff]
        %v2446 = vld [vmem:[#allocation6 + $0xf8] sm:$0xff]
        %s2447 = scalar_lea.vmem [#allocation6], 256
        %v2448 = vld [vmem:[%s2447] sm:$0xff]
        %v2449 = vld [vmem:[%s2447 + $0x8] sm:$0xff]
        %v2450 = vld [vmem:[%s2447 + $0x10] sm:$0xff]
        %v2451 = vld [vmem:[%s2447 + $0x18] sm:$0xff]
        %v2452 = vld [vmem:[%s2447 + $0x20] sm:$0xff]
        %v2453 = vld [vmem:[%s2447 + $0x28] sm:$0xff]
        %v2454 = vld [vmem:[%s2447 + $0x30] sm:$0xff]
        %v2455 = vld [vmem:[%s2447 + $0x38] sm:$0xff]
        %v2456 = vld [vmem:[%s2447 + $0x40] sm:$0xff]
        %v2457 = vld [vmem:[%s2447 + $0x48] sm:$0xff]
        %v2458 = vld [vmem:[%s2447 + $0x50] sm:$0xff]
        %v2459 = vld [vmem:[%s2447 + $0x58] sm:$0xff]
        %v2460 = vld [vmem:[%s2447 + $0x60] sm:$0xff]
        %v2461 = vld [vmem:[%s2447 + $0x68] sm:$0xff]
        %v2462 = vld [vmem:[%s2447 + $0x70] sm:$0xff]
        %v2463 = vld [vmem:[%s2447 + $0x78] sm:$0xff]
        %v2464 = vld [vmem:[%s2447 + $0x80] sm:$0xff]
        %v2465 = vld [vmem:[%s2447 + $0x88] sm:$0xff]
        %v2466 = vld [vmem:[%s2447 + $0x90] sm:$0xff]
        %v2467 = vld [vmem:[%s2447 + $0x98] sm:$0xff]
        %v2468 = vld [vmem:[%s2447 + $0xa0] sm:$0xff]
        %v2469 = vld [vmem:[%s2447 + $0xa8] sm:$0xff]
        %v2470 = vld [vmem:[%s2447 + $0xb0] sm:$0xff]
        %v2471 = vld [vmem:[%s2447 + $0xb8] sm:$0xff]
        %v2472 = vld [vmem:[%s2447 + $0xc0] sm:$0xff]
        %v2473 = vld [vmem:[%s2447 + $0xc8] sm:$0xff]
        %v2474 = vld [vmem:[%s2447 + $0xd0] sm:$0xff]
        %v2475 = vld [vmem:[%s2447 + $0xd8] sm:$0xff]
        %v2476 = vld [vmem:[%s2447 + $0xe0] sm:$0xff]
        %v2477 = vld [vmem:[%s2447 + $0xe8] sm:$0xff]
        %v2478 = vld [vmem:[%s2447 + $0xf0] sm:$0xff]
        %v2479 = vld [vmem:[%s2447 + $0xf8] sm:$0xff]
        %2480 = vmatprep.subr.mxu0 0.0
        %2481 = vmatpush1.msra.mxu0 %v2448
        %2482 = vmatprep.subr.mxu0 0.0
        %2483 = vmatpush1.msra.mxu0 %v2449
        %2484 = vmatprep.subr.mxu0 0.0
        %2485 = vmatpush1.msra.mxu0 %v2450
        %2486 = vmatprep.subr.mxu0 0.0
        %2487 = vmatpush1.msra.mxu0 %v2451
        %2488 = vmatprep.subr.mxu0 0.0
        %2489 = vmatpush1.msra.mxu0 %v2452
        %2490 = vmatprep.subr.mxu0 0.0
        %2491 = vmatpush1.msra.mxu0 %v2453
        %2492 = vmatprep.subr.mxu0 0.0
        %2493 = vmatpush1.msra.mxu0 %v2454
        %2494 = vmatprep.subr.mxu0 0.0
        %2495 = vmatpush1.msra.mxu0 %v2455
        %2496 = vmatprep.subr.mxu0 0.0
        %2497 = vmatpush1.msra.mxu0 %v2456
        %2498 = vmatprep.subr.mxu0 0.0
        %2499 = vmatpush1.msra.mxu0 %v2457
        %2500 = vmatprep.subr.mxu0 0.0
        %2501 = vmatpush1.msra.mxu0 %v2458
        %2502 = vmatprep.subr.mxu0 0.0
        %2503 = vmatpush1.msra.mxu0 %v2459
        %2504 = vmatprep.subr.mxu0 0.0
        %2505 = vmatpush1.msra.mxu0 %v2460
        %2506 = vmatprep.subr.mxu0 0.0
        %2507 = vmatpush1.msra.mxu0 %v2461
        %2508 = vmatprep.subr.mxu0 0.0
        %2509 = vmatpush1.msra.mxu0 %v2462
        %2510 = vmatprep.subr.mxu0 0.0
        %2511 = vmatpush1.msra.mxu0 %v2463
        %2512 = vmatprep.subr.mxu0 0.0
        %2513 = vmatpush1.msra.mxu0 %v2464
        %2514 = vmatprep.subr.mxu0 0.0
        %2515 = vmatpush1.msra.mxu0 %v2465
        %2516 = vmatprep.subr.mxu0 0.0
        %2517 = vmatpush1.msra.mxu0 %v2466
        %2518 = vmatprep.subr.mxu0 0.0
        %2519 = vmatpush1.msra.mxu0 %v2467
        %2520 = vmatprep.subr.mxu0 0.0
        %2521 = vmatpush1.msra.mxu0 %v2468
        %2522 = vmatprep.subr.mxu0 0.0
        %2523 = vmatpush1.msra.mxu0 %v2469
        %2524 = vmatprep.subr.mxu0 0.0
        %2525 = vmatpush1.msra.mxu0 %v2470
        %2526 = vmatprep.subr.mxu0 0.0
        %2527 = vmatpush1.msra.mxu0 %v2471
        %2528 = vmatprep.subr.mxu0 0.0
        %2529 = vmatpush1.msra.mxu0 %v2472
        %2530 = vmatprep.subr.mxu0 0.0
        %2531 = vmatpush1.msra.mxu0 %v2473
        %2532 = vmatprep.subr.mxu0 0.0
        %2533 = vmatpush1.msra.mxu0 %v2474
        %2534 = vmatprep.subr.mxu0 0.0
        %2535 = vmatpush1.msra.mxu0 %v2475
        %2536 = vmatprep.subr.mxu0 0.0
        %2537 = vmatpush1.msra.mxu0 %v2476
        %2538 = vmatprep.subr.mxu0 0.0
        %2539 = vmatpush1.msra.mxu0 %v2477
        %2540 = vmatprep.subr.mxu0 0.0
        %2541 = vmatpush1.msra.mxu0 %v2478
        %2542 = vmatprep.subr.mxu0 0.0
        %2543 = vmatpush1.msra.mxu0 %v2479
        %2544 = vmatprep.mubr.f32.mxu0 %v2412
        %2545 = vmatmul.mubr.f32.gmra.mrb[0].mxu0 %v2411
        %v2546 = vpop.f32.mrb[0].mxu0
        %v2547 = vadd.f32 0.0, %v2546
        %v2548 = vpop.f32.mrb[0].mxu0
        %2549 = vdwg.mxu0
        %2550 = vmatprep.subr.mxu0 0.0
        %2551 = vmatpush1.msra.mxu0 %v2415
        %2552 = vmatprep.subr.mxu0 0.0
        %2553 = vmatpush1.msra.mxu0 %v2416
        %2554 = vmatprep.subr.mxu0 0.0
        %2555 = vmatpush1.msra.mxu0 %v2417
        %2556 = vmatprep.subr.mxu0 0.0
        %2557 = vmatpush1.msra.mxu0 %v2418
        %2558 = vmatprep.subr.mxu0 0.0
        %2559 = vmatpush1.msra.mxu0 %v2419
        %2560 = vmatprep.subr.mxu0 0.0
        %2561 = vmatpush1.msra.mxu0 %v2420
        %2562 = vmatprep.subr.mxu0 0.0
        %2563 = vmatpush1.msra.mxu0 %v2421
        %2564 = vmatprep.subr.mxu0 0.0
        %2565 = vmatpush1.msra.mxu0 %v2422
        %2566 = vmatprep.subr.mxu0 0.0
        %2567 = vmatpush1.msra.mxu0 %v2423
        %2568 = vmatprep.subr.mxu0 0.0
        %2569 = vmatpush1.msra.mxu0 %v2424
        %2570 = vmatprep.subr.mxu0 0.0
        %2571 = vmatpush1.msra.mxu0 %v2425
        %2572 = vmatprep.subr.mxu0 0.0
        %2573 = vmatpush1.msra.mxu0 %v2426
        %2574 = vmatprep.subr.mxu0 0.0
        %2575 = vmatpush1.msra.mxu0 %v2427
        %2576 = vmatprep.subr.mxu0 0.0
        %2577 = vmatpush1.msra.mxu0 %v2428
        %2578 = vmatprep.subr.mxu0 0.0
        %2579 = vmatpush1.msra.mxu0 %v2429
        %2580 = vmatprep.subr.mxu0 0.0
        %2581 = vmatpush1.msra.mxu0 %v2430
        %2582 = vmatprep.subr.mxu0 0.0
        %2583 = vmatpush1.msra.mxu0 %v2431
        %2584 = vmatprep.subr.mxu0 0.0
        %2585 = vmatpush1.msra.mxu0 %v2432
        %2586 = vmatprep.subr.mxu0 0.0
        %2587 = vmatpush1.msra.mxu0 %v2433
        %2588 = vmatprep.subr.mxu0 0.0
        %2589 = vmatpush1.msra.mxu0 %v2434
        %2590 = vmatprep.subr.mxu0 0.0
        %2591 = vmatpush1.msra.mxu0 %v2435
        %2592 = vmatprep.subr.mxu0 0.0
        %2593 = vmatpush1.msra.mxu0 %v2436
        %2594 = vmatprep.subr.mxu0 0.0
        %2595 = vmatpush1.msra.mxu0 %v2437
        %2596 = vmatprep.subr.mxu0 0.0
        %2597 = vmatpush1.msra.mxu0 %v2438
        %2598 = vmatprep.subr.mxu0 0.0
        %2599 = vmatpush1.msra.mxu0 %v2439
        %2600 = vmatprep.subr.mxu0 0.0
        %2601 = vmatpush1.msra.mxu0 %v2440
        %2602 = vmatprep.subr.mxu0 0.0
        %2603 = vmatpush1.msra.mxu0 %v2441
        %2604 = vmatprep.subr.mxu0 0.0
        %2605 = vmatpush1.msra.mxu0 %v2442
        %2606 = vmatprep.subr.mxu0 0.0
        %2607 = vmatpush1.msra.mxu0 %v2443
        %2608 = vmatprep.subr.mxu0 0.0
        %2609 = vmatpush1.msra.mxu0 %v2444
        %2610 = vmatprep.subr.mxu0 0.0
        %2611 = vmatpush1.msra.mxu0 %v2445
        %2612 = vmatprep.subr.mxu0 0.0
        %2613 = vmatpush1.msra.mxu0 %v2446
        %2614 = vmatprep.mubr.f32.mxu0 %v2410
        %2615 = vmatmul.mubr.f32.gmra.mrb[0].mxu0 %v2409
        %v2616 = vpop.f32.mrb[0].mxu0
        %v2617 = vadd.f32 %v2547, %v2616
        %v2618 = vpop.f32.mrb[0].mxu0
        %2619 = vdwg.mxu0
        %s2620 = scalar_lea.vmem [#allocation6], 512
        %v2621 = vld [vmem:[%s2620] sm:$0xff]
        %v2622 = vld [vmem:[%s2620 + $0x8] sm:$0xff]
        %v2623 = vld [vmem:[%s2620 + $0x10] sm:$0xff]
        %v2624 = vld [vmem:[%s2620 + $0x18] sm:$0xff]
        %v2625 = vld [vmem:[%s2620 + $0x20] sm:$0xff]
        %v2626 = vld [vmem:[%s2620 + $0x28] sm:$0xff]
        %v2627 = vld [vmem:[%s2620 + $0x30] sm:$0xff]
        %v2628 = vld [vmem:[%s2620 + $0x38] sm:$0xff]
        %v2629 = vld [vmem:[%s2620 + $0x40] sm:$0xff]
        %v2630 = vld [vmem:[%s2620 + $0x48] sm:$0xff]
        %v2631 = vld [vmem:[%s2620 + $0x50] sm:$0xff]
        %v2632 = vld [vmem:[%s2620 + $0x58] sm:$0xff]
        %v2633 = vld [vmem:[%s2620 + $0x60] sm:$0xff]
        %v2634 = vld [vmem:[%s2620 + $0x68] sm:$0xff]
        %v2635 = vld [vmem:[%s2620 + $0x70] sm:$0xff]
        %v2636 = vld [vmem:[%s2620 + $0x78] sm:$0xff]
        %v2637 = vld [vmem:[%s2620 + $0x80] sm:$0xff]
        %v2638 = vld [vmem:[%s2620 + $0x88] sm:$0xff]
        %v2639 = vld [vmem:[%s2620 + $0x90] sm:$0xff]
        %v2640 = vld [vmem:[%s2620 + $0x98] sm:$0xff]
        %v2641 = vld [vmem:[%s2620 + $0xa0] sm:$0xff]
        %v2642 = vld [vmem:[%s2620 + $0xa8] sm:$0xff]
        %v2643 = vld [vmem:[%s2620 + $0xb0] sm:$0xff]
        %v2644 = vld [vmem:[%s2620 + $0xb8] sm:$0xff]
        %v2645 = vld [vmem:[%s2620 + $0xc0] sm:$0xff]
        %v2646 = vld [vmem:[%s2620 + $0xc8] sm:$0xff]
        %v2647 = vld [vmem:[%s2620 + $0xd0] sm:$0xff]
        %v2648 = vld [vmem:[%s2620 + $0xd8] sm:$0xff]
        %v2649 = vld [vmem:[%s2620 + $0xe0] sm:$0xff]
        %v2650 = vld [vmem:[%s2620 + $0xe8] sm:$0xff]
        %v2651 = vld [vmem:[%s2620 + $0xf0] sm:$0xff]
        %v2652 = vld [vmem:[%s2620 + $0xf8] sm:$0xff]
        %2653 = vmatprep.subr.mxu0 0.0
        %2654 = vmatpush1.msra.mxu0 %v2621
        %2655 = vmatprep.subr.mxu0 0.0
        %2656 = vmatpush1.msra.mxu0 %v2622
        %2657 = vmatprep.subr.mxu0 0.0
        %2658 = vmatpush1.msra.mxu0 %v2623
        %2659 = vmatprep.subr.mxu0 0.0
        %2660 = vmatpush1.msra.mxu0 %v2624
        %2661 = vmatprep.subr.mxu0 0.0
        %2662 = vmatpush1.msra.mxu0 %v2625
        %2663 = vmatprep.subr.mxu0 0.0
        %2664 = vmatpush1.msra.mxu0 %v2626
        %2665 = vmatprep.subr.mxu0 0.0
        %2666 = vmatpush1.msra.mxu0 %v2627
        %2667 = vmatprep.subr.mxu0 0.0
        %2668 = vmatpush1.msra.mxu0 %v2628
        %2669 = vmatprep.subr.mxu0 0.0
        %2670 = vmatpush1.msra.mxu0 %v2629
        %2671 = vmatprep.subr.mxu0 0.0
        %2672 = vmatpush1.msra.mxu0 %v2630
        %2673 = vmatprep.subr.mxu0 0.0
        %2674 = vmatpush1.msra.mxu0 %v2631
        %2675 = vmatprep.subr.mxu0 0.0
        %2676 = vmatpush1.msra.mxu0 %v2632
        %2677 = vmatprep.subr.mxu0 0.0
        %2678 = vmatpush1.msra.mxu0 %v2633
        %2679 = vmatprep.subr.mxu0 0.0
        %2680 = vmatpush1.msra.mxu0 %v2634
        %2681 = vmatprep.subr.mxu0 0.0
        %2682 = vmatpush1.msra.mxu0 %v2635
        %2683 = vmatprep.subr.mxu0 0.0
        %2684 = vmatpush1.msra.mxu0 %v2636
        %2685 = vmatprep.subr.mxu0 0.0
        %2686 = vmatpush1.msra.mxu0 %v2637
        %2687 = vmatprep.subr.mxu0 0.0
        %2688 = vmatpush1.msra.mxu0 %v2638
        %2689 = vmatprep.subr.mxu0 0.0
        %2690 = vmatpush1.msra.mxu0 %v2639
        %2691 = vmatprep.subr.mxu0 0.0
        %2692 = vmatpush1.msra.mxu0 %v2640
        %2693 = vmatprep.subr.mxu0 0.0
        %2694 = vmatpush1.msra.mxu0 %v2641
        %2695 = vmatprep.subr.mxu0 0.0
        %2696 = vmatpush1.msra.mxu0 %v2642
        %2697 = vmatprep.subr.mxu0 0.0
        %2698 = vmatpush1.msra.mxu0 %v2643
        %2699 = vmatprep.subr.mxu0 0.0
        %2700 = vmatpush1.msra.mxu0 %v2644
        %2701 = vmatprep.subr.mxu0 0.0
        %2702 = vmatpush1.msra.mxu0 %v2645
        %2703 = vmatprep.subr.mxu0 0.0
        %2704 = vmatpush1.msra.mxu0 %v2646
        %2705 = vmatprep.subr.mxu0 0.0
        %2706 = vmatpush1.msra.mxu0 %v2647
        %2707 = vmatprep.subr.mxu0 0.0
        %2708 = vmatpush1.msra.mxu0 %v2648
        %2709 = vmatprep.subr.mxu0 0.0
        %2710 = vmatpush1.msra.mxu0 %v2649
        %2711 = vmatprep.subr.mxu0 0.0
        %2712 = vmatpush1.msra.mxu0 %v2650
        %2713 = vmatprep.subr.mxu0 0.0
        %2714 = vmatpush1.msra.mxu0 %v2651
        %2715 = vmatprep.subr.mxu0 0.0
        %2716 = vmatpush1.msra.mxu0 %v2652
        %2717 = vmatprep.mubr.f32.mxu0 %v2414
        %2718 = vmatmul.mubr.f32.gmra.mrb[0].mxu0 %v2413
        %v2719 = vpop.f32.mrb[0].mxu0
        %v2720 = vadd.f32 0.0, %v2719
        %v2721 = vpop.f32.mrb[0].mxu0
        %2722 = vdwg.mxu0
        %v2723 = vadd.f32 %v2617, %v2720
        %v2724 = vld [vmem:[%s8] sm:$0x1]
        %v2726 = vlaneseq
        %v2727 = vshrl.u32 %v2726, 7
        %v2728 = vsub.s32 0, %v2727
        %v2729 = vrot.slane %v2724, %v2728
        %v2731 = vadd.f32 %v2723, %v2729
        %2732 = vst [vmem:[%s374] sm:$0xff] %v2731
        %p2733 = scmp.lt.s32.totalorder %s22, 1
        %s2734 = scalar_select %p2733, %s22, 1
        %s2735 = smul.addr %s2734, 8
        %s2736 = scalar_lea.vmem %s9, %s2735
        // Predicated region
        $region69: #{simple_model_forward.1} parent=55 // pred_check
          %p2737 = pneg %p234
        $region70: #{simple_model_forward.1} parent=55 // pred_check_branch
          %2739 = sbr.rel (%p2737) target = $region72
        $region71: #{simple_model_forward.1} parent=55 // pred_region
          _
        $region72: #{simple_model_forward.1} parent=55 // pred_fallthru
          _
      $region56: #{simple_model_forward.1} parent=5 // pred_fallthru
        _
      %p2740 = scmp.le.s32.totalorder 2, %s17
      // Predicated region
      $region73: #{simple_model_forward.1} parent=5 // pred_check
        %p2741 = pneg %p2740
      $region74: #{simple_model_forward.1} parent=5 // pred_check_branch
        %2743 = sbr.rel (%p2741) target = $region76
      $region75: #{simple_model_forward.1} parent=5 // pred_region
        %s2744 = ssub.s32 %s17, 2
        // Predicated region
        $region77: #{simple_model_forward.1} parent=75 // pred_check
          %p2745 = pneg %p240
        $region78: #{simple_model_forward.1} parent=75 // pred_check_branch
          %2747 = sbr.rel (%p2745) target = $region80
        $region79: #{simple_model_forward.1} parent=75 // pred_region
          %p2748 = scmp.lt.s32.totalorder %s23, 1
          %s2749 = scalar_select %p2748, %s23, 1
          %s2750 = smul.addr %s2749, 8
          %s2751 = scalar_lea.vmem %s9, %s2750
        $region80: #{simple_model_forward.1} parent=75 // pred_fallthru
          _
      $region76: #{simple_model_forward.1} parent=5 // pred_fallthru
        _
    $region6: #{simple_model_forward.1} parent=1 // loop_footer
      %s21 = sadd.s32 1, %s17
    $region7: #{simple_model_forward.1} parent=1 // loop_footer_branch
      %16 = sbr.rel target = $region3
    $region8: #{simple_model_forward.1} parent=1 // loop_exit
      _
    %2752 = vsyncpa [#allocation3], 1
    %s2753 = scalar_lea.sflag [#allocation3], 1
    %2754 = vsyncpa %s2753, 1
    %2755 = vsyncpa [#allocation5], 1

</llo_original>
